<compile_context>
chip_gen: v7x
topology: tpu7x:2x2x1
jax: 0.10.0
libtpu: 0.0.40
codegen_flags: <defaults>
</compile_context>

<pallas_src>
import functools

import jax
import jax.numpy as jnp
from jax.experimental import pallas as pl
from jax.experimental.pallas import tpu as pltpu

# TODO(synk): the frozen ESM transformer + batch_converter tokenization have no
# Pallas equivalent; the kernel consumes the ESM representations directly.

_MIB = 1024 * 1024


def _round_up(x, m):
    return ((x + m - 1) // m) * m


@functools.lru_cache(maxsize=1)
def _tpu_generation_params():
    """(vmem_cap_bytes, default_row_tile, two_tensorcores) per TPU generation."""
    try:
        vmem_phys = int(pltpu.get_tpu_info().vmem_capacity_bytes)
    except Exception:  # noqa: BLE001 - hardware query only; conservative default
        vmem_phys = 64 * _MIB
    if vmem_phys >= 128 * _MIB:
        # v5e / v6e: 128 MiB physical VMEM, one TensorCore per chip.
        return 100 * _MIB, 1024, False
    # v7x: 64 MiB physical VMEM, two TensorCores per chip -> leave headroom.
    return 52 * _MIB, 512, True


@functools.lru_cache(maxsize=1)
def _single_buffer_supported():
    """One-time probe: does this JAX/Mosaic accept pipeline_mode=pl.Buffered(1)
    on a resident (constant index_map) BlockSpec?  Broad catch is confined to
    this probe so real-kernel errors are never masked."""
    try:
        def k(x_ref, w_ref, o_ref):
            o_ref[...] = x_ref[...] + w_ref[...]

        probe = pl.pallas_call(
            k,
            out_shape=jax.ShapeDtypeStruct((8, 128), jnp.float32),
            grid_spec=pltpu.PrefetchScalarGridSpec(
                num_scalar_prefetch=0,
                grid=(2,),
                in_specs=[
                    pl.BlockSpec((8, 128), lambda i: (0, 0)),
                    pl.BlockSpec((8, 128), lambda i: (0, 0),
                                 pipeline_mode=pl.Buffered(buffer_count=1)),
                ],
                out_specs=pl.BlockSpec((8, 128), lambda i: (0, 0)),
            ),
        )
        z = jnp.zeros((8, 128), jnp.float32)
        out = jax.block_until_ready(probe(z, z))
        return bool(jnp.all(out == 0.0))
    except Exception:  # noqa: BLE001 - capability probe isolation
        return False


def _mlp_kernel(x_ref, w1_ref, b1_ref, w2_ref, b2_ref, w3_ref, b3_ref, o_ref):
    """Fused 3-layer MLP; bf16 MXU operands, f32 accumulation, ReLU on VPU."""
    x = x_ref[...]
    if x.dtype != jnp.bfloat16:
        x = x.astype(jnp.bfloat16)

    h1 = jnp.dot(x, w1_ref[...], preferred_element_type=jnp.float32)
    h1 = jnp.maximum(h1 + b1_ref[...], 0.0).astype(jnp.bfloat16)   # ReLU; Dropout=id (eval)

    h2 = jnp.dot(h1, w2_ref[...], preferred_element_type=jnp.float32)
    h2 = jnp.maximum(h2 + b2_ref[...], 0.0).astype(jnp.bfloat16)   # ReLU; Dropout=id (eval)

    out = jnp.dot(h2, w3_ref[...], preferred_element_type=jnp.float32) + b3_ref[...]
    o_ref[...] = out.astype(o_ref.dtype)


def _footprint_bytes(tile, Dp, H1, H2, Cp, weight_buf_factor):
    """Live-VMEM estimate for one pipelined grid step."""
    x_tile = 2 * tile * Dp * 2                                     # bf16 x, double-buffered
    out_tile = 2 * tile * Cp * 4                                   # f32 out, double-buffered
    weights = (Dp * H1 + H1 * H2 + H2 * Cp) * 2 * weight_buf_factor
    biases = (H1 + H2 + Cp) * 4 * weight_buf_factor
    inter = tile * (H1 * (4 + 2) + H2 * (4 + 2) + Cp * 4)          # f32 + bf16 h1/h2, f32 out
    return x_tile + out_tile + weights + biases + inter + 2 * _MIB  # + Mosaic scratch headroom


@functools.partial(
    jax.jit,
    static_argnames=("row_tile", "single_buffer_weights", "vmem_cap", "two_cores"),
)
def _esm_mlp_head_impl(x, w1, b1, w2, b2, w3, b3, *,
                       row_tile, single_buffer_weights, vmem_cap, two_cores):
    """x: [B, L, D] ESM representations -> predictions [B, L, num_labels] (f32)."""
    B, L, D = x.shape
    H1 = w1.shape[1]
    H2 = w2.shape[1]
    C = w3.shape[1]
    N = B * L

    # Lane-dense padding: contraction dim D and output dim C to multiples of 128.
    Dp = max(128, _round_up(D, 128))
    Cp = max(128, _round_up(C, 128))

    # bf16 MXU operands (f32 accumulate inside the kernel); biases stay f32.
    x2d = x.reshape(N, D).astype(jnp.bfloat16)
    if Dp != D:
        x2d = jnp.pad(x2d, ((0, 0), (0, Dp - D)))
        w1 = jnp.pad(w1, ((0, Dp - D), (0, 0)))
    if Cp != C:
        w3 = jnp.pad(w3, ((0, 0), (0, Cp - C)))
        b3 = jnp.pad(b3, ((0, 0), (0, Cp - C)))
    w1b = w1.astype(jnp.bfloat16)
    w2b = w2.astype(jnp.bfloat16)
    w3b = w3.astype(jnp.bfloat16)
    b1f = b1.astype(jnp.float32)
    b2f = b2.astype(jnp.float32)
    b3f = b3.astype(jnp.float32)

    # Row tile: 256-aligned (MXU M) for large N, clipped for tiny inputs,
    # >= 2 grid steps on v7x so both TensorCores get work, shrunk to fit VMEM.
    n8 = _round_up(N, 8)
    if n8 >= 256:
        tile = min(row_tile, _round_up(N, 256))
        tile = max(256, _round_up(tile, 256))
        if two_cores and N > 256:
            half = max(256, _round_up((N + 1) // 2, 256))
            tile = min(tile, half)
    else:
        tile = n8

    wf = 1 if single_buffer_weights else 2
    while tile > 256 and _footprint_bytes(tile, Dp, H1, H2, Cp, wf) > vmem_cap:
        tile -= 256
    tile = max(8, tile)
    grid = (pl.cdiv(N, tile),)

    footprint = _footprint_bytes(tile, Dp, H1, H2, Cp, wf)
    vmem_limit = int(min(vmem_cap, max(32 * _MIB, footprint + footprint // 4)))

    # Resident operands (constant index maps): single-buffer to save VMEM.
    def resident(shape):
        if single_buffer_weights:
            return pl.BlockSpec(shape, lambda i: (0, 0),
                                pipeline_mode=pl.Buffered(buffer_count=1))
        return pl.BlockSpec(shape, lambda i: (0, 0))

    wbytes = (Dp * H1 + H1 * H2 + H2 * Cp) * 2
    bbytes = (H1 + H2 + Cp) * 4
    flops = 2 * N * (Dp * H1 + H1 * H2 + H2 * Cp)
    bytes_accessed = N * Dp * 2 + wbytes + bbytes + N * Cp * 4
    cost = pl.CostEstimate(flops=flops, transcendentals=0,
                           bytes_accessed=bytes_accessed)

    out2d = pl.pallas_call(
        _mlp_kernel,
        out_shape=jax.ShapeDtypeStruct((N, Cp), jnp.float32),   # pinned f32 like torch
        grid_spec=pltpu.PrefetchScalarGridSpec(
            num_scalar_prefetch=0,
            grid=grid,
            in_specs=[
                pl.BlockSpec((tile, Dp), lambda i: (i, 0)),     # x row tile (pipelined)
                resident((Dp, H1)),                              # W1 (resident)
                resident((1, H1)),                               # b1
                resident((H1, H2)),                              # W2 (resident)
                resident((1, H2)),                               # b2
                resident((H2, Cp)),                              # W3 (lane-padded)
                resident((1, Cp)),                               # b3 (lane-padded)
            ],
            out_specs=pl.BlockSpec((tile, Cp), lambda i: (i, 0)),
        ),
        compiler_params=pltpu.CompilerParams(
            dimension_semantics=("parallel",),
            vmem_limit_bytes=vmem_limit,
        ),
        cost_estimate=cost,
    )(x2d, w1b, b1f, w2b, b2f, w3b, b3f)

    return out2d[:, :C].reshape(B, L, C)


def esm_mlp_head(x, w1, b1, w2, b2, w3, b3, *, row_tile=None):
    """Public wrapper: per-generation tile / VMEM sizing + Buffered(1) probe."""
    vmem_cap, default_tile, two_cores = _tpu_generation_params()
    if row_tile is None:
        row_tile = default_tile
    return _esm_mlp_head_impl(
        x, w1, b1, w2, b2, w3, b3,
        row_tile=int(row_tile),
        single_buffer_weights=bool(_single_buffer_supported()),
        vmem_cap=int(vmem_cap),
        two_cores=bool(two_cores),
    )


def esm_multi_input_mlp_forward(x_repr, seq_lens, params):
    """Mirrors ESM_MultiInput_MLP.forward: returns (predictions, max_seq_len)."""
    preds = esm_mlp_head(
        x_repr,
        params["w1"], params["b1"],
        params["w2"], params["b2"],
        params["w3"], params["b3"],
    )
    max_seq_len = max(seq_lens)   # Python-side glue, same as the torch module
    return preds, max_seq_len


def _init_linear(key, fan_in, fan_out, dtype=jnp.float32):
    """Deterministic init mimicking torch.nn.Linear (U(-1/sqrt(in), 1/sqrt(in)))."""
    kw, kb = jax.random.split(key)
    bound = 1.0 / (fan_in ** 0.5)
    w = jax.random.uniform(kw, (fan_in, fan_out), dtype, -bound, bound)
    b = jax.random.uniform(kb, (1, fan_out), dtype, -bound, bound)
    return w, b


if __name__ == "__main__":
    key = jax.random.PRNGKey(0)

    # Small shapes consistent with the module's forward:
    B = 2            # batch of sequences
    L = 8            # token length after stripping BOS/EOS
    EMBED_DIM = 32   # esm_model.embed_dim (small synthetic stand-in)
    HIDDEN = 1024    # MLP hidden width from the module definition
    NUM_LABELS = 4   # num_labels default

    k_x, k1, k2, k3 = jax.random.split(key, 4)

    # Synthetic stand-in for the frozen ESM representations [B, L, embed_dim].
    x_repr = jax.random.normal(k_x, (B, L, EMBED_DIM), dtype=jnp.float32)

    w1, b1 = _init_linear(k1, EMBED_DIM, HIDDEN)
    w2, b2 = _init_linear(k2, HIDDEN, HIDDEN)
    w3, b3 = _init_linear(k3, HIDDEN, NUM_LABELS)
    params = {"w1": w1, "b1": b1, "w2": w2, "b2": b2, "w3": w3, "b3": b3}

    seq_lens = [L, L]  # each input sequence has L residues

    preds, max_seq_len = esm_multi_input_mlp_forward(x_repr, seq_lens, params)
    preds = jax.block_until_ready(preds)

    # Pure-JAX reference with matching bf16-operand / f32-accumulate numerics.
    @jax.jit
    def ref_mlp(x):
        xb = x.reshape(-1, EMBED_DIM).astype(jnp.bfloat16)
        h1 = jnp.maximum(
            jnp.dot(xb, w1.astype(jnp.bfloat16),
                    preferred_element_type=jnp.float32) + b1, 0.0)
        h1 = h1.astype(jnp.bfloat16)
        h2 = jnp.maximum(
            jnp.dot(h1, w2.astype(jnp.bfloat16),
                    preferred_element_type=jnp.float32) + b2, 0.0)
        h2 = h2.astype(jnp.bfloat16)
        out = jnp.dot(h2, w3.astype(jnp.bfloat16),
                      preferred_element_type=jnp.float32) + b3
        return out.reshape(B, L, NUM_LABELS)

    ref = jax.block_until_ready(ref_mlp(x_repr))

    assert preds.shape == (B, L, NUM_LABELS)
    assert preds.dtype == jnp.float32
    assert max_seq_len == L
    max_err = float(jnp.max(jnp.abs(preds - ref)))
    assert jnp.allclose(preds, ref, atol=1e-2, rtol=1e-2), f"max_err={max_err}"

    print("KERNEL_OK")
</pallas_src>

<mosaic_0001>
module attributes {stable_mosaic.version = 11 : i64} {
  func.func @k(%arg0: i32, %arg1: memref<8x128xf32, #tpu.memory_space<vmem>>, %arg2: memref<8x128xf32, #tpu.memory_space<vmem>>, %arg3: memref<8x128xf32, #tpu.memory_space<vmem>>) attributes {dimension_semantics = [#tpu.dimension_semantics<arbitrary>], iteration_bounds = array<i64: 2>, scalar_prefetch = 0 : i64, scratch_operands = 0 : i64, tpu.core_type = #tpu.core_type<tc>, window_params = [{pipeline_mode = #tpu.pipeline_mode<synchronous>, transform_indices = @transform_0, window_bounds = array<i64: 8, 128>}, {pipeline_mode = #tpu.pipeline_mode<synchronous>, transform_indices = @transform_1, window_bounds = array<i64: 8, 128>}, {pipeline_mode = #tpu.pipeline_mode<synchronous>, transform_indices = @transform_2, window_bounds = array<i64: 8, 128>}]} {
    %c0 = arith.constant 0 : index
    %c0_0 = arith.constant 0 : index
    %0 = vector.load %arg1[%c0, %c0_0] : memref<8x128xf32, #tpu.memory_space<vmem>>, vector<8x128xf32>
    %c0_1 = arith.constant 0 : index
    %c0_2 = arith.constant 0 : index
    %1 = vector.load %arg2[%c0_1, %c0_2] : memref<8x128xf32, #tpu.memory_space<vmem>>, vector<8x128xf32>
    %2 = arith.addf %0, %1 : vector<8x128xf32>
    %c0_3 = arith.constant 0 : index
    %c0_4 = arith.constant 0 : index
    %3 = vector.load %arg3[%c0_3, %c0_4] : memref<8x128xf32, #tpu.memory_space<vmem>>, vector<8x128xf32>
    tpu.vector_store %arg3[%c0_3, %c0_4], %2 {strides = array<i32>} : memref<8x128xf32, #tpu.memory_space<vmem>>, vector<8x128xf32>,
    return
  }
  func.func @transform_0(%arg0: i32) -> (i32, i32) {
    %c0_i32 = arith.constant 0 : i32
    %c0_i32_0 = arith.constant 0 : i32
    %c0_i32_1 = arith.constant 0 : i32
    return %c0_i32, %c0_i32_0 : i32, i32
  }
  func.func @transform_1(%arg0: i32) -> (i32, i32) {
    %c0_i32 = arith.constant 0 : i32
    %c0_i32_0 = arith.constant 0 : i32
    %c0_i32_1 = arith.constant 0 : i32
    return %c0_i32, %c0_i32_0 : i32, i32
  }
  func.func @transform_2(%arg0: i32) -> (i32, i32) {
    %c0_i32 = arith.constant 0 : i32
    %c0_i32_0 = arith.constant 0 : i32
    %c0_i32_1 = arith.constant 0 : i32
    return %c0_i32, %c0_i32_0 : i32, i32
  }
}

module attributes {stable_mosaic.version = 11 : i64} {
  func.func @_mlp_kernel(%arg0: i32, %arg1: memref<16x128xbf16, #tpu.memory_space<vmem>>, %arg2: memref<128x1024xbf16, #tpu.memory_space<vmem>>, %arg3: memref<1x1024xf32, #tpu.memory_space<vmem>>, %arg4: memref<1024x1024xbf16, #tpu.memory_space<vmem>>, %arg5: memref<1x1024xf32, #tpu.memory_space<vmem>>, %arg6: memref<1024x128xbf16, #tpu.memory_space<vmem>>, %arg7: memref<1x128xf32, #tpu.memory_space<vmem>>, %arg8: memref<16x128xf32, #tpu.memory_space<vmem>>) attributes {dimension_semantics = [#tpu.dimension_semantics<parallel>], iteration_bounds = array<i64: 1>, scalar_prefetch = 0 : i64, scratch_operands = 0 : i64, tpu.core_type = #tpu.core_type<tc>, window_params = [{transform_indices = @transform_0, window_bounds = array<i64: 16, 128>}, {pipeline_mode = #tpu.pipeline_mode<synchronous>, transform_indices = @transform_1, window_bounds = array<i64: 128, 1024>}, {pipeline_mode = #tpu.pipeline_mode<synchronous>, transform_indices = @transform_2, window_bounds = array<i64: 1, 1024>}, {pipeline_mode = #tpu.pipeline_mode<synchronous>, transform_indices = @transform_3, window_bounds = array<i64: 1024, 1024>}, {pipeline_mode = #tpu.pipeline_mode<synchronous>, transform_indices = @transform_4, window_bounds = array<i64: 1, 1024>}, {pipeline_mode = #tpu.pipeline_mode<synchronous>, transform_indices = @transform_5, window_bounds = array<i64: 1024, 128>}, {pipeline_mode = #tpu.pipeline_mode<synchronous>, transform_indices = @transform_6, window_bounds = array<i64: 1, 128>}, {transform_indices = @transform_7, window_bounds = array<i64: 16, 128>}]} {
    %c0 = arith.constant 0 : index
    %c0_0 = arith.constant 0 : index
    %0 = vector.load %arg1[%c0, %c0_0] : memref<16x128xbf16, #tpu.memory_space<vmem>>, vector<16x128xbf16>
    %c0_1 = arith.constant 0 : index
    %c0_2 = arith.constant 0 : index
    %1 = vector.load %arg2[%c0_1, %c0_2] : memref<128x1024xbf16, #tpu.memory_space<vmem>>, vector<128x1024xbf16>
    %cst = arith.constant dense<0.000000e+00> : vector<16x1024xf32>
    %2 = tpu.matmul %0, %1, %cst {dimension_numbers = #tpu.dot_dimension_numbers<[1], [0], [0], [1], [0, 0, 1, 1], [], []>} : vector<16x128xbf16>, vector<128x1024xbf16>, vector<16x1024xf32> -> vector<16x1024xf32>
    %c0_3 = arith.constant 0 : index
    %c0_4 = arith.constant 0 : index
    %3 = vector.load %arg3[%c0_3, %c0_4] : memref<1x1024xf32, #tpu.memory_space<vmem>>, vector<1x1024xf32>
    %4 = vector.broadcast %3 : vector<1x1024xf32> to vector<16x1024xf32>
    %5 = arith.addf %2, %4 : vector<16x1024xf32>
    %cst_5 = arith.constant 0.000000e+00 : f32
    %6 = vector.broadcast %cst_5 : f32 to vector<16x1024xf32>
    %7 = arith.maximumf %5, %6 : vector<16x1024xf32>
    %8 = arith.truncf %7 : vector<16x1024xf32> to vector<16x1024xbf16>
    %c0_6 = arith.constant 0 : index
    %c0_7 = arith.constant 0 : index
    %9 = vector.load %arg4[%c0_6, %c0_7] : memref<1024x1024xbf16, #tpu.memory_space<vmem>>, vector<1024x1024xbf16>
    %cst_8 = arith.constant dense<0.000000e+00> : vector<16x1024xf32>
    %10 = tpu.matmul %8, %9, %cst_8 {dimension_numbers = #tpu.dot_dimension_numbers<[1], [0], [0], [1], [0, 0, 1, 1], [], []>} : vector<16x1024xbf16>, vector<1024x1024xbf16>, vector<16x1024xf32> -> vector<16x1024xf32>
    %c0_9 = arith.constant 0 : index
    %c0_10 = arith.constant 0 : index
    %11 = vector.load %arg5[%c0_9, %c0_10] : memref<1x1024xf32, #tpu.memory_space<vmem>>, vector<1x1024xf32>
    %12 = vector.broadcast %11 : vector<1x1024xf32> to vector<16x1024xf32>
    %13 = arith.addf %10, %12 : vector<16x1024xf32>
    %cst_11 = arith.constant 0.000000e+00 : f32
    %14 = vector.broadcast %cst_11 : f32 to vector<16x1024xf32>
    %15 = arith.maximumf %13, %14 : vector<16x1024xf32>
    %16 = arith.truncf %15 : vector<16x1024xf32> to vector<16x1024xbf16>
    %c0_12 = arith.constant 0 : index
    %c0_13 = arith.constant 0 : index
    %17 = vector.load %arg6[%c0_12, %c0_13] : memref<1024x128xbf16, #tpu.memory_space<vmem>>, vector<1024x128xbf16>
    %cst_14 = arith.constant dense<0.000000e+00> : vector<16x128xf32>
    %18 = tpu.matmul %16, %17, %cst_14 {dimension_numbers = #tpu.dot_dimension_numbers<[1], [0], [0], [1], [0, 0, 1, 1], [], []>} : vector<16x1024xbf16>, vector<1024x128xbf16>, vector<16x128xf32> -> vector<16x128xf32>
    %c0_15 = arith.constant 0 : index
    %c0_16 = arith.constant 0 : index
    %19 = vector.load %arg7[%c0_15, %c0_16] : memref<1x128xf32, #tpu.memory_space<vmem>>, vector<1x128xf32>
    %20 = vector.broadcast %19 : vector<1x128xf32> to vector<16x128xf32>
    %21 = arith.addf %18, %20 : vector<16x128xf32>
    %c0_17 = arith.constant 0 : index
    %c0_18 = arith.constant 0 : index
    %22 = vector.load %arg8[%c0_17, %c0_18] : memref<16x128xf32, #tpu.memory_space<vmem>>, vector<16x128xf32>
    tpu.vector_store %arg8[%c0_17, %c0_18], %21 {strides = array<i32>} : memref<16x128xf32, #tpu.memory_space<vmem>>, vector<16x128xf32>,
    return
  }
  func.func @transform_0(%arg0: i32) -> (i32, i32) {
    %c0_i32 = arith.constant 0 : i32
    %c0_i32_0 = arith.constant 0 : i32
    return %arg0, %c0_i32 : i32, i32
  }
  func.func @transform_1(%arg0: i32) -> (i32, i32) {
    %c0_i32 = arith.constant 0 : i32
    %c0_i32_0 = arith.constant 0 : i32
    %c0_i32_1 = arith.constant 0 : i32
    return %c0_i32, %c0_i32_0 : i32, i32
  }
  func.func @transform_2(%arg0: i32) -> (i32, i32) {
    %c0_i32 = arith.constant 0 : i32
    %c0_i32_0 = arith.constant 0 : i32
    %c0_i32_1 = arith.constant 0 : i32
    return %c0_i32, %c0_i32_0 : i32, i32
  }
  func.func @transform_3(%arg0: i32) -> (i32, i32) {
    %c0_i32 = arith.constant 0 : i32
    %c0_i32_0 = arith.constant 0 : i32
    %c0_i32_1 = arith.constant 0 : i32
    return %c0_i32, %c0_i32_0 : i32, i32
  }
  func.func @transform_4(%arg0: i32) -> (i32, i32) {
    %c0_i32 = arith.constant 0 : i32
    %c0_i32_0 = arith.constant 0 : i32
    %c0_i32_1 = arith.constant 0 : i32
    return %c0_i32, %c0_i32_0 : i32, i32
  }
  func.func @transform_5(%arg0: i32) -> (i32, i32) {
    %c0_i32 = arith.constant 0 : i32
    %c0_i32_0 = arith.constant 0 : i32
    %c0_i32_1 = arith.constant 0 : i32
    return %c0_i32, %c0_i32_0 : i32, i32
  }
  func.func @transform_6(%arg0: i32) -> (i32, i32) {
    %c0_i32 = arith.constant 0 : i32
    %c0_i32_0 = arith.constant 0 : i32
    %c0_i32_1 = arith.constant 0 : i32
    return %c0_i32, %c0_i32_0 : i32, i32
  }
  func.func @transform_7(%arg0: i32) -> (i32, i32) {
    %c0_i32 = arith.constant 0 : i32
    %c0_i32_0 = arith.constant 0 : i32
    return %arg0, %c0_i32 : i32, i32
  }
}

</mosaic_0001>

<llo_original>
// kernel: tpu_custom_call.1
$region0: #{tpu_custom_call.1}
  #allocation0 [shape = 'u32[]', space=smem, size = 0x4, offset = 0x4, fixed_abs, tag = 'smem constant byte address 0x4 - core index']
  #allocation1 [shape = 'u32[144,128]{1,0:T(1,128)}', space=vmem, size = 0x12000, scoped, tag = 'internal scratch']
  %s0 = inlined_call_operand.hbm [shape: f32[8,128], index: 0, kind: input, shape index: {}]
  %s1 = inlined_call_operand.hbm [shape: f32[8,128], index: 1, kind: input, shape index: {}]
  %s2 = inlined_call_operand.hbm [shape: f32[8,128], index: 2, kind: output, shape index: {}]
  %s3 = sld [smem:[#allocation0]]
  $region49: #{tpu_custom_call.1} parent=0
    _
  %s5 = ssub.s32 1, %s3
  %s6 = scalar_select 0, %s5, %s3
  $region1: #{tpu_custom_call.1} parent=0
    #allocation2 [shape = 'u8[4096]{0}', space=vmem, size = 0x1000, scoped, tag = 'input window, operand 0, single buffered']
    #allocation3 [shape = 's32[2]{0}', space=sflag, size = 0x8, scoped, tag = 'scoped memory for tpu_custom_call.1']
    #allocation4 [shape = 's32[2]{0}', space=sflag, size = 0x8, scoped, tag = 'scoped memory for tpu_custom_call.1']
    #allocation5 [shape = 'u8[4096]{0}', space=vmem, size = 0x1000, scoped, tag = 'input window, operand 1, single buffered']
    #allocation6 [shape = 's32[1]{0}', space=sflag, size = 0x4, scoped, tag = 'scoped memory for tpu_custom_call.1']
    #allocation7 [shape = 'u8[4096]{0}', space=vmem, size = 0x1000, scoped, tag = 'output window, operand 0, single buffered']
    %7 = vsyncpa [#allocation3], 0
    %8 = vsyncpa [#allocation6], 0
    %9 = vsyncpa [#allocation4], 0
    loop: start=0, step=1, limit=4
    $region2: #{tpu_custom_call.1} parent=1 // loop_pre_header
      _
    $region3: #{tpu_custom_call.1} parent=1 // loop_header
      %s11 = sphi 0, %s15
      %p12 = scmp.ge.s32.totalorder %s11, 4
      %s19 = sphi 0, %s19
      %s21 = sphi 0, %s19
      %s22 = sphi 0, %s21
      %s36 = sphi 0, %s22
      %s40 = sphi 0, %s40
      %s42 = sphi 0, %s40
      %s43 = sphi 0, %s42
      %s57 = sphi 0, %s43
      %s61 = sphi 0, %s61
      %s63 = sphi 0, %s61
      %s64 = sphi 0, %s63
      %s78 = sphi 0, %s64
    $region4: #{tpu_custom_call.1} parent=1 // loop_header_branch
      %14 = sbr.rel (%p12) target = $region8
    $region5: #{tpu_custom_call.1} parent=1 // loop_body
      %s16 = ssub.s32 %s11, 1
      %s17 = ssub.s32 %s11, 2
      %s18 = sadd.s32 %s11, 1
      %s20 = sadd.s32 %s19, 1
      %p23 = scmp.eq.s32.totalorder %s11, 1
      %p24 = scmp.ne.s32.totalorder %s19, %s21
      %p25 = scmp.eq.s32.totalorder %s11, 0
      %p26 = por %p24, %p25
      %p27 = scmp.ne.s32.totalorder %s19, %s21
      %p28 = scmp.eq.s32.totalorder %s16, 1
      %p29 = por %p27, %p28
      %p30 = scmp.ne.s32.totalorder %s21, %s22
      %p31 = scmp.eq.s32.totalorder %s16, 0
      %p32 = por %p30, %p31
      %p33 = scmp.ne.s32.totalorder %s21, %s22
      %p34 = scmp.eq.s32.totalorder %s17, 1
      %p35 = por %p33, %p34
      %p37 = scmp.ne.s32.totalorder %s22, %s36
      %p38 = scmp.eq.s32.totalorder %s17, 0
      %p39 = por %p37, %p38
      %s41 = sadd.s32 %s40, 1
      %p44 = scmp.eq.s32.totalorder %s11, 1
      %p45 = scmp.ne.s32.totalorder %s40, %s42
      %p46 = scmp.eq.s32.totalorder %s11, 0
      %p47 = por %p45, %p46
      %p48 = scmp.ne.s32.totalorder %s40, %s42
      %p49 = scmp.eq.s32.totalorder %s16, 1
      %p50 = por %p48, %p49
      %p51 = scmp.ne.s32.totalorder %s42, %s43
      %p52 = scmp.eq.s32.totalorder %s16, 0
      %p53 = por %p51, %p52
      %p54 = scmp.ne.s32.totalorder %s42, %s43
      %p55 = scmp.eq.s32.totalorder %s17, 1
      %p56 = por %p54, %p55
      %p58 = scmp.ne.s32.totalorder %s43, %s57
      %p59 = scmp.eq.s32.totalorder %s17, 0
      %p60 = por %p58, %p59
      %s62 = sadd.s32 %s61, 1
      %p65 = scmp.eq.s32.totalorder %s11, 1
      %p66 = scmp.ne.s32.totalorder %s61, %s63
      %p67 = scmp.eq.s32.totalorder %s11, 0
      %p68 = por %p66, %p67
      %p69 = scmp.ne.s32.totalorder %s61, %s63
      %p70 = scmp.eq.s32.totalorder %s16, 1
      %p71 = por %p69, %p70
      %p72 = scmp.ne.s32.totalorder %s63, %s64
      %p73 = scmp.eq.s32.totalorder %s16, 0
      %p74 = por %p72, %p73
      %p75 = scmp.ne.s32.totalorder %s63, %s64
      %p76 = scmp.eq.s32.totalorder %s17, 1
      %p77 = por %p75, %p76
      %p79 = scmp.ne.s32.totalorder %s64, %s78
      %p80 = scmp.eq.s32.totalorder %s17, 0
      %p81 = por %p79, %p80
      %p82 = scmp.le.s32.totalorder 1, %s11
      %p83 = scmp.lt.s32.totalorder %s11, 3
      %p84 = pnand %p82, %p83
      %p85 = pneg %p84
      // Predicated region
      $region9: #{tpu_custom_call.1} parent=5 // pred_check
        _
      $region10: #{tpu_custom_call.1} parent=5 // pred_check_branch
        %87 = sbr.rel (%p84) target = $region12
      $region11: #{tpu_custom_call.1} parent=5 // pred_region
        %s88 = ssub.s32 %s11, 1
        // Predicated region
        $region13: #{tpu_custom_call.1} parent=11 // pred_check
          %p89 = pneg %p32
        $region14: #{tpu_custom_call.1} parent=11 // pred_check_branch
          %91 = sbr.rel (%p89) target = $region16
        $region15: #{tpu_custom_call.1} parent=11 // pred_region
          %s93 = ssub.s32 128, 128
          %94 = vsyncadd [#allocation3], %s93
          %s96 = sshll.u32 [#allocation2], 4
          %s97 = int_to_ptr.vmem [resolvable:$true] %s96
          %99 = dma.hbm_to_vmem [thread:$0]  %s0, 128, %s97, [#allocation3]
        $region16: #{tpu_custom_call.1} parent=11 // pred_fallthru
          _
        // Predicated region
        $region17: #{tpu_custom_call.1} parent=11 // pred_check
          %p100 = pneg %p53
        $region18: #{tpu_custom_call.1} parent=11 // pred_check_branch
          %102 = sbr.rel (%p100) target = $region20
        $region19: #{tpu_custom_call.1} parent=11 // pred_region
          %s104 = ssub.s32 128, 128
          %105 = vsyncadd [#allocation6], %s104
          %s107 = sshll.u32 [#allocation5], 4
          %s108 = int_to_ptr.vmem [resolvable:$true] %s107
          %110 = dma.hbm_to_vmem [thread:$0]  %s1, 128, %s108, [#allocation6]
        $region20: #{tpu_custom_call.1} parent=11 // pred_fallthru
          _
      $region12: #{tpu_custom_call.1} parent=5 // pred_fallthru
        _
      %p111 = scmp.lt.s32.totalorder %s11, 2
      // Predicated region
      $region21: #{tpu_custom_call.1} parent=5 // pred_check
        %p112 = pneg %p111
      $region22: #{tpu_custom_call.1} parent=5 // pred_check_branch
        %114 = sbr.rel (%p112) target = $region24
      $region23: #{tpu_custom_call.1} parent=5 // pred_region
        _
      $region24: #{tpu_custom_call.1} parent=5 // pred_fallthru
        _
      %p115 = scmp.le.s32.totalorder 1, %s11
      %p116 = scmp.lt.s32.totalorder %s11, 3
      %p117 = pnand %p115, %p116
      %p118 = pneg %p117
      // Predicated region
      $region25: #{tpu_custom_call.1} parent=5 // pred_check
        _
      $region26: #{tpu_custom_call.1} parent=5 // pred_check_branch
        %120 = sbr.rel (%p117) target = $region28
      $region27: #{tpu_custom_call.1} parent=5 // pred_region
        %s121 = ssub.s32 %s11, 1
        // Predicated region
        $region29: #{tpu_custom_call.1} parent=27 // pred_check
          %p122 = pneg %p32
        $region30: #{tpu_custom_call.1} parent=27 // pred_check_branch
          %124 = sbr.rel (%p122) target = $region32
        $region31: #{tpu_custom_call.1} parent=27 // pred_region
          %125 = dma.done [#allocation3], 128
        $region32: #{tpu_custom_call.1} parent=27 // pred_fallthru
          _
        // Predicated region
        $region33: #{tpu_custom_call.1} parent=27 // pred_check
          %p126 = pneg %p53
        $region34: #{tpu_custom_call.1} parent=27 // pred_check_branch
          %128 = sbr.rel (%p126) target = $region36
        $region35: #{tpu_custom_call.1} parent=27 // pred_region
          %129 = dma.done [#allocation6], 128
        $region36: #{tpu_custom_call.1} parent=27 // pred_fallthru
          _
        %p130 = pneg %p32
        %p131 = pneg %p29
        %p132 = pneg %p53
        %p133 = pneg %p50
        %p134 = pneg %p74
        %p135 = pneg %p71
        %v136 = vld [vmem:[#allocation2] sm:$0xff]
        %v137 = vld [vmem:[#allocation5] sm:$0xff]
        %v138 = vadd.f32 %v136, %v137
        %139 = vst [vmem:[#allocation7] sm:$0xff] %v138
        // Predicated region
        $region37: #{tpu_custom_call.1} parent=27 // pred_check
          %p140 = pneg %p71
        $region38: #{tpu_custom_call.1} parent=27 // pred_check_branch
          %142 = sbr.rel (%p140) target = $region40
        $region39: #{tpu_custom_call.1} parent=27 // pred_region
          %s144 = ssub.s32 128, 128
          %145 = vsyncadd [#allocation4], %s144
          %s147 = sshll.u32 [#allocation7], 4
          %s148 = int_to_ptr.vmem [resolvable:$true] %s147
          %150 = dma.vmem_to_hbm [thread:$0]  %s148, 128, %s2, [#allocation4]
        $region40: #{tpu_custom_call.1} parent=27 // pred_fallthru
          _
        // Predicated region
        $region41: #{tpu_custom_call.1} parent=27 // pred_check
          %p151 = pneg %p71
        $region42: #{tpu_custom_call.1} parent=27 // pred_check_branch
          %153 = sbr.rel (%p151) target = $region44
        $region43: #{tpu_custom_call.1} parent=27 // pred_region
          %154 = dma.done [#allocation4], 128
        $region44: #{tpu_custom_call.1} parent=27 // pred_fallthru
          _
      $region28: #{tpu_custom_call.1} parent=5 // pred_fallthru
        _
      %p155 = scmp.le.s32.totalorder 2, %s11
      // Predicated region
      $region45: #{tpu_custom_call.1} parent=5 // pred_check
        %p156 = pneg %p155
      $region46: #{tpu_custom_call.1} parent=5 // pred_check_branch
        %158 = sbr.rel (%p156) target = $region48
      $region47: #{tpu_custom_call.1} parent=5 // pred_region
        %s159 = ssub.s32 %s11, 2
      $region48: #{tpu_custom_call.1} parent=5 // pred_fallthru
        _
    $region6: #{tpu_custom_call.1} parent=1 // loop_footer
      %s15 = sadd.s32 1, %s11
    $region7: #{tpu_custom_call.1} parent=1 // loop_footer_branch
      %10 = sbr.rel target = $region3
    $region8: #{tpu_custom_call.1} parent=1 // loop_exit
      _
    %160 = vsyncpa [#allocation3], 1
    %s161 = scalar_lea.sflag [#allocation3], 1
    %162 = vsyncpa %s161, 1
    %163 = vsyncpa [#allocation6], 1
    %164 = vsyncpa [#allocation4], 1
    %s165 = scalar_lea.sflag [#allocation4], 1
    %166 = vsyncpa %s165, 1

// kernel: _esm_mlp_head_impl.1
$region0: #{_esm_mlp_head_impl.1}
  #allocation0 [shape = 'u32[]', space=smem, size = 0x4, offset = 0x4, fixed_abs, tag = 'smem constant byte address 0x4 - core index']
  #allocation1 [shape = 'u32[144,128]{1,0:T(1,128)}', space=vmem, size = 0x12000, scoped, tag = 'internal scratch']
  %s0 = inlined_call_operand.vmem [shape: bf16[16,128], index: 0, kind: input, shape index: {}]
  %s1 = inlined_call_operand.vmem [shape: bf16[128,1024], index: 1, kind: input, shape index: {}]
  %s2 = inlined_call_operand.vmem [shape: f32[1,1024], index: 2, kind: input, shape index: {}]
  %s3 = inlined_call_operand.vmem [shape: bf16[1024,1024], index: 3, kind: input, shape index: {}]
  %s4 = inlined_call_operand.vmem [shape: f32[1,1024], index: 4, kind: input, shape index: {}]
  %s5 = inlined_call_operand.vmem [shape: bf16[1024,128], index: 5, kind: input, shape index: {}]
  %s6 = inlined_call_operand.vmem [shape: f32[1,128], index: 6, kind: input, shape index: {}]
  %s7 = inlined_call_operand.vmem [shape: f32[16,128], index: 7, kind: output, shape index: {}]
  %s8 = sld [smem:[#allocation0]]
  $region38: #{_esm_mlp_head_impl.1} parent=0
    _
  %s10 = ssub.s32 1, %s8
  %s11 = scalar_select 0, %s10, %s8
  // Predicated region
  $region2: #{_esm_mlp_head_impl.1} parent=0 // pred_check
    _
  $region3: #{_esm_mlp_head_impl.1} parent=0 // pred_check_branch
    %13 = sbr.rel (0) target = $region5
  $region4: #{_esm_mlp_head_impl.1} parent=0 // pred_region
    _
  $region5: #{_esm_mlp_head_impl.1} parent=0 // pred_fallthru
    _
  // Predicated region
  $region6: #{_esm_mlp_head_impl.1} parent=0 // pred_check
    _
  $region7: #{_esm_mlp_head_impl.1} parent=0 // pred_check_branch
    %15 = sbr.rel (0) target = $region9
  $region8: #{_esm_mlp_head_impl.1} parent=0 // pred_region
    _
  $region9: #{_esm_mlp_head_impl.1} parent=0 // pred_fallthru
    _
  // Predicated region
  $region10: #{_esm_mlp_head_impl.1} parent=0 // pred_check
    _
  $region11: #{_esm_mlp_head_impl.1} parent=0 // pred_check_branch
    %17 = sbr.rel (0) target = $region13
  $region12: #{_esm_mlp_head_impl.1} parent=0 // pred_region
    _
  $region13: #{_esm_mlp_head_impl.1} parent=0 // pred_fallthru
    _
  // Predicated region
  $region14: #{_esm_mlp_head_impl.1} parent=0 // pred_check
    _
  $region15: #{_esm_mlp_head_impl.1} parent=0 // pred_check_branch
    %19 = sbr.rel (0) target = $region17
  $region16: #{_esm_mlp_head_impl.1} parent=0 // pred_region
    _
  $region17: #{_esm_mlp_head_impl.1} parent=0 // pred_fallthru
    _
  // Predicated region
  $region18: #{_esm_mlp_head_impl.1} parent=0 // pred_check
    _
  $region19: #{_esm_mlp_head_impl.1} parent=0 // pred_check_branch
    %21 = sbr.rel (0) target = $region21
  $region20: #{_esm_mlp_head_impl.1} parent=0 // pred_region
    _
  $region21: #{_esm_mlp_head_impl.1} parent=0 // pred_fallthru
    _
  // Predicated region
  $region22: #{_esm_mlp_head_impl.1} parent=0 // pred_check
    _
  $region23: #{_esm_mlp_head_impl.1} parent=0 // pred_check_branch
    %23 = sbr.rel (0) target = $region25
  $region24: #{_esm_mlp_head_impl.1} parent=0 // pred_region
    _
  $region25: #{_esm_mlp_head_impl.1} parent=0 // pred_fallthru
    _
  // Predicated region
  $region26: #{_esm_mlp_head_impl.1} parent=0 // pred_check
    _
  $region27: #{_esm_mlp_head_impl.1} parent=0 // pred_check_branch
    %25 = sbr.rel (0) target = $region29
  $region28: #{_esm_mlp_head_impl.1} parent=0 // pred_region
    _
  $region29: #{_esm_mlp_head_impl.1} parent=0 // pred_fallthru
    _
  %v27 = vld [vmem:[%s0] sm:$0xf]
  %v28 = vld [vmem:[%s0 + $0x4] sm:$0xf]
  %v29 = vld [vmem:[%s1] sm:$0xff]
  %v30 = vld [vmem:[%s1 + $0x8] sm:$0xff]
  %v31 = vld [vmem:[%s1 + $0x10] sm:$0xff]
  %v32 = vld [vmem:[%s1 + $0x18] sm:$0xff]
  %v33 = vld [vmem:[%s1 + $0x20] sm:$0xff]
  %v34 = vld [vmem:[%s1 + $0x28] sm:$0xff]
  %v35 = vld [vmem:[%s1 + $0x30] sm:$0xff]
  %v36 = vld [vmem:[%s1 + $0x38] sm:$0xff]
  %v37 = vld [vmem:[%s1 + $0x40] sm:$0xff]
  %v38 = vld [vmem:[%s1 + $0x48] sm:$0xff]
  %v39 = vld [vmem:[%s1 + $0x50] sm:$0xff]
  %v40 = vld [vmem:[%s1 + $0x58] sm:$0xff]
  %v41 = vld [vmem:[%s1 + $0x60] sm:$0xff]
  %v42 = vld [vmem:[%s1 + $0x68] sm:$0xff]
  %v43 = vld [vmem:[%s1 + $0x70] sm:$0xff]
  %v44 = vld [vmem:[%s1 + $0x78] sm:$0xff]
  %v45 = vld [vmem:[%s1 + $0x80] sm:$0xff]
  %v46 = vld [vmem:[%s1 + $0x88] sm:$0xff]
  %v47 = vld [vmem:[%s1 + $0x90] sm:$0xff]
  %v48 = vld [vmem:[%s1 + $0x98] sm:$0xff]
  %v49 = vld [vmem:[%s1 + $0xa0] sm:$0xff]
  %v50 = vld [vmem:[%s1 + $0xa8] sm:$0xff]
  %v51 = vld [vmem:[%s1 + $0xb0] sm:$0xff]
  %v52 = vld [vmem:[%s1 + $0xb8] sm:$0xff]
  %v53 = vld [vmem:[%s1 + $0xc0] sm:$0xff]
  %v54 = vld [vmem:[%s1 + $0xc8] sm:$0xff]
  %v55 = vld [vmem:[%s1 + $0xd0] sm:$0xff]
  %v56 = vld [vmem:[%s1 + $0xd8] sm:$0xff]
  %v57 = vld [vmem:[%s1 + $0xe0] sm:$0xff]
  %v58 = vld [vmem:[%s1 + $0xe8] sm:$0xff]
  %v59 = vld [vmem:[%s1 + $0xf0] sm:$0xff]
  %v60 = vld [vmem:[%s1 + $0xf8] sm:$0xff]
  %v61 = vld [vmem:[%s1 + $0x100] sm:$0xff]
  %v62 = vld [vmem:[%s1 + $0x108] sm:$0xff]
  %v63 = vld [vmem:[%s1 + $0x110] sm:$0xff]
  %v64 = vld [vmem:[%s1 + $0x118] sm:$0xff]
  %v65 = vld [vmem:[%s1 + $0x120] sm:$0xff]
  %v66 = vld [vmem:[%s1 + $0x128] sm:$0xff]
  %v67 = vld [vmem:[%s1 + $0x130] sm:$0xff]
  %v68 = vld [vmem:[%s1 + $0x138] sm:$0xff]
  %v69 = vld [vmem:[%s1 + $0x140] sm:$0xff]
  %v70 = vld [vmem:[%s1 + $0x148] sm:$0xff]
  %v71 = vld [vmem:[%s1 + $0x150] sm:$0xff]
  %v72 = vld [vmem:[%s1 + $0x158] sm:$0xff]
  %v73 = vld [vmem:[%s1 + $0x160] sm:$0xff]
  %v74 = vld [vmem:[%s1 + $0x168] sm:$0xff]
  %v75 = vld [vmem:[%s1 + $0x170] sm:$0xff]
  %v76 = vld [vmem:[%s1 + $0x178] sm:$0xff]
  %v77 = vld [vmem:[%s1 + $0x180] sm:$0xff]
  %v78 = vld [vmem:[%s1 + $0x188] sm:$0xff]
  %v79 = vld [vmem:[%s1 + $0x190] sm:$0xff]
  %v80 = vld [vmem:[%s1 + $0x198] sm:$0xff]
  %v81 = vld [vmem:[%s1 + $0x1a0] sm:$0xff]
  %v82 = vld [vmem:[%s1 + $0x1a8] sm:$0xff]
  %v83 = vld [vmem:[%s1 + $0x1b0] sm:$0xff]
  %v84 = vld [vmem:[%s1 + $0x1b8] sm:$0xff]
  %v85 = vld [vmem:[%s1 + $0x1c0] sm:$0xff]
  %v86 = vld [vmem:[%s1 + $0x1c8] sm:$0xff]
  %v87 = vld [vmem:[%s1 + $0x1d0] sm:$0xff]
  %v88 = vld [vmem:[%s1 + $0x1d8] sm:$0xff]
  %v89 = vld [vmem:[%s1 + $0x1e0] sm:$0xff]
  %v90 = vld [vmem:[%s1 + $0x1e8] sm:$0xff]
  %v91 = vld [vmem:[%s1 + $0x1f0] sm:$0xff]
  %v92 = vld [vmem:[%s1 + $0x1f8] sm:$0xff]
  %v93 = vld [vmem:[%s2] sm:$0xff]
  %v95 = vlaneseq
  %v96 = vshrl.u32 %v95, 7
  %v97 = vsub.s32 0, %v96
  %v98 = vrot.slane %v93, %v97
  %v99 = vlaneseq
  %v100 = vshrl.u32 %v99, 7
  %v101 = vsub.s32 1, %v100
  %v102 = vrot.slane %v93, %v101
  %v103 = vlaneseq
  %v104 = vshrl.u32 %v103, 7
  %v105 = vsub.s32 2, %v104
  %v106 = vrot.slane %v93, %v105
  %v107 = vlaneseq
  %v108 = vshrl.u32 %v107, 7
  %v109 = vsub.s32 3, %v108
  %v110 = vrot.slane %v93, %v109
  %v111 = vlaneseq
  %v112 = vshrl.u32 %v111, 7
  %v113 = vsub.s32 4, %v112
  %v114 = vrot.slane %v93, %v113
  %v115 = vlaneseq
  %v116 = vshrl.u32 %v115, 7
  %v117 = vsub.s32 5, %v116
  %v118 = vrot.slane %v93, %v117
  %v119 = vlaneseq
  %v120 = vshrl.u32 %v119, 7
  %v121 = vsub.s32 6, %v120
  %v122 = vrot.slane %v93, %v121
  %v123 = vlaneseq
  %v124 = vshrl.u32 %v123, 7
  %v125 = vsub.s32 7, %v124
  %v126 = vrot.slane %v93, %v125
  %v137 = vunpack.c.l.b16 %v27
  %v138 = vunpack.c.l.b16 %v28
  %v139 = vpack.c.b16 %v138, %v137
  %v205 = vunpack.c.l.b16 %v29
  %v206 = vunpack.c.h.b16 %v29
  %v207 = vunpack.c.l.b16 %v30
  %v208 = vunpack.c.h.b16 %v30
  %v209 = vunpack.c.l.b16 %v31
  %v210 = vunpack.c.h.b16 %v31
  %v211 = vunpack.c.l.b16 %v32
  %v212 = vunpack.c.h.b16 %v32
  %v213 = vunpack.c.l.b16 %v33
  %v214 = vunpack.c.h.b16 %v33
  %v215 = vunpack.c.l.b16 %v34
  %v216 = vunpack.c.h.b16 %v34
  %v217 = vunpack.c.l.b16 %v35
  %v218 = vunpack.c.h.b16 %v35
  %v219 = vunpack.c.l.b16 %v36
  %v220 = vunpack.c.h.b16 %v36
  %v221 = vunpack.c.l.b16 %v37
  %v222 = vunpack.c.h.b16 %v37
  %v223 = vunpack.c.l.b16 %v38
  %v224 = vunpack.c.h.b16 %v38
  %v225 = vunpack.c.l.b16 %v39
  %v226 = vunpack.c.h.b16 %v39
  %v227 = vunpack.c.l.b16 %v40
  %v228 = vunpack.c.h.b16 %v40
  %v229 = vunpack.c.l.b16 %v41
  %v230 = vunpack.c.h.b16 %v41
  %v231 = vunpack.c.l.b16 %v42
  %v232 = vunpack.c.h.b16 %v42
  %v233 = vunpack.c.l.b16 %v43
  %v234 = vunpack.c.h.b16 %v43
  %v235 = vunpack.c.l.b16 %v44
  %v236 = vunpack.c.h.b16 %v44
  %v237 = vunpack.c.l.b16 %v45
  %v238 = vunpack.c.h.b16 %v45
  %v239 = vunpack.c.l.b16 %v46
  %v240 = vunpack.c.h.b16 %v46
  %v241 = vunpack.c.l.b16 %v47
  %v242 = vunpack.c.h.b16 %v47
  %v243 = vunpack.c.l.b16 %v48
  %v244 = vunpack.c.h.b16 %v48
  %v245 = vunpack.c.l.b16 %v49
  %v246 = vunpack.c.h.b16 %v49
  %v247 = vunpack.c.l.b16 %v50
  %v248 = vunpack.c.h.b16 %v50
  %v249 = vunpack.c.l.b16 %v51
  %v250 = vunpack.c.h.b16 %v51
  %v251 = vunpack.c.l.b16 %v52
  %v252 = vunpack.c.h.b16 %v52
  %v253 = vunpack.c.l.b16 %v53
  %v254 = vunpack.c.h.b16 %v53
  %v255 = vunpack.c.l.b16 %v54
  %v256 = vunpack.c.h.b16 %v54
  %v257 = vunpack.c.l.b16 %v55
  %v258 = vunpack.c.h.b16 %v55
  %v259 = vunpack.c.l.b16 %v56
  %v260 = vunpack.c.h.b16 %v56
  %v261 = vunpack.c.l.b16 %v57
  %v262 = vunpack.c.h.b16 %v57
  %v263 = vunpack.c.l.b16 %v58
  %v264 = vunpack.c.h.b16 %v58
  %v265 = vunpack.c.l.b16 %v59
  %v266 = vunpack.c.h.b16 %v59
  %v267 = vunpack.c.l.b16 %v60
  %v268 = vunpack.c.h.b16 %v60
  %v269 = vunpack.c.l.b16 %v61
  %v270 = vunpack.c.h.b16 %v61
  %v271 = vunpack.c.l.b16 %v62
  %v272 = vunpack.c.h.b16 %v62
  %v273 = vunpack.c.l.b16 %v63
  %v274 = vunpack.c.h.b16 %v63
  %v275 = vunpack.c.l.b16 %v64
  %v276 = vunpack.c.h.b16 %v64
  %v277 = vunpack.c.l.b16 %v65
  %v278 = vunpack.c.h.b16 %v65
  %v279 = vunpack.c.l.b16 %v66
  %v280 = vunpack.c.h.b16 %v66
  %v281 = vunpack.c.l.b16 %v67
  %v282 = vunpack.c.h.b16 %v67
  %v283 = vunpack.c.l.b16 %v68
  %v284 = vunpack.c.h.b16 %v68
  %v285 = vunpack.c.l.b16 %v69
  %v286 = vunpack.c.h.b16 %v69
  %v287 = vunpack.c.l.b16 %v70
  %v288 = vunpack.c.h.b16 %v70
  %v289 = vunpack.c.l.b16 %v71
  %v290 = vunpack.c.h.b16 %v71
  %v291 = vunpack.c.l.b16 %v72
  %v292 = vunpack.c.h.b16 %v72
  %v293 = vunpack.c.l.b16 %v73
  %v294 = vunpack.c.h.b16 %v73
  %v295 = vunpack.c.l.b16 %v74
  %v296 = vunpack.c.h.b16 %v74
  %v297 = vunpack.c.l.b16 %v75
  %v298 = vunpack.c.h.b16 %v75
  %v299 = vunpack.c.l.b16 %v76
  %v300 = vunpack.c.h.b16 %v76
  %v301 = vunpack.c.l.b16 %v77
  %v302 = vunpack.c.h.b16 %v77
  %v303 = vunpack.c.l.b16 %v78
  %v304 = vunpack.c.h.b16 %v78
  %v305 = vunpack.c.l.b16 %v79
  %v306 = vunpack.c.h.b16 %v79
  %v307 = vunpack.c.l.b16 %v80
  %v308 = vunpack.c.h.b16 %v80
  %v309 = vunpack.c.l.b16 %v81
  %v310 = vunpack.c.h.b16 %v81
  %v311 = vunpack.c.l.b16 %v82
  %v312 = vunpack.c.h.b16 %v82
  %v313 = vunpack.c.l.b16 %v83
  %v314 = vunpack.c.h.b16 %v83
  %v315 = vunpack.c.l.b16 %v84
  %v316 = vunpack.c.h.b16 %v84
  %v317 = vunpack.c.l.b16 %v85
  %v318 = vunpack.c.h.b16 %v85
  %v319 = vunpack.c.l.b16 %v86
  %v320 = vunpack.c.h.b16 %v86
  %v321 = vunpack.c.l.b16 %v87
  %v322 = vunpack.c.h.b16 %v87
  %v323 = vunpack.c.l.b16 %v88
  %v324 = vunpack.c.h.b16 %v88
  %v325 = vunpack.c.l.b16 %v89
  %v326 = vunpack.c.h.b16 %v89
  %v327 = vunpack.c.l.b16 %v90
  %v328 = vunpack.c.h.b16 %v90
  %v329 = vunpack.c.l.b16 %v91
  %v330 = vunpack.c.h.b16 %v91
  %v331 = vunpack.c.l.b16 %v92
  %v332 = vunpack.c.h.b16 %v92
  %v333 = vpack.c.b16 %v213, %v205
  %v334 = vpack.c.b16 %v214, %v206
  %v335 = vpack.c.b16 %v215, %v207
  %v336 = vpack.c.b16 %v216, %v208
  %v337 = vpack.c.b16 %v217, %v209
  %v338 = vpack.c.b16 %v218, %v210
  %v339 = vpack.c.b16 %v219, %v211
  %v340 = vpack.c.b16 %v220, %v212
  %v341 = vpack.c.b16 %v229, %v221
  %v342 = vpack.c.b16 %v230, %v222
  %v343 = vpack.c.b16 %v231, %v223
  %v344 = vpack.c.b16 %v232, %v224
  %v345 = vpack.c.b16 %v233, %v225
  %v346 = vpack.c.b16 %v234, %v226
  %v347 = vpack.c.b16 %v235, %v227
  %v348 = vpack.c.b16 %v236, %v228
  %v349 = vpack.c.b16 %v245, %v237
  %v350 = vpack.c.b16 %v246, %v238
  %v351 = vpack.c.b16 %v247, %v239
  %v352 = vpack.c.b16 %v248, %v240
  %v353 = vpack.c.b16 %v249, %v241
  %v354 = vpack.c.b16 %v250, %v242
  %v355 = vpack.c.b16 %v251, %v243
  %v356 = vpack.c.b16 %v252, %v244
  %v357 = vpack.c.b16 %v261, %v253
  %v358 = vpack.c.b16 %v262, %v254
  %v359 = vpack.c.b16 %v263, %v255
  %v360 = vpack.c.b16 %v264, %v256
  %v361 = vpack.c.b16 %v265, %v257
  %v362 = vpack.c.b16 %v266, %v258
  %v363 = vpack.c.b16 %v267, %v259
  %v364 = vpack.c.b16 %v268, %v260
  %v365 = vpack.c.b16 %v277, %v269
  %v366 = vpack.c.b16 %v278, %v270
  %v367 = vpack.c.b16 %v279, %v271
  %v368 = vpack.c.b16 %v280, %v272
  %v369 = vpack.c.b16 %v281, %v273
  %v370 = vpack.c.b16 %v282, %v274
  %v371 = vpack.c.b16 %v283, %v275
  %v372 = vpack.c.b16 %v284, %v276
  %v373 = vpack.c.b16 %v293, %v285
  %v374 = vpack.c.b16 %v294, %v286
  %v375 = vpack.c.b16 %v295, %v287
  %v376 = vpack.c.b16 %v296, %v288
  %v377 = vpack.c.b16 %v297, %v289
  %v378 = vpack.c.b16 %v298, %v290
  %v379 = vpack.c.b16 %v299, %v291
  %v380 = vpack.c.b16 %v300, %v292
  %v381 = vpack.c.b16 %v309, %v301
  %v382 = vpack.c.b16 %v310, %v302
  %v383 = vpack.c.b16 %v311, %v303
  %v384 = vpack.c.b16 %v312, %v304
  %v385 = vpack.c.b16 %v313, %v305
  %v386 = vpack.c.b16 %v314, %v306
  %v387 = vpack.c.b16 %v315, %v307
  %v388 = vpack.c.b16 %v316, %v308
  %v389 = vpack.c.b16 %v325, %v317
  %v390 = vpack.c.b16 %v326, %v318
  %v391 = vpack.c.b16 %v327, %v319
  %v392 = vpack.c.b16 %v328, %v320
  %v393 = vpack.c.b16 %v329, %v321
  %v394 = vpack.c.b16 %v330, %v322
  %v395 = vpack.c.b16 %v331, %v323
  %v396 = vpack.c.b16 %v332, %v324
  %461 = vmatprep.subr.bf16.mxu0 %v334
  %462 = vmatpush1.bf16.msra.mxu0 %v333
  %463 = vmatprep.subr.bf16.mxu0 %v342
  %464 = vmatpush1.bf16.msra.mxu0 %v341
  %465 = vmatprep.subr.bf16.mxu0 %v350
  %466 = vmatpush1.bf16.msra.mxu0 %v349
  %467 = vmatprep.subr.bf16.mxu0 %v358
  %468 = vmatpush1.bf16.msra.mxu0 %v357
  %469 = vmatprep.subr.bf16.mxu0 %v366
  %470 = vmatpush1.bf16.msra.mxu0 %v365
  %471 = vmatprep.subr.bf16.mxu0 %v374
  %472 = vmatpush1.bf16.msra.mxu0 %v373
  %473 = vmatprep.subr.bf16.mxu0 %v382
  %474 = vmatpush1.bf16.msra.mxu0 %v381
  %475 = vmatprep.subr.bf16.mxu0 %v390
  %476 = vmatpush1.bf16.msra.mxu0 %v389
  %477 = vmatprep.subr.bf16.mxu0 0
  %478 = vmatpush1.bf16.msra.mxu0 0
  %479 = vmatprep.subr.bf16.mxu0 0
  %480 = vmatpush1.bf16.msra.mxu0 0
  %481 = vmatprep.subr.bf16.mxu0 0
  %482 = vmatpush1.bf16.msra.mxu0 0
  %483 = vmatprep.subr.bf16.mxu0 0
  %484 = vmatpush1.bf16.msra.mxu0 0
  %485 = vmatprep.subr.bf16.mxu0 0
  %486 = vmatpush1.bf16.msra.mxu0 0
  %487 = vmatprep.subr.bf16.mxu0 0
  %488 = vmatpush1.bf16.msra.mxu0 0
  %489 = vmatprep.subr.bf16.mxu0 0
  %490 = vmatpush1.bf16.msra.mxu0 0
  %491 = vmatprep.subr.bf16.mxu0 0
  %492 = vmatpush1.bf16.msra.mxu0 0
  %493 = vmatprep.mubr.bf16.mxu0 0
  %494 = vmatmul.mubr.bf16.gmra.mrb[0].mxu0 %v139
  %v495 = vpop.f32.mrb[0].mxu0
  %v496 = vadd.f32 %v98, %v495
  %v497 = vpop.f32.mrb[0].mxu0
  %v498 = vadd.f32 %v102, %v497
  %v499 = vpop.f32.mrb[0].mxu0
  %v500 = vadd.f32 %v98, %v499
  %v501 = vpop.f32.mrb[0].mxu0
  %v502 = vadd.f32 %v102, %v501
  %503 = vdwg.mxu0
  %504 = vmatprep.subr.bf16.mxu0 %v336
  %505 = vmatpush1.bf16.msra.mxu0 %v335
  %506 = vmatprep.subr.bf16.mxu0 %v344
  %507 = vmatpush1.bf16.msra.mxu0 %v343
  %508 = vmatprep.subr.bf16.mxu0 %v352
  %509 = vmatpush1.bf16.msra.mxu0 %v351
  %510 = vmatprep.subr.bf16.mxu0 %v360
  %511 = vmatpush1.bf16.msra.mxu0 %v359
  %512 = vmatprep.subr.bf16.mxu0 %v368
  %513 = vmatpush1.bf16.msra.mxu0 %v367
  %514 = vmatprep.subr.bf16.mxu0 %v376
  %515 = vmatpush1.bf16.msra.mxu0 %v375
  %516 = vmatprep.subr.bf16.mxu0 %v384
  %517 = vmatpush1.bf16.msra.mxu0 %v383
  %518 = vmatprep.subr.bf16.mxu0 %v392
  %519 = vmatpush1.bf16.msra.mxu0 %v391
  %520 = vmatprep.subr.bf16.mxu0 0
  %521 = vmatpush1.bf16.msra.mxu0 0
  %522 = vmatprep.subr.bf16.mxu0 0
  %523 = vmatpush1.bf16.msra.mxu0 0
  %524 = vmatprep.subr.bf16.mxu0 0
  %525 = vmatpush1.bf16.msra.mxu0 0
  %526 = vmatprep.subr.bf16.mxu0 0
  %527 = vmatpush1.bf16.msra.mxu0 0
  %528 = vmatprep.subr.bf16.mxu0 0
  %529 = vmatpush1.bf16.msra.mxu0 0
  %530 = vmatprep.subr.bf16.mxu0 0
  %531 = vmatpush1.bf16.msra.mxu0 0
  %532 = vmatprep.subr.bf16.mxu0 0
  %533 = vmatpush1.bf16.msra.mxu0 0
  %534 = vmatprep.subr.bf16.mxu0 0
  %535 = vmatpush1.bf16.msra.mxu0 0
  %536 = vmatprep.mubr.bf16.mxu0 0
  %537 = vmatmul.mubr.bf16.gmra.mrb[0].mxu0 %v139
  %v538 = vpop.f32.mrb[0].mxu0
  %v539 = vadd.f32 %v106, %v538
  %v540 = vpop.f32.mrb[0].mxu0
  %v541 = vadd.f32 %v110, %v540
  %v542 = vpop.f32.mrb[0].mxu0
  %v543 = vadd.f32 %v106, %v542
  %v544 = vpop.f32.mrb[0].mxu0
  %v545 = vadd.f32 %v110, %v544
  %546 = vdwg.mxu0
  %547 = vmatprep.subr.bf16.mxu0 %v338
  %548 = vmatpush1.bf16.msra.mxu0 %v337
  %549 = vmatprep.subr.bf16.mxu0 %v346
  %550 = vmatpush1.bf16.msra.mxu0 %v345
  %551 = vmatprep.subr.bf16.mxu0 %v354
  %552 = vmatpush1.bf16.msra.mxu0 %v353
  %553 = vmatprep.subr.bf16.mxu0 %v362
  %554 = vmatpush1.bf16.msra.mxu0 %v361
  %555 = vmatprep.subr.bf16.mxu0 %v370
  %556 = vmatpush1.bf16.msra.mxu0 %v369
  %557 = vmatprep.subr.bf16.mxu0 %v378
  %558 = vmatpush1.bf16.msra.mxu0 %v377
  %559 = vmatprep.subr.bf16.mxu0 %v386
  %560 = vmatpush1.bf16.msra.mxu0 %v385
  %561 = vmatprep.subr.bf16.mxu0 %v394
  %562 = vmatpush1.bf16.msra.mxu0 %v393
  %563 = vmatprep.subr.bf16.mxu0 0
  %564 = vmatpush1.bf16.msra.mxu0 0
  %565 = vmatprep.subr.bf16.mxu0 0
  %566 = vmatpush1.bf16.msra.mxu0 0
  %567 = vmatprep.subr.bf16.mxu0 0
  %568 = vmatpush1.bf16.msra.mxu0 0
  %569 = vmatprep.subr.bf16.mxu0 0
  %570 = vmatpush1.bf16.msra.mxu0 0
  %571 = vmatprep.subr.bf16.mxu0 0
  %572 = vmatpush1.bf16.msra.mxu0 0
  %573 = vmatprep.subr.bf16.mxu0 0
  %574 = vmatpush1.bf16.msra.mxu0 0
  %575 = vmatprep.subr.bf16.mxu0 0
  %576 = vmatpush1.bf16.msra.mxu0 0
  %577 = vmatprep.subr.bf16.mxu0 0
  %578 = vmatpush1.bf16.msra.mxu0 0
  %579 = vmatprep.mubr.bf16.mxu0 0
  %580 = vmatmul.mubr.bf16.gmra.mrb[0].mxu0 %v139
  %v581 = vpop.f32.mrb[0].mxu0
  %v582 = vadd.f32 %v114, %v581
  %v583 = vpop.f32.mrb[0].mxu0
  %v584 = vadd.f32 %v118, %v583
  %v585 = vpop.f32.mrb[0].mxu0
  %v586 = vadd.f32 %v114, %v585
  %v587 = vpop.f32.mrb[0].mxu0
  %v588 = vadd.f32 %v118, %v587
  %589 = vdwg.mxu0
  %590 = vmatprep.subr.bf16.mxu0 %v340
  %591 = vmatpush1.bf16.msra.mxu0 %v339
  %592 = vmatprep.subr.bf16.mxu0 %v348
  %593 = vmatpush1.bf16.msra.mxu0 %v347
  %594 = vmatprep.subr.bf16.mxu0 %v356
  %595 = vmatpush1.bf16.msra.mxu0 %v355
  %596 = vmatprep.subr.bf16.mxu0 %v364
  %597 = vmatpush1.bf16.msra.mxu0 %v363
  %598 = vmatprep.subr.bf16.mxu0 %v372
  %599 = vmatpush1.bf16.msra.mxu0 %v371
  %600 = vmatprep.subr.bf16.mxu0 %v380
  %601 = vmatpush1.bf16.msra.mxu0 %v379
  %602 = vmatprep.subr.bf16.mxu0 %v388
  %603 = vmatpush1.bf16.msra.mxu0 %v387
  %604 = vmatprep.subr.bf16.mxu0 %v396
  %605 = vmatpush1.bf16.msra.mxu0 %v395
  %606 = vmatprep.subr.bf16.mxu0 0
  %607 = vmatpush1.bf16.msra.mxu0 0
  %608 = vmatprep.subr.bf16.mxu0 0
  %609 = vmatpush1.bf16.msra.mxu0 0
  %610 = vmatprep.subr.bf16.mxu0 0
  %611 = vmatpush1.bf16.msra.mxu0 0
  %612 = vmatprep.subr.bf16.mxu0 0
  %613 = vmatpush1.bf16.msra.mxu0 0
  %614 = vmatprep.subr.bf16.mxu0 0
  %615 = vmatpush1.bf16.msra.mxu0 0
  %616 = vmatprep.subr.bf16.mxu0 0
  %617 = vmatpush1.bf16.msra.mxu0 0
  %618 = vmatprep.subr.bf16.mxu0 0
  %619 = vmatpush1.bf16.msra.mxu0 0
  %620 = vmatprep.subr.bf16.mxu0 0
  %621 = vmatpush1.bf16.msra.mxu0 0
  %622 = vmatprep.mubr.bf16.mxu0 0
  %623 = vmatmul.mubr.bf16.gmra.mrb[0].mxu0 %v139
  %v624 = vpop.f32.mrb[0].mxu0
  %v625 = vadd.f32 %v122, %v624
  %v626 = vpop.f32.mrb[0].mxu0
  %v627 = vadd.f32 %v126, %v626
  %v628 = vpop.f32.mrb[0].mxu0
  %v629 = vadd.f32 %v122, %v628
  %v630 = vpop.f32.mrb[0].mxu0
  %v631 = vadd.f32 %v126, %v630
  %632 = vdwg.mxu0
  %v633 = vmax.f32 %v496, 0.0
  %v634 = vmax.f32 %v498, 0.0
  %v635 = vmax.f32 %v539, 0.0
  %v636 = vmax.f32 %v541, 0.0
  %v637 = vmax.f32 %v582, 0.0
  %v638 = vmax.f32 %v584, 0.0
  %v639 = vmax.f32 %v625, 0.0
  %v640 = vmax.f32 %v627, 0.0
  %v641 = vmax.f32 %v500, 0.0
  %v642 = vmax.f32 %v502, 0.0
  %v643 = vmax.f32 %v543, 0.0
  %v644 = vmax.f32 %v545, 0.0
  %v645 = vmax.f32 %v586, 0.0
  %v646 = vmax.f32 %v588, 0.0
  %v647 = vmax.f32 %v629, 0.0
  %v648 = vmax.f32 %v631, 0.0
  %v649 = vpack.c.bf16 %v641, %v633
  %v650 = vpack.c.bf16 %v642, %v634
  %v651 = vpack.c.bf16 %v643, %v635
  %v652 = vpack.c.bf16 %v644, %v636
  %v653 = vpack.c.bf16 %v645, %v637
  %v654 = vpack.c.bf16 %v646, %v638
  %v655 = vpack.c.bf16 %v647, %v639
  %v656 = vpack.c.bf16 %v648, %v640
  %v657 = vld [vmem:[%s3] sm:$0xff]
  %v658 = vld [vmem:[%s3 + $0x8] sm:$0xff]
  %v659 = vld [vmem:[%s3 + $0x10] sm:$0xff]
  %v660 = vld [vmem:[%s3 + $0x18] sm:$0xff]
  %v661 = vld [vmem:[%s3 + $0x20] sm:$0xff]
  %v662 = vld [vmem:[%s3 + $0x28] sm:$0xff]
  %v663 = vld [vmem:[%s3 + $0x30] sm:$0xff]
  %v664 = vld [vmem:[%s3 + $0x38] sm:$0xff]
  %v665 = vld [vmem:[%s3 + $0x40] sm:$0xff]
  %v666 = vld [vmem:[%s3 + $0x48] sm:$0xff]
  %v667 = vld [vmem:[%s3 + $0x50] sm:$0xff]
  %v668 = vld [vmem:[%s3 + $0x58] sm:$0xff]
  %v669 = vld [vmem:[%s3 + $0x60] sm:$0xff]
  %v670 = vld [vmem:[%s3 + $0x68] sm:$0xff]
  %v671 = vld [vmem:[%s3 + $0x70] sm:$0xff]
  %v672 = vld [vmem:[%s3 + $0x78] sm:$0xff]
  %v673 = vld [vmem:[%s3 + $0x80] sm:$0xff]
  %v674 = vld [vmem:[%s3 + $0x88] sm:$0xff]
  %v675 = vld [vmem:[%s3 + $0x90] sm:$0xff]
  %v676 = vld [vmem:[%s3 + $0x98] sm:$0xff]
  %v677 = vld [vmem:[%s3 + $0xa0] sm:$0xff]
  %v678 = vld [vmem:[%s3 + $0xa8] sm:$0xff]
  %v679 = vld [vmem:[%s3 + $0xb0] sm:$0xff]
  %v680 = vld [vmem:[%s3 + $0xb8] sm:$0xff]
  %v681 = vld [vmem:[%s3 + $0xc0] sm:$0xff]
  %v682 = vld [vmem:[%s3 + $0xc8] sm:$0xff]
  %v683 = vld [vmem:[%s3 + $0xd0] sm:$0xff]
  %v684 = vld [vmem:[%s3 + $0xd8] sm:$0xff]
  %v685 = vld [vmem:[%s3 + $0xe0] sm:$0xff]
  %v686 = vld [vmem:[%s3 + $0xe8] sm:$0xff]
  %v687 = vld [vmem:[%s3 + $0xf0] sm:$0xff]
  %v688 = vld [vmem:[%s3 + $0xf8] sm:$0xff]
  %v689 = vld [vmem:[%s3 + $0x100] sm:$0xff]
  %v690 = vld [vmem:[%s3 + $0x108] sm:$0xff]
  %v691 = vld [vmem:[%s3 + $0x110] sm:$0xff]
  %v692 = vld [vmem:[%s3 + $0x118] sm:$0xff]
  %v693 = vld [vmem:[%s3 + $0x120] sm:$0xff]
  %v694 = vld [vmem:[%s3 + $0x128] sm:$0xff]
  %v695 = vld [vmem:[%s3 + $0x130] sm:$0xff]
  %v696 = vld [vmem:[%s3 + $0x138] sm:$0xff]
  %v697 = vld [vmem:[%s3 + $0x140] sm:$0xff]
  %v698 = vld [vmem:[%s3 + $0x148] sm:$0xff]
  %v699 = vld [vmem:[%s3 + $0x150] sm:$0xff]
  %v700 = vld [vmem:[%s3 + $0x158] sm:$0xff]
  %v701 = vld [vmem:[%s3 + $0x160] sm:$0xff]
  %v702 = vld [vmem:[%s3 + $0x168] sm:$0xff]
  %v703 = vld [vmem:[%s3 + $0x170] sm:$0xff]
  %v704 = vld [vmem:[%s3 + $0x178] sm:$0xff]
  %v705 = vld [vmem:[%s3 + $0x180] sm:$0xff]
  %v706 = vld [vmem:[%s3 + $0x188] sm:$0xff]
  %v707 = vld [vmem:[%s3 + $0x190] sm:$0xff]
  %v708 = vld [vmem:[%s3 + $0x198] sm:$0xff]
  %v709 = vld [vmem:[%s3 + $0x1a0] sm:$0xff]
  %v710 = vld [vmem:[%s3 + $0x1a8] sm:$0xff]
  %v711 = vld [vmem:[%s3 + $0x1b0] sm:$0xff]
  %v712 = vld [vmem:[%s3 + $0x1b8] sm:$0xff]
  %v713 = vld [vmem:[%s3 + $0x1c0] sm:$0xff]
  %v714 = vld [vmem:[%s3 + $0x1c8] sm:$0xff]
  %v715 = vld [vmem:[%s3 + $0x1d0] sm:$0xff]
  %v716 = vld [vmem:[%s3 + $0x1d8] sm:$0xff]
  %v717 = vld [vmem:[%s3 + $0x1e0] sm:$0xff]
  %v718 = vld [vmem:[%s3 + $0x1e8] sm:$0xff]
  %v719 = vld [vmem:[%s3 + $0x1f0] sm:$0xff]
  %v720 = vld [vmem:[%s3 + $0x1f8] sm:$0xff]
  %v721 = vld [vmem:[%s3 + $0x200] sm:$0xff]
  %v722 = vld [vmem:[%s3 + $0x208] sm:$0xff]
  %v723 = vld [vmem:[%s3 + $0x210] sm:$0xff]
  %v724 = vld [vmem:[%s3 + $0x218] sm:$0xff]
  %v725 = vld [vmem:[%s3 + $0x220] sm:$0xff]
  %v726 = vld [vmem:[%s3 + $0x228] sm:$0xff]
  %v727 = vld [vmem:[%s3 + $0x230] sm:$0xff]
  %v728 = vld [vmem:[%s3 + $0x238] sm:$0xff]
  %v729 = vld [vmem:[%s3 + $0x240] sm:$0xff]
  %v730 = vld [vmem:[%s3 + $0x248] sm:$0xff]
  %v731 = vld [vmem:[%s3 + $0x250] sm:$0xff]
  %v732 = vld [vmem:[%s3 + $0x258] sm:$0xff]
  %v733 = vld [vmem:[%s3 + $0x260] sm:$0xff]
  %v734 = vld [vmem:[%s3 + $0x268] sm:$0xff]
  %v735 = vld [vmem:[%s3 + $0x270] sm:$0xff]
  %v736 = vld [vmem:[%s3 + $0x278] sm:$0xff]
  %v737 = vld [vmem:[%s3 + $0x280] sm:$0xff]
  %v738 = vld [vmem:[%s3 + $0x288] sm:$0xff]
  %v739 = vld [vmem:[%s3 + $0x290] sm:$0xff]
  %v740 = vld [vmem:[%s3 + $0x298] sm:$0xff]
  %v741 = vld [vmem:[%s3 + $0x2a0] sm:$0xff]
  %v742 = vld [vmem:[%s3 + $0x2a8] sm:$0xff]
  %v743 = vld [vmem:[%s3 + $0x2b0] sm:$0xff]
  %v744 = vld [vmem:[%s3 + $0x2b8] sm:$0xff]
  %v745 = vld [vmem:[%s3 + $0x2c0] sm:$0xff]
  %v746 = vld [vmem:[%s3 + $0x2c8] sm:$0xff]
  %v747 = vld [vmem:[%s3 + $0x2d0] sm:$0xff]
  %v748 = vld [vmem:[%s3 + $0x2d8] sm:$0xff]
  %v749 = vld [vmem:[%s3 + $0x2e0] sm:$0xff]
  %v750 = vld [vmem:[%s3 + $0x2e8] sm:$0xff]
  %v751 = vld [vmem:[%s3 + $0x2f0] sm:$0xff]
  %v752 = vld [vmem:[%s3 + $0x2f8] sm:$0xff]
  %v753 = vld [vmem:[%s3 + $0x300] sm:$0xff]
  %v754 = vld [vmem:[%s3 + $0x308] sm:$0xff]
  %v755 = vld [vmem:[%s3 + $0x310] sm:$0xff]
  %v756 = vld [vmem:[%s3 + $0x318] sm:$0xff]
  %v757 = vld [vmem:[%s3 + $0x320] sm:$0xff]
  %v758 = vld [vmem:[%s3 + $0x328] sm:$0xff]
  %v759 = vld [vmem:[%s3 + $0x330] sm:$0xff]
  %v760 = vld [vmem:[%s3 + $0x338] sm:$0xff]
  %v761 = vld [vmem:[%s3 + $0x340] sm:$0xff]
  %v762 = vld [vmem:[%s3 + $0x348] sm:$0xff]
  %v763 = vld [vmem:[%s3 + $0x350] sm:$0xff]
  %v764 = vld [vmem:[%s3 + $0x358] sm:$0xff]
  %v765 = vld [vmem:[%s3 + $0x360] sm:$0xff]
  %v766 = vld [vmem:[%s3 + $0x368] sm:$0xff]
  %v767 = vld [vmem:[%s3 + $0x370] sm:$0xff]
  %v768 = vld [vmem:[%s3 + $0x378] sm:$0xff]
  %v769 = vld [vmem:[%s3 + $0x380] sm:$0xff]
  %v770 = vld [vmem:[%s3 + $0x388] sm:$0xff]
  %v771 = vld [vmem:[%s3 + $0x390] sm:$0xff]
  %v772 = vld [vmem:[%s3 + $0x398] sm:$0xff]
  %v773 = vld [vmem:[%s3 + $0x3a0] sm:$0xff]
  %v774 = vld [vmem:[%s3 + $0x3a8] sm:$0xff]
  %v775 = vld [vmem:[%s3 + $0x3b0] sm:$0xff]
  %v776 = vld [vmem:[%s3 + $0x3b8] sm:$0xff]
  %v777 = vld [vmem:[%s3 + $0x3c0] sm:$0xff]
  %v778 = vld [vmem:[%s3 + $0x3c8] sm:$0xff]
  %v779 = vld [vmem:[%s3 + $0x3d0] sm:$0xff]
  %v780 = vld [vmem:[%s3 + $0x3d8] sm:$0xff]
  %v781 = vld [vmem:[%s3 + $0x3e0] sm:$0xff]
  %v782 = vld [vmem:[%s3 + $0x3e8] sm:$0xff]
  %v783 = vld [vmem:[%s3 + $0x3f0] sm:$0xff]
  %v784 = vld [vmem:[%s3 + $0x3f8] sm:$0xff]
  %v785 = vld [vmem:[%s3 + $0x400] sm:$0xff]
  %v786 = vld [vmem:[%s3 + $0x408] sm:$0xff]
  %v787 = vld [vmem:[%s3 + $0x410] sm:$0xff]
  %v788 = vld [vmem:[%s3 + $0x418] sm:$0xff]
  %v789 = vld [vmem:[%s3 + $0x420] sm:$0xff]
  %v790 = vld [vmem:[%s3 + $0x428] sm:$0xff]
  %v791 = vld [vmem:[%s3 + $0x430] sm:$0xff]
  %v792 = vld [vmem:[%s3 + $0x438] sm:$0xff]
  %v793 = vld [vmem:[%s3 + $0x440] sm:$0xff]
  %v794 = vld [vmem:[%s3 + $0x448] sm:$0xff]
  %v795 = vld [vmem:[%s3 + $0x450] sm:$0xff]
  %v796 = vld [vmem:[%s3 + $0x458] sm:$0xff]
  %v797 = vld [vmem:[%s3 + $0x460] sm:$0xff]
  %v798 = vld [vmem:[%s3 + $0x468] sm:$0xff]
  %v799 = vld [vmem:[%s3 + $0x470] sm:$0xff]
  %v800 = vld [vmem:[%s3 + $0x478] sm:$0xff]
  %v801 = vld [vmem:[%s3 + $0x480] sm:$0xff]
  %v802 = vld [vmem:[%s3 + $0x488] sm:$0xff]
  %v803 = vld [vmem:[%s3 + $0x490] sm:$0xff]
  %v804 = vld [vmem:[%s3 + $0x498] sm:$0xff]
  %v805 = vld [vmem:[%s3 + $0x4a0] sm:$0xff]
  %v806 = vld [vmem:[%s3 + $0x4a8] sm:$0xff]
  %v807 = vld [vmem:[%s3 + $0x4b0] sm:$0xff]
  %v808 = vld [vmem:[%s3 + $0x4b8] sm:$0xff]
  %v809 = vld [vmem:[%s3 + $0x4c0] sm:$0xff]
  %v810 = vld [vmem:[%s3 + $0x4c8] sm:$0xff]
  %v811 = vld [vmem:[%s3 + $0x4d0] sm:$0xff]
  %v812 = vld [vmem:[%s3 + $0x4d8] sm:$0xff]
  %v813 = vld [vmem:[%s3 + $0x4e0] sm:$0xff]
  %v814 = vld [vmem:[%s3 + $0x4e8] sm:$0xff]
  %v815 = vld [vmem:[%s3 + $0x4f0] sm:$0xff]
  %v816 = vld [vmem:[%s3 + $0x4f8] sm:$0xff]
  %v817 = vld [vmem:[%s3 + $0x500] sm:$0xff]
  %v818 = vld [vmem:[%s3 + $0x508] sm:$0xff]
  %v819 = vld [vmem:[%s3 + $0x510] sm:$0xff]
  %v820 = vld [vmem:[%s3 + $0x518] sm:$0xff]
  %v821 = vld [vmem:[%s3 + $0x520] sm:$0xff]
  %v822 = vld [vmem:[%s3 + $0x528] sm:$0xff]
  %v823 = vld [vmem:[%s3 + $0x530] sm:$0xff]
  %v824 = vld [vmem:[%s3 + $0x538] sm:$0xff]
  %v825 = vld [vmem:[%s3 + $0x540] sm:$0xff]
  %v826 = vld [vmem:[%s3 + $0x548] sm:$0xff]
  %v827 = vld [vmem:[%s3 + $0x550] sm:$0xff]
  %v828 = vld [vmem:[%s3 + $0x558] sm:$0xff]
  %v829 = vld [vmem:[%s3 + $0x560] sm:$0xff]
  %v830 = vld [vmem:[%s3 + $0x568] sm:$0xff]
  %v831 = vld [vmem:[%s3 + $0x570] sm:$0xff]
  %v832 = vld [vmem:[%s3 + $0x578] sm:$0xff]
  %v833 = vld [vmem:[%s3 + $0x580] sm:$0xff]
  %v834 = vld [vmem:[%s3 + $0x588] sm:$0xff]
  %v835 = vld [vmem:[%s3 + $0x590] sm:$0xff]
  %v836 = vld [vmem:[%s3 + $0x598] sm:$0xff]
  %v837 = vld [vmem:[%s3 + $0x5a0] sm:$0xff]
  %v838 = vld [vmem:[%s3 + $0x5a8] sm:$0xff]
  %v839 = vld [vmem:[%s3 + $0x5b0] sm:$0xff]
  %v840 = vld [vmem:[%s3 + $0x5b8] sm:$0xff]
  %v841 = vld [vmem:[%s3 + $0x5c0] sm:$0xff]
  %v842 = vld [vmem:[%s3 + $0x5c8] sm:$0xff]
  %v843 = vld [vmem:[%s3 + $0x5d0] sm:$0xff]
  %v844 = vld [vmem:[%s3 + $0x5d8] sm:$0xff]
  %v845 = vld [vmem:[%s3 + $0x5e0] sm:$0xff]
  %v846 = vld [vmem:[%s3 + $0x5e8] sm:$0xff]
  %v847 = vld [vmem:[%s3 + $0x5f0] sm:$0xff]
  %v848 = vld [vmem:[%s3 + $0x5f8] sm:$0xff]
  %v849 = vld [vmem:[%s3 + $0x600] sm:$0xff]
  %v850 = vld [vmem:[%s3 + $0x608] sm:$0xff]
  %v851 = vld [vmem:[%s3 + $0x610] sm:$0xff]
  %v852 = vld [vmem:[%s3 + $0x618] sm:$0xff]
  %v853 = vld [vmem:[%s3 + $0x620] sm:$0xff]
  %v854 = vld [vmem:[%s3 + $0x628] sm:$0xff]
  %v855 = vld [vmem:[%s3 + $0x630] sm:$0xff]
  %v856 = vld [vmem:[%s3 + $0x638] sm:$0xff]
  %v857 = vld [vmem:[%s3 + $0x640] sm:$0xff]
  %v858 = vld [vmem:[%s3 + $0x648] sm:$0xff]
  %v859 = vld [vmem:[%s3 + $0x650] sm:$0xff]
  %v860 = vld [vmem:[%s3 + $0x658] sm:$0xff]
  %v861 = vld [vmem:[%s3 + $0x660] sm:$0xff]
  %v862 = vld [vmem:[%s3 + $0x668] sm:$0xff]
  %v863 = vld [vmem:[%s3 + $0x670] sm:$0xff]
  %v864 = vld [vmem:[%s3 + $0x678] sm:$0xff]
  %v865 = vld [vmem:[%s3 + $0x680] sm:$0xff]
  %v866 = vld [vmem:[%s3 + $0x688] sm:$0xff]
  %v867 = vld [vmem:[%s3 + $0x690] sm:$0xff]
  %v868 = vld [vmem:[%s3 + $0x698] sm:$0xff]
  %v869 = vld [vmem:[%s3 + $0x6a0] sm:$0xff]
  %v870 = vld [vmem:[%s3 + $0x6a8] sm:$0xff]
  %v871 = vld [vmem:[%s3 + $0x6b0] sm:$0xff]
  %v872 = vld [vmem:[%s3 + $0x6b8] sm:$0xff]
  %v873 = vld [vmem:[%s3 + $0x6c0] sm:$0xff]
  %v874 = vld [vmem:[%s3 + $0x6c8] sm:$0xff]
  %v875 = vld [vmem:[%s3 + $0x6d0] sm:$0xff]
  %v876 = vld [vmem:[%s3 + $0x6d8] sm:$0xff]
  %v877 = vld [vmem:[%s3 + $0x6e0] sm:$0xff]
  %v878 = vld [vmem:[%s3 + $0x6e8] sm:$0xff]
  %v879 = vld [vmem:[%s3 + $0x6f0] sm:$0xff]
  %v880 = vld [vmem:[%s3 + $0x6f8] sm:$0xff]
  %v881 = vld [vmem:[%s3 + $0x700] sm:$0xff]
  %v882 = vld [vmem:[%s3 + $0x708] sm:$0xff]
  %v883 = vld [vmem:[%s3 + $0x710] sm:$0xff]
  %v884 = vld [vmem:[%s3 + $0x718] sm:$0xff]
  %v885 = vld [vmem:[%s3 + $0x720] sm:$0xff]
  %v886 = vld [vmem:[%s3 + $0x728] sm:$0xff]
  %v887 = vld [vmem:[%s3 + $0x730] sm:$0xff]
  %v888 = vld [vmem:[%s3 + $0x738] sm:$0xff]
  %v889 = vld [vmem:[%s3 + $0x740] sm:$0xff]
  %v890 = vld [vmem:[%s3 + $0x748] sm:$0xff]
  %v891 = vld [vmem:[%s3 + $0x750] sm:$0xff]
  %v892 = vld [vmem:[%s3 + $0x758] sm:$0xff]
  %v893 = vld [vmem:[%s3 + $0x760] sm:$0xff]
  %v894 = vld [vmem:[%s3 + $0x768] sm:$0xff]
  %v895 = vld [vmem:[%s3 + $0x770] sm:$0xff]
  %v896 = vld [vmem:[%s3 + $0x778] sm:$0xff]
  %v897 = vld [vmem:[%s3 + $0x780] sm:$0xff]
  %v898 = vld [vmem:[%s3 + $0x788] sm:$0xff]
  %v899 = vld [vmem:[%s3 + $0x790] sm:$0xff]
  %v900 = vld [vmem:[%s3 + $0x798] sm:$0xff]
  %v901 = vld [vmem:[%s3 + $0x7a0] sm:$0xff]
  %v902 = vld [vmem:[%s3 + $0x7a8] sm:$0xff]
  %v903 = vld [vmem:[%s3 + $0x7b0] sm:$0xff]
  %v904 = vld [vmem:[%s3 + $0x7b8] sm:$0xff]
  %v905 = vld [vmem:[%s3 + $0x7c0] sm:$0xff]
  %v906 = vld [vmem:[%s3 + $0x7c8] sm:$0xff]
  %v907 = vld [vmem:[%s3 + $0x7d0] sm:$0xff]
  %v908 = vld [vmem:[%s3 + $0x7d8] sm:$0xff]
  %v909 = vld [vmem:[%s3 + $0x7e0] sm:$0xff]
  %v910 = vld [vmem:[%s3 + $0x7e8] sm:$0xff]
  %v911 = vld [vmem:[%s3 + $0x7f0] sm:$0xff]
  %v912 = vld [vmem:[%s3 + $0x7f8] sm:$0xff]
  %v913 = vld [vmem:[%s3 + $0x800] sm:$0xff]
  %v914 = vld [vmem:[%s3 + $0x808] sm:$0xff]
  %v915 = vld [vmem:[%s3 + $0x810] sm:$0xff]
  %v916 = vld [vmem:[%s3 + $0x818] sm:$0xff]
  %v917 = vld [vmem:[%s3 + $0x820] sm:$0xff]
  %v918 = vld [vmem:[%s3 + $0x828] sm:$0xff]
  %v919 = vld [vmem:[%s3 + $0x830] sm:$0xff]
  %v920 = vld [vmem:[%s3 + $0x838] sm:$0xff]
  %v921 = vld [vmem:[%s3 + $0x840] sm:$0xff]
  %v922 = vld [vmem:[%s3 + $0x848] sm:$0xff]
  %v923 = vld [vmem:[%s3 + $0x850] sm:$0xff]
  %v924 = vld [vmem:[%s3 + $0x858] sm:$0xff]
  %v925 = vld [vmem:[%s3 + $0x860] sm:$0xff]
  %v926 = vld [vmem:[%s3 + $0x868] sm:$0xff]
  %v927 = vld [vmem:[%s3 + $0x870] sm:$0xff]
  %v928 = vld [vmem:[%s3 + $0x878] sm:$0xff]
  %v929 = vld [vmem:[%s3 + $0x880] sm:$0xff]
  %v930 = vld [vmem:[%s3 + $0x888] sm:$0xff]
  %v931 = vld [vmem:[%s3 + $0x890] sm:$0xff]
  %v932 = vld [vmem:[%s3 + $0x898] sm:$0xff]
  %v933 = vld [vmem:[%s3 + $0x8a0] sm:$0xff]
  %v934 = vld [vmem:[%s3 + $0x8a8] sm:$0xff]
  %v935 = vld [vmem:[%s3 + $0x8b0] sm:$0xff]
  %v936 = vld [vmem:[%s3 + $0x8b8] sm:$0xff]
  %v937 = vld [vmem:[%s3 + $0x8c0] sm:$0xff]
  %v938 = vld [vmem:[%s3 + $0x8c8] sm:$0xff]
  %v939 = vld [vmem:[%s3 + $0x8d0] sm:$0xff]
  %v940 = vld [vmem:[%s3 + $0x8d8] sm:$0xff]
  %v941 = vld [vmem:[%s3 + $0x8e0] sm:$0xff]
  %v942 = vld [vmem:[%s3 + $0x8e8] sm:$0xff]
  %v943 = vld [vmem:[%s3 + $0x8f0] sm:$0xff]
  %v944 = vld [vmem:[%s3 + $0x8f8] sm:$0xff]
  %v945 = vld [vmem:[%s3 + $0x900] sm:$0xff]
  %v946 = vld [vmem:[%s3 + $0x908] sm:$0xff]
  %v947 = vld [vmem:[%s3 + $0x910] sm:$0xff]
  %v948 = vld [vmem:[%s3 + $0x918] sm:$0xff]
  %v949 = vld [vmem:[%s3 + $0x920] sm:$0xff]
  %v950 = vld [vmem:[%s3 + $0x928] sm:$0xff]
  %v951 = vld [vmem:[%s3 + $0x930] sm:$0xff]
  %v952 = vld [vmem:[%s3 + $0x938] sm:$0xff]
  %v953 = vld [vmem:[%s3 + $0x940] sm:$0xff]
  %v954 = vld [vmem:[%s3 + $0x948] sm:$0xff]
  %v955 = vld [vmem:[%s3 + $0x950] sm:$0xff]
  %v956 = vld [vmem:[%s3 + $0x958] sm:$0xff]
  %v957 = vld [vmem:[%s3 + $0x960] sm:$0xff]
  %v958 = vld [vmem:[%s3 + $0x968] sm:$0xff]
  %v959 = vld [vmem:[%s3 + $0x970] sm:$0xff]
  %v960 = vld [vmem:[%s3 + $0x978] sm:$0xff]
  %v961 = vld [vmem:[%s3 + $0x980] sm:$0xff]
  %v962 = vld [vmem:[%s3 + $0x988] sm:$0xff]
  %v963 = vld [vmem:[%s3 + $0x990] sm:$0xff]
  %v964 = vld [vmem:[%s3 + $0x998] sm:$0xff]
  %v965 = vld [vmem:[%s3 + $0x9a0] sm:$0xff]
  %v966 = vld [vmem:[%s3 + $0x9a8] sm:$0xff]
  %v967 = vld [vmem:[%s3 + $0x9b0] sm:$0xff]
  %v968 = vld [vmem:[%s3 + $0x9b8] sm:$0xff]
  %v969 = vld [vmem:[%s3 + $0x9c0] sm:$0xff]
  %v970 = vld [vmem:[%s3 + $0x9c8] sm:$0xff]
  %v971 = vld [vmem:[%s3 + $0x9d0] sm:$0xff]
  %v972 = vld [vmem:[%s3 + $0x9d8] sm:$0xff]
  %v973 = vld [vmem:[%s3 + $0x9e0] sm:$0xff]
  %v974 = vld [vmem:[%s3 + $0x9e8] sm:$0xff]
  %v975 = vld [vmem:[%s3 + $0x9f0] sm:$0xff]
  %v976 = vld [vmem:[%s3 + $0x9f8] sm:$0xff]
  %v977 = vld [vmem:[%s3 + $0xa00] sm:$0xff]
  %v978 = vld [vmem:[%s3 + $0xa08] sm:$0xff]
  %v979 = vld [vmem:[%s3 + $0xa10] sm:$0xff]
  %v980 = vld [vmem:[%s3 + $0xa18] sm:$0xff]
  %v981 = vld [vmem:[%s3 + $0xa20] sm:$0xff]
  %v982 = vld [vmem:[%s3 + $0xa28] sm:$0xff]
  %v983 = vld [vmem:[%s3 + $0xa30] sm:$0xff]
  %v984 = vld [vmem:[%s3 + $0xa38] sm:$0xff]
  %v985 = vld [vmem:[%s3 + $0xa40] sm:$0xff]
  %v986 = vld [vmem:[%s3 + $0xa48] sm:$0xff]
  %v987 = vld [vmem:[%s3 + $0xa50] sm:$0xff]
  %v988 = vld [vmem:[%s3 + $0xa58] sm:$0xff]
  %v989 = vld [vmem:[%s3 + $0xa60] sm:$0xff]
  %v990 = vld [vmem:[%s3 + $0xa68] sm:$0xff]
  %v991 = vld [vmem:[%s3 + $0xa70] sm:$0xff]
  %v992 = vld [vmem:[%s3 + $0xa78] sm:$0xff]
  %v993 = vld [vmem:[%s3 + $0xa80] sm:$0xff]
  %v994 = vld [vmem:[%s3 + $0xa88] sm:$0xff]
  %v995 = vld [vmem:[%s3 + $0xa90] sm:$0xff]
  %v996 = vld [vmem:[%s3 + $0xa98] sm:$0xff]
  %v997 = vld [vmem:[%s3 + $0xaa0] sm:$0xff]
  %v998 = vld [vmem:[%s3 + $0xaa8] sm:$0xff]
  %v999 = vld [vmem:[%s3 + $0xab0] sm:$0xff]
  %v1000 = vld [vmem:[%s3 + $0xab8] sm:$0xff]
  %v1001 = vld [vmem:[%s3 + $0xac0] sm:$0xff]
  %v1002 = vld [vmem:[%s3 + $0xac8] sm:$0xff]
  %v1003 = vld [vmem:[%s3 + $0xad0] sm:$0xff]
  %v1004 = vld [vmem:[%s3 + $0xad8] sm:$0xff]
  %v1005 = vld [vmem:[%s3 + $0xae0] sm:$0xff]
  %v1006 = vld [vmem:[%s3 + $0xae8] sm:$0xff]
  %v1007 = vld [vmem:[%s3 + $0xaf0] sm:$0xff]
  %v1008 = vld [vmem:[%s3 + $0xaf8] sm:$0xff]
  %v1009 = vld [vmem:[%s3 + $0xb00] sm:$0xff]
  %v1010 = vld [vmem:[%s3 + $0xb08] sm:$0xff]
  %v1011 = vld [vmem:[%s3 + $0xb10] sm:$0xff]
  %v1012 = vld [vmem:[%s3 + $0xb18] sm:$0xff]
  %v1013 = vld [vmem:[%s3 + $0xb20] sm:$0xff]
  %v1014 = vld [vmem:[%s3 + $0xb28] sm:$0xff]
  %v1015 = vld [vmem:[%s3 + $0xb30] sm:$0xff]
  %v1016 = vld [vmem:[%s3 + $0xb38] sm:$0xff]
  %v1017 = vld [vmem:[%s3 + $0xb40] sm:$0xff]
  %v1018 = vld [vmem:[%s3 + $0xb48] sm:$0xff]
  %v1019 = vld [vmem:[%s3 + $0xb50] sm:$0xff]
  %v1020 = vld [vmem:[%s3 + $0xb58] sm:$0xff]
  %v1021 = vld [vmem:[%s3 + $0xb60] sm:$0xff]
  %v1022 = vld [vmem:[%s3 + $0xb68] sm:$0xff]
  %v1023 = vld [vmem:[%s3 + $0xb70] sm:$0xff]
  %v1024 = vld [vmem:[%s3 + $0xb78] sm:$0xff]
  %v1025 = vld [vmem:[%s3 + $0xb80] sm:$0xff]
  %v1026 = vld [vmem:[%s3 + $0xb88] sm:$0xff]
  %v1027 = vld [vmem:[%s3 + $0xb90] sm:$0xff]
  %v1028 = vld [vmem:[%s3 + $0xb98] sm:$0xff]
  %v1029 = vld [vmem:[%s3 + $0xba0] sm:$0xff]
  %v1030 = vld [vmem:[%s3 + $0xba8] sm:$0xff]
  %v1031 = vld [vmem:[%s3 + $0xbb0] sm:$0xff]
  %v1032 = vld [vmem:[%s3 + $0xbb8] sm:$0xff]
  %v1033 = vld [vmem:[%s3 + $0xbc0] sm:$0xff]
  %v1034 = vld [vmem:[%s3 + $0xbc8] sm:$0xff]
  %v1035 = vld [vmem:[%s3 + $0xbd0] sm:$0xff]
  %v1036 = vld [vmem:[%s3 + $0xbd8] sm:$0xff]
  %v1037 = vld [vmem:[%s3 + $0xbe0] sm:$0xff]
  %v1038 = vld [vmem:[%s3 + $0xbe8] sm:$0xff]
  %v1039 = vld [vmem:[%s3 + $0xbf0] sm:$0xff]
  %v1040 = vld [vmem:[%s3 + $0xbf8] sm:$0xff]
  %v1041 = vld [vmem:[%s3 + $0xc00] sm:$0xff]
  %v1042 = vld [vmem:[%s3 + $0xc08] sm:$0xff]
  %v1043 = vld [vmem:[%s3 + $0xc10] sm:$0xff]
  %v1044 = vld [vmem:[%s3 + $0xc18] sm:$0xff]
  %v1045 = vld [vmem:[%s3 + $0xc20] sm:$0xff]
  %v1046 = vld [vmem:[%s3 + $0xc28] sm:$0xff]
  %v1047 = vld [vmem:[%s3 + $0xc30] sm:$0xff]
  %v1048 = vld [vmem:[%s3 + $0xc38] sm:$0xff]
  %v1049 = vld [vmem:[%s3 + $0xc40] sm:$0xff]
  %v1050 = vld [vmem:[%s3 + $0xc48] sm:$0xff]
  %v1051 = vld [vmem:[%s3 + $0xc50] sm:$0xff]
  %v1052 = vld [vmem:[%s3 + $0xc58] sm:$0xff]
  %v1053 = vld [vmem:[%s3 + $0xc60] sm:$0xff]
  %v1054 = vld [vmem:[%s3 + $0xc68] sm:$0xff]
  %v1055 = vld [vmem:[%s3 + $0xc70] sm:$0xff]
  %v1056 = vld [vmem:[%s3 + $0xc78] sm:$0xff]
  %v1057 = vld [vmem:[%s3 + $0xc80] sm:$0xff]
  %v1058 = vld [vmem:[%s3 + $0xc88] sm:$0xff]
  %v1059 = vld [vmem:[%s3 + $0xc90] sm:$0xff]
  %v1060 = vld [vmem:[%s3 + $0xc98] sm:$0xff]
  %v1061 = vld [vmem:[%s3 + $0xca0] sm:$0xff]
  %v1062 = vld [vmem:[%s3 + $0xca8] sm:$0xff]
  %v1063 = vld [vmem:[%s3 + $0xcb0] sm:$0xff]
  %v1064 = vld [vmem:[%s3 + $0xcb8] sm:$0xff]
  %v1065 = vld [vmem:[%s3 + $0xcc0] sm:$0xff]
  %v1066 = vld [vmem:[%s3 + $0xcc8] sm:$0xff]
  %v1067 = vld [vmem:[%s3 + $0xcd0] sm:$0xff]
  %v1068 = vld [vmem:[%s3 + $0xcd8] sm:$0xff]
  %v1069 = vld [vmem:[%s3 + $0xce0] sm:$0xff]
  %v1070 = vld [vmem:[%s3 + $0xce8] sm:$0xff]
  %v1071 = vld [vmem:[%s3 + $0xcf0] sm:$0xff]
  %v1072 = vld [vmem:[%s3 + $0xcf8] sm:$0xff]
  %v1073 = vld [vmem:[%s3 + $0xd00] sm:$0xff]
  %v1074 = vld [vmem:[%s3 + $0xd08] sm:$0xff]
  %v1075 = vld [vmem:[%s3 + $0xd10] sm:$0xff]
  %v1076 = vld [vmem:[%s3 + $0xd18] sm:$0xff]
  %v1077 = vld [vmem:[%s3 + $0xd20] sm:$0xff]
  %v1078 = vld [vmem:[%s3 + $0xd28] sm:$0xff]
  %v1079 = vld [vmem:[%s3 + $0xd30] sm:$0xff]
  %v1080 = vld [vmem:[%s3 + $0xd38] sm:$0xff]
  %v1081 = vld [vmem:[%s3 + $0xd40] sm:$0xff]
  %v1082 = vld [vmem:[%s3 + $0xd48] sm:$0xff]
  %v1083 = vld [vmem:[%s3 + $0xd50] sm:$0xff]
  %v1084 = vld [vmem:[%s3 + $0xd58] sm:$0xff]
  %v1085 = vld [vmem:[%s3 + $0xd60] sm:$0xff]
  %v1086 = vld [vmem:[%s3 + $0xd68] sm:$0xff]
  %v1087 = vld [vmem:[%s3 + $0xd70] sm:$0xff]
  %v1088 = vld [vmem:[%s3 + $0xd78] sm:$0xff]
  %v1089 = vld [vmem:[%s3 + $0xd80] sm:$0xff]
  %v1090 = vld [vmem:[%s3 + $0xd88] sm:$0xff]
  %v1091 = vld [vmem:[%s3 + $0xd90] sm:$0xff]
  %v1092 = vld [vmem:[%s3 + $0xd98] sm:$0xff]
  %v1093 = vld [vmem:[%s3 + $0xda0] sm:$0xff]
  %v1094 = vld [vmem:[%s3 + $0xda8] sm:$0xff]
  %v1095 = vld [vmem:[%s3 + $0xdb0] sm:$0xff]
  %v1096 = vld [vmem:[%s3 + $0xdb8] sm:$0xff]
  %v1097 = vld [vmem:[%s3 + $0xdc0] sm:$0xff]
  %v1098 = vld [vmem:[%s3 + $0xdc8] sm:$0xff]
  %v1099 = vld [vmem:[%s3 + $0xdd0] sm:$0xff]
  %v1100 = vld [vmem:[%s3 + $0xdd8] sm:$0xff]
  %v1101 = vld [vmem:[%s3 + $0xde0] sm:$0xff]
  %v1102 = vld [vmem:[%s3 + $0xde8] sm:$0xff]
  %v1103 = vld [vmem:[%s3 + $0xdf0] sm:$0xff]
  %v1104 = vld [vmem:[%s3 + $0xdf8] sm:$0xff]
  %v1105 = vld [vmem:[%s3 + $0xe00] sm:$0xff]
  %v1106 = vld [vmem:[%s3 + $0xe08] sm:$0xff]
  %v1107 = vld [vmem:[%s3 + $0xe10] sm:$0xff]
  %v1108 = vld [vmem:[%s3 + $0xe18] sm:$0xff]
  %v1109 = vld [vmem:[%s3 + $0xe20] sm:$0xff]
  %v1110 = vld [vmem:[%s3 + $0xe28] sm:$0xff]
  %v1111 = vld [vmem:[%s3 + $0xe30] sm:$0xff]
  %v1112 = vld [vmem:[%s3 + $0xe38] sm:$0xff]
  %v1113 = vld [vmem:[%s3 + $0xe40] sm:$0xff]
  %v1114 = vld [vmem:[%s3 + $0xe48] sm:$0xff]
  %v1115 = vld [vmem:[%s3 + $0xe50] sm:$0xff]
  %v1116 = vld [vmem:[%s3 + $0xe58] sm:$0xff]
  %v1117 = vld [vmem:[%s3 + $0xe60] sm:$0xff]
  %v1118 = vld [vmem:[%s3 + $0xe68] sm:$0xff]
  %v1119 = vld [vmem:[%s3 + $0xe70] sm:$0xff]
  %v1120 = vld [vmem:[%s3 + $0xe78] sm:$0xff]
  %v1121 = vld [vmem:[%s3 + $0xe80] sm:$0xff]
  %v1122 = vld [vmem:[%s3 + $0xe88] sm:$0xff]
  %v1123 = vld [vmem:[%s3 + $0xe90] sm:$0xff]
  %v1124 = vld [vmem:[%s3 + $0xe98] sm:$0xff]
  %v1125 = vld [vmem:[%s3 + $0xea0] sm:$0xff]
  %v1126 = vld [vmem:[%s3 + $0xea8] sm:$0xff]
  %v1127 = vld [vmem:[%s3 + $0xeb0] sm:$0xff]
  %v1128 = vld [vmem:[%s3 + $0xeb8] sm:$0xff]
  %v1129 = vld [vmem:[%s3 + $0xec0] sm:$0xff]
  %v1130 = vld [vmem:[%s3 + $0xec8] sm:$0xff]
  %v1131 = vld [vmem:[%s3 + $0xed0] sm:$0xff]
  %v1132 = vld [vmem:[%s3 + $0xed8] sm:$0xff]
  %v1133 = vld [vmem:[%s3 + $0xee0] sm:$0xff]
  %v1134 = vld [vmem:[%s3 + $0xee8] sm:$0xff]
  %v1135 = vld [vmem:[%s3 + $0xef0] sm:$0xff]
  %v1136 = vld [vmem:[%s3 + $0xef8] sm:$0xff]
  %v1137 = vld [vmem:[%s3 + $0xf00] sm:$0xff]
  %v1138 = vld [vmem:[%s3 + $0xf08] sm:$0xff]
  %v1139 = vld [vmem:[%s3 + $0xf10] sm:$0xff]
  %v1140 = vld [vmem:[%s3 + $0xf18] sm:$0xff]
  %v1141 = vld [vmem:[%s3 + $0xf20] sm:$0xff]
  %v1142 = vld [vmem:[%s3 + $0xf28] sm:$0xff]
  %v1143 = vld [vmem:[%s3 + $0xf30] sm:$0xff]
  %v1144 = vld [vmem:[%s3 + $0xf38] sm:$0xff]
  %v1145 = vld [vmem:[%s3 + $0xf40] sm:$0xff]
  %v1146 = vld [vmem:[%s3 + $0xf48] sm:$0xff]
  %v1147 = vld [vmem:[%s3 + $0xf50] sm:$0xff]
  %v1148 = vld [vmem:[%s3 + $0xf58] sm:$0xff]
  %v1149 = vld [vmem:[%s3 + $0xf60] sm:$0xff]
  %v1150 = vld [vmem:[%s3 + $0xf68] sm:$0xff]
  %v1151 = vld [vmem:[%s3 + $0xf70] sm:$0xff]
  %v1152 = vld [vmem:[%s3 + $0xf78] sm:$0xff]
  %v1153 = vld [vmem:[%s3 + $0xf80] sm:$0xff]
  %v1154 = vld [vmem:[%s3 + $0xf88] sm:$0xff]
  %v1155 = vld [vmem:[%s3 + $0xf90] sm:$0xff]
  %v1156 = vld [vmem:[%s3 + $0xf98] sm:$0xff]
  %v1157 = vld [vmem:[%s3 + $0xfa0] sm:$0xff]
  %v1158 = vld [vmem:[%s3 + $0xfa8] sm:$0xff]
  %v1159 = vld [vmem:[%s3 + $0xfb0] sm:$0xff]
  %v1160 = vld [vmem:[%s3 + $0xfb8] sm:$0xff]
  %v1161 = vld [vmem:[%s3 + $0xfc0] sm:$0xff]
  %v1162 = vld [vmem:[%s3 + $0xfc8] sm:$0xff]
  %v1163 = vld [vmem:[%s3 + $0xfd0] sm:$0xff]
  %v1164 = vld [vmem:[%s3 + $0xfd8] sm:$0xff]
  %v1165 = vld [vmem:[%s3 + $0xfe0] sm:$0xff]
  %v1166 = vld [vmem:[%s3 + $0xfe8] sm:$0xff]
  %v1167 = vld [vmem:[%s3 + $0xff0] sm:$0xff]
  %v1168 = vld [vmem:[%s3 + $0xff8] sm:$0xff]
  %v1169 = vld [vmem:[%s4] sm:$0xff]
  %v1171 = vlaneseq
  %v1172 = vshrl.u32 %v1171, 7
  %v1173 = vsub.s32 0, %v1172
  %v1174 = vrot.slane %v1169, %v1173
  %v1175 = vlaneseq
  %v1176 = vshrl.u32 %v1175, 7
  %v1177 = vsub.s32 1, %v1176
  %v1178 = vrot.slane %v1169, %v1177
  %v1179 = vlaneseq
  %v1180 = vshrl.u32 %v1179, 7
  %v1181 = vsub.s32 2, %v1180
  %v1182 = vrot.slane %v1169, %v1181
  %v1183 = vlaneseq
  %v1184 = vshrl.u32 %v1183, 7
  %v1185 = vsub.s32 3, %v1184
  %v1186 = vrot.slane %v1169, %v1185
  %v1187 = vlaneseq
  %v1188 = vshrl.u32 %v1187, 7
  %v1189 = vsub.s32 4, %v1188
  %v1190 = vrot.slane %v1169, %v1189
  %v1191 = vlaneseq
  %v1192 = vshrl.u32 %v1191, 7
  %v1193 = vsub.s32 5, %v1192
  %v1194 = vrot.slane %v1169, %v1193
  %v1195 = vlaneseq
  %v1196 = vshrl.u32 %v1195, 7
  %v1197 = vsub.s32 6, %v1196
  %v1198 = vrot.slane %v1169, %v1197
  %v1199 = vlaneseq
  %v1200 = vshrl.u32 %v1199, 7
  %v1201 = vsub.s32 7, %v1200
  %v1202 = vrot.slane %v1169, %v1201
  %v1723 = vunpack.c.l.b16 %v657
  %v1724 = vunpack.c.h.b16 %v657
  %v1725 = vunpack.c.l.b16 %v658
  %v1726 = vunpack.c.h.b16 %v658
  %v1727 = vunpack.c.l.b16 %v659
  %v1728 = vunpack.c.h.b16 %v659
  %v1729 = vunpack.c.l.b16 %v660
  %v1730 = vunpack.c.h.b16 %v660
  %v1731 = vunpack.c.l.b16 %v661
  %v1732 = vunpack.c.h.b16 %v661
  %v1733 = vunpack.c.l.b16 %v662
  %v1734 = vunpack.c.h.b16 %v662
  %v1735 = vunpack.c.l.b16 %v663
  %v1736 = vunpack.c.h.b16 %v663
  %v1737 = vunpack.c.l.b16 %v664
  %v1738 = vunpack.c.h.b16 %v664
  %v1739 = vunpack.c.l.b16 %v665
  %v1740 = vunpack.c.h.b16 %v665
  %v1741 = vunpack.c.l.b16 %v666
  %v1742 = vunpack.c.h.b16 %v666
  %v1743 = vunpack.c.l.b16 %v667
  %v1744 = vunpack.c.h.b16 %v667
  %v1745 = vunpack.c.l.b16 %v668
  %v1746 = vunpack.c.h.b16 %v668
  %v1747 = vunpack.c.l.b16 %v669
  %v1748 = vunpack.c.h.b16 %v669
  %v1749 = vunpack.c.l.b16 %v670
  %v1750 = vunpack.c.h.b16 %v670
  %v1751 = vunpack.c.l.b16 %v671
  %v1752 = vunpack.c.h.b16 %v671
  %v1753 = vunpack.c.l.b16 %v672
  %v1754 = vunpack.c.h.b16 %v672
  %v1755 = vunpack.c.l.b16 %v673
  %v1756 = vunpack.c.h.b16 %v673
  %v1757 = vunpack.c.l.b16 %v674
  %v1758 = vunpack.c.h.b16 %v674
  %v1759 = vunpack.c.l.b16 %v675
  %v1760 = vunpack.c.h.b16 %v675
  %v1761 = vunpack.c.l.b16 %v676
  %v1762 = vunpack.c.h.b16 %v676
  %v1763 = vunpack.c.l.b16 %v677
  %v1764 = vunpack.c.h.b16 %v677
  %v1765 = vunpack.c.l.b16 %v678
  %v1766 = vunpack.c.h.b16 %v678
  %v1767 = vunpack.c.l.b16 %v679
  %v1768 = vunpack.c.h.b16 %v679
  %v1769 = vunpack.c.l.b16 %v680
  %v1770 = vunpack.c.h.b16 %v680
  %v1771 = vunpack.c.l.b16 %v681
  %v1772 = vunpack.c.h.b16 %v681
  %v1773 = vunpack.c.l.b16 %v682
  %v1774 = vunpack.c.h.b16 %v682
  %v1775 = vunpack.c.l.b16 %v683
  %v1776 = vunpack.c.h.b16 %v683
  %v1777 = vunpack.c.l.b16 %v684
  %v1778 = vunpack.c.h.b16 %v684
  %v1779 = vunpack.c.l.b16 %v685
  %v1780 = vunpack.c.h.b16 %v685
  %v1781 = vunpack.c.l.b16 %v686
  %v1782 = vunpack.c.h.b16 %v686
  %v1783 = vunpack.c.l.b16 %v687
  %v1784 = vunpack.c.h.b16 %v687
  %v1785 = vunpack.c.l.b16 %v688
  %v1786 = vunpack.c.h.b16 %v688
  %v1787 = vunpack.c.l.b16 %v689
  %v1788 = vunpack.c.h.b16 %v689
  %v1789 = vunpack.c.l.b16 %v690
  %v1790 = vunpack.c.h.b16 %v690
  %v1791 = vunpack.c.l.b16 %v691
  %v1792 = vunpack.c.h.b16 %v691
  %v1793 = vunpack.c.l.b16 %v692
  %v1794 = vunpack.c.h.b16 %v692
  %v1795 = vunpack.c.l.b16 %v693
  %v1796 = vunpack.c.h.b16 %v693
  %v1797 = vunpack.c.l.b16 %v694
  %v1798 = vunpack.c.h.b16 %v694
  %v1799 = vunpack.c.l.b16 %v695
  %v1800 = vunpack.c.h.b16 %v695
  %v1801 = vunpack.c.l.b16 %v696
  %v1802 = vunpack.c.h.b16 %v696
  %v1803 = vunpack.c.l.b16 %v697
  %v1804 = vunpack.c.h.b16 %v697
  %v1805 = vunpack.c.l.b16 %v698
  %v1806 = vunpack.c.h.b16 %v698
  %v1807 = vunpack.c.l.b16 %v699
  %v1808 = vunpack.c.h.b16 %v699
  %v1809 = vunpack.c.l.b16 %v700
  %v1810 = vunpack.c.h.b16 %v700
  %v1811 = vunpack.c.l.b16 %v701
  %v1812 = vunpack.c.h.b16 %v701
  %v1813 = vunpack.c.l.b16 %v702
  %v1814 = vunpack.c.h.b16 %v702
  %v1815 = vunpack.c.l.b16 %v703
  %v1816 = vunpack.c.h.b16 %v703
  %v1817 = vunpack.c.l.b16 %v704
  %v1818 = vunpack.c.h.b16 %v704
  %v1819 = vunpack.c.l.b16 %v705
  %v1820 = vunpack.c.h.b16 %v705
  %v1821 = vunpack.c.l.b16 %v706
  %v1822 = vunpack.c.h.b16 %v706
  %v1823 = vunpack.c.l.b16 %v707
  %v1824 = vunpack.c.h.b16 %v707
  %v1825 = vunpack.c.l.b16 %v708
  %v1826 = vunpack.c.h.b16 %v708
  %v1827 = vunpack.c.l.b16 %v709
  %v1828 = vunpack.c.h.b16 %v709
  %v1829 = vunpack.c.l.b16 %v710
  %v1830 = vunpack.c.h.b16 %v710
  %v1831 = vunpack.c.l.b16 %v711
  %v1832 = vunpack.c.h.b16 %v711
  %v1833 = vunpack.c.l.b16 %v712
  %v1834 = vunpack.c.h.b16 %v712
  %v1835 = vunpack.c.l.b16 %v713
  %v1836 = vunpack.c.h.b16 %v713
  %v1837 = vunpack.c.l.b16 %v714
  %v1838 = vunpack.c.h.b16 %v714
  %v1839 = vunpack.c.l.b16 %v715
  %v1840 = vunpack.c.h.b16 %v715
  %v1841 = vunpack.c.l.b16 %v716
  %v1842 = vunpack.c.h.b16 %v716
  %v1843 = vunpack.c.l.b16 %v717
  %v1844 = vunpack.c.h.b16 %v717
  %v1845 = vunpack.c.l.b16 %v718
  %v1846 = vunpack.c.h.b16 %v718
  %v1847 = vunpack.c.l.b16 %v719
  %v1848 = vunpack.c.h.b16 %v719
  %v1849 = vunpack.c.l.b16 %v720
  %v1850 = vunpack.c.h.b16 %v720
  %v1851 = vunpack.c.l.b16 %v721
  %v1852 = vunpack.c.h.b16 %v721
  %v1853 = vunpack.c.l.b16 %v722
  %v1854 = vunpack.c.h.b16 %v722
  %v1855 = vunpack.c.l.b16 %v723
  %v1856 = vunpack.c.h.b16 %v723
  %v1857 = vunpack.c.l.b16 %v724
  %v1858 = vunpack.c.h.b16 %v724
  %v1859 = vunpack.c.l.b16 %v725
  %v1860 = vunpack.c.h.b16 %v725
  %v1861 = vunpack.c.l.b16 %v726
  %v1862 = vunpack.c.h.b16 %v726
  %v1863 = vunpack.c.l.b16 %v727
  %v1864 = vunpack.c.h.b16 %v727
  %v1865 = vunpack.c.l.b16 %v728
  %v1866 = vunpack.c.h.b16 %v728
  %v1867 = vunpack.c.l.b16 %v729
  %v1868 = vunpack.c.h.b16 %v729
  %v1869 = vunpack.c.l.b16 %v730
  %v1870 = vunpack.c.h.b16 %v730
  %v1871 = vunpack.c.l.b16 %v731
  %v1872 = vunpack.c.h.b16 %v731
  %v1873 = vunpack.c.l.b16 %v732
  %v1874 = vunpack.c.h.b16 %v732
  %v1875 = vunpack.c.l.b16 %v733
  %v1876 = vunpack.c.h.b16 %v733
  %v1877 = vunpack.c.l.b16 %v734
  %v1878 = vunpack.c.h.b16 %v734
  %v1879 = vunpack.c.l.b16 %v735
  %v1880 = vunpack.c.h.b16 %v735
  %v1881 = vunpack.c.l.b16 %v736
  %v1882 = vunpack.c.h.b16 %v736
  %v1883 = vunpack.c.l.b16 %v737
  %v1884 = vunpack.c.h.b16 %v737
  %v1885 = vunpack.c.l.b16 %v738
  %v1886 = vunpack.c.h.b16 %v738
  %v1887 = vunpack.c.l.b16 %v739
  %v1888 = vunpack.c.h.b16 %v739
  %v1889 = vunpack.c.l.b16 %v740
  %v1890 = vunpack.c.h.b16 %v740
  %v1891 = vunpack.c.l.b16 %v741
  %v1892 = vunpack.c.h.b16 %v741
  %v1893 = vunpack.c.l.b16 %v742
  %v1894 = vunpack.c.h.b16 %v742
  %v1895 = vunpack.c.l.b16 %v743
  %v1896 = vunpack.c.h.b16 %v743
  %v1897 = vunpack.c.l.b16 %v744
  %v1898 = vunpack.c.h.b16 %v744
  %v1899 = vunpack.c.l.b16 %v745
  %v1900 = vunpack.c.h.b16 %v745
  %v1901 = vunpack.c.l.b16 %v746
  %v1902 = vunpack.c.h.b16 %v746
  %v1903 = vunpack.c.l.b16 %v747
  %v1904 = vunpack.c.h.b16 %v747
  %v1905 = vunpack.c.l.b16 %v748
  %v1906 = vunpack.c.h.b16 %v748
  %v1907 = vunpack.c.l.b16 %v749
  %v1908 = vunpack.c.h.b16 %v749
  %v1909 = vunpack.c.l.b16 %v750
  %v1910 = vunpack.c.h.b16 %v750
  %v1911 = vunpack.c.l.b16 %v751
  %v1912 = vunpack.c.h.b16 %v751
  %v1913 = vunpack.c.l.b16 %v752
  %v1914 = vunpack.c.h.b16 %v752
  %v1915 = vunpack.c.l.b16 %v753
  %v1916 = vunpack.c.h.b16 %v753
  %v1917 = vunpack.c.l.b16 %v754
  %v1918 = vunpack.c.h.b16 %v754
  %v1919 = vunpack.c.l.b16 %v755
  %v1920 = vunpack.c.h.b16 %v755
  %v1921 = vunpack.c.l.b16 %v756
  %v1922 = vunpack.c.h.b16 %v756
  %v1923 = vunpack.c.l.b16 %v757
  %v1924 = vunpack.c.h.b16 %v757
  %v1925 = vunpack.c.l.b16 %v758
  %v1926 = vunpack.c.h.b16 %v758
  %v1927 = vunpack.c.l.b16 %v759
  %v1928 = vunpack.c.h.b16 %v759
  %v1929 = vunpack.c.l.b16 %v760
  %v1930 = vunpack.c.h.b16 %v760
  %v1931 = vunpack.c.l.b16 %v761
  %v1932 = vunpack.c.h.b16 %v761
  %v1933 = vunpack.c.l.b16 %v762
  %v1934 = vunpack.c.h.b16 %v762
  %v1935 = vunpack.c.l.b16 %v763
  %v1936 = vunpack.c.h.b16 %v763
  %v1937 = vunpack.c.l.b16 %v764
  %v1938 = vunpack.c.h.b16 %v764
  %v1939 = vunpack.c.l.b16 %v765
  %v1940 = vunpack.c.h.b16 %v765
  %v1941 = vunpack.c.l.b16 %v766
  %v1942 = vunpack.c.h.b16 %v766
  %v1943 = vunpack.c.l.b16 %v767
  %v1944 = vunpack.c.h.b16 %v767
  %v1945 = vunpack.c.l.b16 %v768
  %v1946 = vunpack.c.h.b16 %v768
  %v1947 = vunpack.c.l.b16 %v769
  %v1948 = vunpack.c.h.b16 %v769
  %v1949 = vunpack.c.l.b16 %v770
  %v1950 = vunpack.c.h.b16 %v770
  %v1951 = vunpack.c.l.b16 %v771
  %v1952 = vunpack.c.h.b16 %v771
  %v1953 = vunpack.c.l.b16 %v772
  %v1954 = vunpack.c.h.b16 %v772
  %v1955 = vunpack.c.l.b16 %v773
  %v1956 = vunpack.c.h.b16 %v773
  %v1957 = vunpack.c.l.b16 %v774
  %v1958 = vunpack.c.h.b16 %v774
  %v1959 = vunpack.c.l.b16 %v775
  %v1960 = vunpack.c.h.b16 %v775
  %v1961 = vunpack.c.l.b16 %v776
  %v1962 = vunpack.c.h.b16 %v776
  %v1963 = vunpack.c.l.b16 %v777
  %v1964 = vunpack.c.h.b16 %v777
  %v1965 = vunpack.c.l.b16 %v778
  %v1966 = vunpack.c.h.b16 %v778
  %v1967 = vunpack.c.l.b16 %v779
  %v1968 = vunpack.c.h.b16 %v779
  %v1969 = vunpack.c.l.b16 %v780
  %v1970 = vunpack.c.h.b16 %v780
  %v1971 = vunpack.c.l.b16 %v781
  %v1972 = vunpack.c.h.b16 %v781
  %v1973 = vunpack.c.l.b16 %v782
  %v1974 = vunpack.c.h.b16 %v782
  %v1975 = vunpack.c.l.b16 %v783
  %v1976 = vunpack.c.h.b16 %v783
  %v1977 = vunpack.c.l.b16 %v784
  %v1978 = vunpack.c.h.b16 %v784
  %v1979 = vunpack.c.l.b16 %v785
  %v1980 = vunpack.c.h.b16 %v785
  %v1981 = vunpack.c.l.b16 %v786
  %v1982 = vunpack.c.h.b16 %v786
  %v1983 = vunpack.c.l.b16 %v787
  %v1984 = vunpack.c.h.b16 %v787
  %v1985 = vunpack.c.l.b16 %v788
  %v1986 = vunpack.c.h.b16 %v788
  %v1987 = vunpack.c.l.b16 %v789
  %v1988 = vunpack.c.h.b16 %v789
  %v1989 = vunpack.c.l.b16 %v790
  %v1990 = vunpack.c.h.b16 %v790
  %v1991 = vunpack.c.l.b16 %v791
  %v1992 = vunpack.c.h.b16 %v791
  %v1993 = vunpack.c.l.b16 %v792
  %v1994 = vunpack.c.h.b16 %v792
  %v1995 = vunpack.c.l.b16 %v793
  %v1996 = vunpack.c.h.b16 %v793
  %v1997 = vunpack.c.l.b16 %v794
  %v1998 = vunpack.c.h.b16 %v794
  %v1999 = vunpack.c.l.b16 %v795
  %v2000 = vunpack.c.h.b16 %v795
  %v2001 = vunpack.c.l.b16 %v796
  %v2002 = vunpack.c.h.b16 %v796
  %v2003 = vunpack.c.l.b16 %v797
  %v2004 = vunpack.c.h.b16 %v797
  %v2005 = vunpack.c.l.b16 %v798
  %v2006 = vunpack.c.h.b16 %v798
  %v2007 = vunpack.c.l.b16 %v799
  %v2008 = vunpack.c.h.b16 %v799
  %v2009 = vunpack.c.l.b16 %v800
  %v2010 = vunpack.c.h.b16 %v800
  %v2011 = vunpack.c.l.b16 %v801
  %v2012 = vunpack.c.h.b16 %v801
  %v2013 = vunpack.c.l.b16 %v802
  %v2014 = vunpack.c.h.b16 %v802
  %v2015 = vunpack.c.l.b16 %v803
  %v2016 = vunpack.c.h.b16 %v803
  %v2017 = vunpack.c.l.b16 %v804
  %v2018 = vunpack.c.h.b16 %v804
  %v2019 = vunpack.c.l.b16 %v805
  %v2020 = vunpack.c.h.b16 %v805
  %v2021 = vunpack.c.l.b16 %v806
  %v2022 = vunpack.c.h.b16 %v806
  %v2023 = vunpack.c.l.b16 %v807
  %v2024 = vunpack.c.h.b16 %v807
  %v2025 = vunpack.c.l.b16 %v808
  %v2026 = vunpack.c.h.b16 %v808
  %v2027 = vunpack.c.l.b16 %v809
  %v2028 = vunpack.c.h.b16 %v809
  %v2029 = vunpack.c.l.b16 %v810
  %v2030 = vunpack.c.h.b16 %v810
  %v2031 = vunpack.c.l.b16 %v811
  %v2032 = vunpack.c.h.b16 %v811
  %v2033 = vunpack.c.l.b16 %v812
  %v2034 = vunpack.c.h.b16 %v812
  %v2035 = vunpack.c.l.b16 %v813
  %v2036 = vunpack.c.h.b16 %v813
  %v2037 = vunpack.c.l.b16 %v814
  %v2038 = vunpack.c.h.b16 %v814
  %v2039 = vunpack.c.l.b16 %v815
  %v2040 = vunpack.c.h.b16 %v815
  %v2041 = vunpack.c.l.b16 %v816
  %v2042 = vunpack.c.h.b16 %v816
  %v2043 = vunpack.c.l.b16 %v817
  %v2044 = vunpack.c.h.b16 %v817
  %v2045 = vunpack.c.l.b16 %v818
  %v2046 = vunpack.c.h.b16 %v818
  %v2047 = vunpack.c.l.b16 %v819
  %v2048 = vunpack.c.h.b16 %v819
  %v2049 = vunpack.c.l.b16 %v820
  %v2050 = vunpack.c.h.b16 %v820
  %v2051 = vunpack.c.l.b16 %v821
  %v2052 = vunpack.c.h.b16 %v821
  %v2053 = vunpack.c.l.b16 %v822
  %v2054 = vunpack.c.h.b16 %v822
  %v2055 = vunpack.c.l.b16 %v823
  %v2056 = vunpack.c.h.b16 %v823
  %v2057 = vunpack.c.l.b16 %v824
  %v2058 = vunpack.c.h.b16 %v824
  %v2059 = vunpack.c.l.b16 %v825
  %v2060 = vunpack.c.h.b16 %v825
  %v2061 = vunpack.c.l.b16 %v826
  %v2062 = vunpack.c.h.b16 %v826
  %v2063 = vunpack.c.l.b16 %v827
  %v2064 = vunpack.c.h.b16 %v827
  %v2065 = vunpack.c.l.b16 %v828
  %v2066 = vunpack.c.h.b16 %v828
  %v2067 = vunpack.c.l.b16 %v829
  %v2068 = vunpack.c.h.b16 %v829
  %v2069 = vunpack.c.l.b16 %v830
  %v2070 = vunpack.c.h.b16 %v830
  %v2071 = vunpack.c.l.b16 %v831
  %v2072 = vunpack.c.h.b16 %v831
  %v2073 = vunpack.c.l.b16 %v832
  %v2074 = vunpack.c.h.b16 %v832
  %v2075 = vunpack.c.l.b16 %v833
  %v2076 = vunpack.c.h.b16 %v833
  %v2077 = vunpack.c.l.b16 %v834
  %v2078 = vunpack.c.h.b16 %v834
  %v2079 = vunpack.c.l.b16 %v835
  %v2080 = vunpack.c.h.b16 %v835
  %v2081 = vunpack.c.l.b16 %v836
  %v2082 = vunpack.c.h.b16 %v836
  %v2083 = vunpack.c.l.b16 %v837
  %v2084 = vunpack.c.h.b16 %v837
  %v2085 = vunpack.c.l.b16 %v838
  %v2086 = vunpack.c.h.b16 %v838
  %v2087 = vunpack.c.l.b16 %v839
  %v2088 = vunpack.c.h.b16 %v839
  %v2089 = vunpack.c.l.b16 %v840
  %v2090 = vunpack.c.h.b16 %v840
  %v2091 = vunpack.c.l.b16 %v841
  %v2092 = vunpack.c.h.b16 %v841
  %v2093 = vunpack.c.l.b16 %v842
  %v2094 = vunpack.c.h.b16 %v842
  %v2095 = vunpack.c.l.b16 %v843
  %v2096 = vunpack.c.h.b16 %v843
  %v2097 = vunpack.c.l.b16 %v844
  %v2098 = vunpack.c.h.b16 %v844
  %v2099 = vunpack.c.l.b16 %v845
  %v2100 = vunpack.c.h.b16 %v845
  %v2101 = vunpack.c.l.b16 %v846
  %v2102 = vunpack.c.h.b16 %v846
  %v2103 = vunpack.c.l.b16 %v847
  %v2104 = vunpack.c.h.b16 %v847
  %v2105 = vunpack.c.l.b16 %v848
  %v2106 = vunpack.c.h.b16 %v848
  %v2107 = vunpack.c.l.b16 %v849
  %v2108 = vunpack.c.h.b16 %v849
  %v2109 = vunpack.c.l.b16 %v850
  %v2110 = vunpack.c.h.b16 %v850
  %v2111 = vunpack.c.l.b16 %v851
  %v2112 = vunpack.c.h.b16 %v851
  %v2113 = vunpack.c.l.b16 %v852
  %v2114 = vunpack.c.h.b16 %v852
  %v2115 = vunpack.c.l.b16 %v853
  %v2116 = vunpack.c.h.b16 %v853
  %v2117 = vunpack.c.l.b16 %v854
  %v2118 = vunpack.c.h.b16 %v854
  %v2119 = vunpack.c.l.b16 %v855
  %v2120 = vunpack.c.h.b16 %v855
  %v2121 = vunpack.c.l.b16 %v856
  %v2122 = vunpack.c.h.b16 %v856
  %v2123 = vunpack.c.l.b16 %v857
  %v2124 = vunpack.c.h.b16 %v857
  %v2125 = vunpack.c.l.b16 %v858
  %v2126 = vunpack.c.h.b16 %v858
  %v2127 = vunpack.c.l.b16 %v859
  %v2128 = vunpack.c.h.b16 %v859
  %v2129 = vunpack.c.l.b16 %v860
  %v2130 = vunpack.c.h.b16 %v860
  %v2131 = vunpack.c.l.b16 %v861
  %v2132 = vunpack.c.h.b16 %v861
  %v2133 = vunpack.c.l.b16 %v862
  %v2134 = vunpack.c.h.b16 %v862
  %v2135 = vunpack.c.l.b16 %v863
  %v2136 = vunpack.c.h.b16 %v863
  %v2137 = vunpack.c.l.b16 %v864
  %v2138 = vunpack.c.h.b16 %v864
  %v2139 = vunpack.c.l.b16 %v865
  %v2140 = vunpack.c.h.b16 %v865
  %v2141 = vunpack.c.l.b16 %v866
  %v2142 = vunpack.c.h.b16 %v866
  %v2143 = vunpack.c.l.b16 %v867
  %v2144 = vunpack.c.h.b16 %v867
  %v2145 = vunpack.c.l.b16 %v868
  %v2146 = vunpack.c.h.b16 %v868
  %v2147 = vunpack.c.l.b16 %v869
  %v2148 = vunpack.c.h.b16 %v869
  %v2149 = vunpack.c.l.b16 %v870
  %v2150 = vunpack.c.h.b16 %v870
  %v2151 = vunpack.c.l.b16 %v871
  %v2152 = vunpack.c.h.b16 %v871
  %v2153 = vunpack.c.l.b16 %v872
  %v2154 = vunpack.c.h.b16 %v872
  %v2155 = vunpack.c.l.b16 %v873
  %v2156 = vunpack.c.h.b16 %v873
  %v2157 = vunpack.c.l.b16 %v874
  %v2158 = vunpack.c.h.b16 %v874
  %v2159 = vunpack.c.l.b16 %v875
  %v2160 = vunpack.c.h.b16 %v875
  %v2161 = vunpack.c.l.b16 %v876
  %v2162 = vunpack.c.h.b16 %v876
  %v2163 = vunpack.c.l.b16 %v877
  %v2164 = vunpack.c.h.b16 %v877
  %v2165 = vunpack.c.l.b16 %v878
  %v2166 = vunpack.c.h.b16 %v878
  %v2167 = vunpack.c.l.b16 %v879
  %v2168 = vunpack.c.h.b16 %v879
  %v2169 = vunpack.c.l.b16 %v880
  %v2170 = vunpack.c.h.b16 %v880
  %v2171 = vunpack.c.l.b16 %v881
  %v2172 = vunpack.c.h.b16 %v881
  %v2173 = vunpack.c.l.b16 %v882
  %v2174 = vunpack.c.h.b16 %v882
  %v2175 = vunpack.c.l.b16 %v883
  %v2176 = vunpack.c.h.b16 %v883
  %v2177 = vunpack.c.l.b16 %v884
  %v2178 = vunpack.c.h.b16 %v884
  %v2179 = vunpack.c.l.b16 %v885
  %v2180 = vunpack.c.h.b16 %v885
  %v2181 = vunpack.c.l.b16 %v886
  %v2182 = vunpack.c.h.b16 %v886
  %v2183 = vunpack.c.l.b16 %v887
  %v2184 = vunpack.c.h.b16 %v887
  %v2185 = vunpack.c.l.b16 %v888
  %v2186 = vunpack.c.h.b16 %v888
  %v2187 = vunpack.c.l.b16 %v889
  %v2188 = vunpack.c.h.b16 %v889
  %v2189 = vunpack.c.l.b16 %v890
  %v2190 = vunpack.c.h.b16 %v890
  %v2191 = vunpack.c.l.b16 %v891
  %v2192 = vunpack.c.h.b16 %v891
  %v2193 = vunpack.c.l.b16 %v892
  %v2194 = vunpack.c.h.b16 %v892
  %v2195 = vunpack.c.l.b16 %v893
  %v2196 = vunpack.c.h.b16 %v893
  %v2197 = vunpack.c.l.b16 %v894
  %v2198 = vunpack.c.h.b16 %v894
  %v2199 = vunpack.c.l.b16 %v895
  %v2200 = vunpack.c.h.b16 %v895
  %v2201 = vunpack.c.l.b16 %v896
  %v2202 = vunpack.c.h.b16 %v896
  %v2203 = vunpack.c.l.b16 %v897
  %v2204 = vunpack.c.h.b16 %v897
  %v2205 = vunpack.c.l.b16 %v898
  %v2206 = vunpack.c.h.b16 %v898
  %v2207 = vunpack.c.l.b16 %v899
  %v2208 = vunpack.c.h.b16 %v899
  %v2209 = vunpack.c.l.b16 %v900
  %v2210 = vunpack.c.h.b16 %v900
  %v2211 = vunpack.c.l.b16 %v901
  %v2212 = vunpack.c.h.b16 %v901
  %v2213 = vunpack.c.l.b16 %v902
  %v2214 = vunpack.c.h.b16 %v902
  %v2215 = vunpack.c.l.b16 %v903
  %v2216 = vunpack.c.h.b16 %v903
  %v2217 = vunpack.c.l.b16 %v904
  %v2218 = vunpack.c.h.b16 %v904
  %v2219 = vunpack.c.l.b16 %v905
  %v2220 = vunpack.c.h.b16 %v905
  %v2221 = vunpack.c.l.b16 %v906
  %v2222 = vunpack.c.h.b16 %v906
  %v2223 = vunpack.c.l.b16 %v907
  %v2224 = vunpack.c.h.b16 %v907
  %v2225 = vunpack.c.l.b16 %v908
  %v2226 = vunpack.c.h.b16 %v908
  %v2227 = vunpack.c.l.b16 %v909
  %v2228 = vunpack.c.h.b16 %v909
  %v2229 = vunpack.c.l.b16 %v910
  %v2230 = vunpack.c.h.b16 %v910
  %v2231 = vunpack.c.l.b16 %v911
  %v2232 = vunpack.c.h.b16 %v911
  %v2233 = vunpack.c.l.b16 %v912
  %v2234 = vunpack.c.h.b16 %v912
  %v2235 = vunpack.c.l.b16 %v913
  %v2236 = vunpack.c.h.b16 %v913
  %v2237 = vunpack.c.l.b16 %v914
  %v2238 = vunpack.c.h.b16 %v914
  %v2239 = vunpack.c.l.b16 %v915
  %v2240 = vunpack.c.h.b16 %v915
  %v2241 = vunpack.c.l.b16 %v916
  %v2242 = vunpack.c.h.b16 %v916
  %v2243 = vunpack.c.l.b16 %v917
  %v2244 = vunpack.c.h.b16 %v917
  %v2245 = vunpack.c.l.b16 %v918
  %v2246 = vunpack.c.h.b16 %v918
  %v2247 = vunpack.c.l.b16 %v919
  %v2248 = vunpack.c.h.b16 %v919
  %v2249 = vunpack.c.l.b16 %v920
  %v2250 = vunpack.c.h.b16 %v920
  %v2251 = vunpack.c.l.b16 %v921
  %v2252 = vunpack.c.h.b16 %v921
  %v2253 = vunpack.c.l.b16 %v922
  %v2254 = vunpack.c.h.b16 %v922
  %v2255 = vunpack.c.l.b16 %v923
  %v2256 = vunpack.c.h.b16 %v923
  %v2257 = vunpack.c.l.b16 %v924
  %v2258 = vunpack.c.h.b16 %v924
  %v2259 = vunpack.c.l.b16 %v925
  %v2260 = vunpack.c.h.b16 %v925
  %v2261 = vunpack.c.l.b16 %v926
  %v2262 = vunpack.c.h.b16 %v926
  %v2263 = vunpack.c.l.b16 %v927
  %v2264 = vunpack.c.h.b16 %v927
  %v2265 = vunpack.c.l.b16 %v928
  %v2266 = vunpack.c.h.b16 %v928
  %v2267 = vunpack.c.l.b16 %v929
  %v2268 = vunpack.c.h.b16 %v929
  %v2269 = vunpack.c.l.b16 %v930
  %v2270 = vunpack.c.h.b16 %v930
  %v2271 = vunpack.c.l.b16 %v931
  %v2272 = vunpack.c.h.b16 %v931
  %v2273 = vunpack.c.l.b16 %v932
  %v2274 = vunpack.c.h.b16 %v932
  %v2275 = vunpack.c.l.b16 %v933
  %v2276 = vunpack.c.h.b16 %v933
  %v2277 = vunpack.c.l.b16 %v934
  %v2278 = vunpack.c.h.b16 %v934
  %v2279 = vunpack.c.l.b16 %v935
  %v2280 = vunpack.c.h.b16 %v935
  %v2281 = vunpack.c.l.b16 %v936
  %v2282 = vunpack.c.h.b16 %v936
  %v2283 = vunpack.c.l.b16 %v937
  %v2284 = vunpack.c.h.b16 %v937
  %v2285 = vunpack.c.l.b16 %v938
  %v2286 = vunpack.c.h.b16 %v938
  %v2287 = vunpack.c.l.b16 %v939
  %v2288 = vunpack.c.h.b16 %v939
  %v2289 = vunpack.c.l.b16 %v940
  %v2290 = vunpack.c.h.b16 %v940
  %v2291 = vunpack.c.l.b16 %v941
  %v2292 = vunpack.c.h.b16 %v941
  %v2293 = vunpack.c.l.b16 %v942
  %v2294 = vunpack.c.h.b16 %v942
  %v2295 = vunpack.c.l.b16 %v943
  %v2296 = vunpack.c.h.b16 %v943
  %v2297 = vunpack.c.l.b16 %v944
  %v2298 = vunpack.c.h.b16 %v944
  %v2299 = vunpack.c.l.b16 %v945
  %v2300 = vunpack.c.h.b16 %v945
  %v2301 = vunpack.c.l.b16 %v946
  %v2302 = vunpack.c.h.b16 %v946
  %v2303 = vunpack.c.l.b16 %v947
  %v2304 = vunpack.c.h.b16 %v947
  %v2305 = vunpack.c.l.b16 %v948
  %v2306 = vunpack.c.h.b16 %v948
  %v2307 = vunpack.c.l.b16 %v949
  %v2308 = vunpack.c.h.b16 %v949
  %v2309 = vunpack.c.l.b16 %v950
  %v2310 = vunpack.c.h.b16 %v950
  %v2311 = vunpack.c.l.b16 %v951
  %v2312 = vunpack.c.h.b16 %v951
  %v2313 = vunpack.c.l.b16 %v952
  %v2314 = vunpack.c.h.b16 %v952
  %v2315 = vunpack.c.l.b16 %v953
  %v2316 = vunpack.c.h.b16 %v953
  %v2317 = vunpack.c.l.b16 %v954
  %v2318 = vunpack.c.h.b16 %v954
  %v2319 = vunpack.c.l.b16 %v955
  %v2320 = vunpack.c.h.b16 %v955
  %v2321 = vunpack.c.l.b16 %v956
  %v2322 = vunpack.c.h.b16 %v956
  %v2323 = vunpack.c.l.b16 %v957
  %v2324 = vunpack.c.h.b16 %v957
  %v2325 = vunpack.c.l.b16 %v958
  %v2326 = vunpack.c.h.b16 %v958
  %v2327 = vunpack.c.l.b16 %v959
  %v2328 = vunpack.c.h.b16 %v959
  %v2329 = vunpack.c.l.b16 %v960
  %v2330 = vunpack.c.h.b16 %v960
  %v2331 = vunpack.c.l.b16 %v961
  %v2332 = vunpack.c.h.b16 %v961
  %v2333 = vunpack.c.l.b16 %v962
  %v2334 = vunpack.c.h.b16 %v962
  %v2335 = vunpack.c.l.b16 %v963
  %v2336 = vunpack.c.h.b16 %v963
  %v2337 = vunpack.c.l.b16 %v964
  %v2338 = vunpack.c.h.b16 %v964
  %v2339 = vunpack.c.l.b16 %v965
  %v2340 = vunpack.c.h.b16 %v965
  %v2341 = vunpack.c.l.b16 %v966
  %v2342 = vunpack.c.h.b16 %v966
  %v2343 = vunpack.c.l.b16 %v967
  %v2344 = vunpack.c.h.b16 %v967
  %v2345 = vunpack.c.l.b16 %v968
  %v2346 = vunpack.c.h.b16 %v968
  %v2347 = vunpack.c.l.b16 %v969
  %v2348 = vunpack.c.h.b16 %v969
  %v2349 = vunpack.c.l.b16 %v970
  %v2350 = vunpack.c.h.b16 %v970
  %v2351 = vunpack.c.l.b16 %v971
  %v2352 = vunpack.c.h.b16 %v971
  %v2353 = vunpack.c.l.b16 %v972
  %v2354 = vunpack.c.h.b16 %v972
  %v2355 = vunpack.c.l.b16 %v973
  %v2356 = vunpack.c.h.b16 %v973
  %v2357 = vunpack.c.l.b16 %v974
  %v2358 = vunpack.c.h.b16 %v974
  %v2359 = vunpack.c.l.b16 %v975
  %v2360 = vunpack.c.h.b16 %v975
  %v2361 = vunpack.c.l.b16 %v976
  %v2362 = vunpack.c.h.b16 %v976
  %v2363 = vunpack.c.l.b16 %v977
  %v2364 = vunpack.c.h.b16 %v977
  %v2365 = vunpack.c.l.b16 %v978
  %v2366 = vunpack.c.h.b16 %v978
  %v2367 = vunpack.c.l.b16 %v979
  %v2368 = vunpack.c.h.b16 %v979
  %v2369 = vunpack.c.l.b16 %v980
  %v2370 = vunpack.c.h.b16 %v980
  %v2371 = vunpack.c.l.b16 %v981
  %v2372 = vunpack.c.h.b16 %v981
  %v2373 = vunpack.c.l.b16 %v982
  %v2374 = vunpack.c.h.b16 %v982
  %v2375 = vunpack.c.l.b16 %v983
  %v2376 = vunpack.c.h.b16 %v983
  %v2377 = vunpack.c.l.b16 %v984
  %v2378 = vunpack.c.h.b16 %v984
  %v2379 = vunpack.c.l.b16 %v985
  %v2380 = vunpack.c.h.b16 %v985
  %v2381 = vunpack.c.l.b16 %v986
  %v2382 = vunpack.c.h.b16 %v986
  %v2383 = vunpack.c.l.b16 %v987
  %v2384 = vunpack.c.h.b16 %v987
  %v2385 = vunpack.c.l.b16 %v988
  %v2386 = vunpack.c.h.b16 %v988
  %v2387 = vunpack.c.l.b16 %v989
  %v2388 = vunpack.c.h.b16 %v989
  %v2389 = vunpack.c.l.b16 %v990
  %v2390 = vunpack.c.h.b16 %v990
  %v2391 = vunpack.c.l.b16 %v991
  %v2392 = vunpack.c.h.b16 %v991
  %v2393 = vunpack.c.l.b16 %v992
  %v2394 = vunpack.c.h.b16 %v992
  %v2395 = vunpack.c.l.b16 %v993
  %v2396 = vunpack.c.h.b16 %v993
  %v2397 = vunpack.c.l.b16 %v994
  %v2398 = vunpack.c.h.b16 %v994
  %v2399 = vunpack.c.l.b16 %v995
  %v2400 = vunpack.c.h.b16 %v995
  %v2401 = vunpack.c.l.b16 %v996
  %v2402 = vunpack.c.h.b16 %v996
  %v2403 = vunpack.c.l.b16 %v997
  %v2404 = vunpack.c.h.b16 %v997
  %v2405 = vunpack.c.l.b16 %v998
  %v2406 = vunpack.c.h.b16 %v998
  %v2407 = vunpack.c.l.b16 %v999
  %v2408 = vunpack.c.h.b16 %v999
  %v2409 = vunpack.c.l.b16 %v1000
  %v2410 = vunpack.c.h.b16 %v1000
  %v2411 = vunpack.c.l.b16 %v1001
  %v2412 = vunpack.c.h.b16 %v1001
  %v2413 = vunpack.c.l.b16 %v1002
  %v2414 = vunpack.c.h.b16 %v1002
  %v2415 = vunpack.c.l.b16 %v1003
  %v2416 = vunpack.c.h.b16 %v1003
  %v2417 = vunpack.c.l.b16 %v1004
  %v2418 = vunpack.c.h.b16 %v1004
  %v2419 = vunpack.c.l.b16 %v1005
  %v2420 = vunpack.c.h.b16 %v1005
  %v2421 = vunpack.c.l.b16 %v1006
  %v2422 = vunpack.c.h.b16 %v1006
  %v2423 = vunpack.c.l.b16 %v1007
  %v2424 = vunpack.c.h.b16 %v1007
  %v2425 = vunpack.c.l.b16 %v1008
  %v2426 = vunpack.c.h.b16 %v1008
  %v2427 = vunpack.c.l.b16 %v1009
  %v2428 = vunpack.c.h.b16 %v1009
  %v2429 = vunpack.c.l.b16 %v1010
  %v2430 = vunpack.c.h.b16 %v1010
  %v2431 = vunpack.c.l.b16 %v1011
  %v2432 = vunpack.c.h.b16 %v1011
  %v2433 = vunpack.c.l.b16 %v1012
  %v2434 = vunpack.c.h.b16 %v1012
  %v2435 = vunpack.c.l.b16 %v1013
  %v2436 = vunpack.c.h.b16 %v1013
  %v2437 = vunpack.c.l.b16 %v1014
  %v2438 = vunpack.c.h.b16 %v1014
  %v2439 = vunpack.c.l.b16 %v1015
  %v2440 = vunpack.c.h.b16 %v1015
  %v2441 = vunpack.c.l.b16 %v1016
  %v2442 = vunpack.c.h.b16 %v1016
  %v2443 = vunpack.c.l.b16 %v1017
  %v2444 = vunpack.c.h.b16 %v1017
  %v2445 = vunpack.c.l.b16 %v1018
  %v2446 = vunpack.c.h.b16 %v1018
  %v2447 = vunpack.c.l.b16 %v1019
  %v2448 = vunpack.c.h.b16 %v1019
  %v2449 = vunpack.c.l.b16 %v1020
  %v2450 = vunpack.c.h.b16 %v1020
  %v2451 = vunpack.c.l.b16 %v1021
  %v2452 = vunpack.c.h.b16 %v1021
  %v2453 = vunpack.c.l.b16 %v1022
  %v2454 = vunpack.c.h.b16 %v1022
  %v2455 = vunpack.c.l.b16 %v1023
  %v2456 = vunpack.c.h.b16 %v1023
  %v2457 = vunpack.c.l.b16 %v1024
  %v2458 = vunpack.c.h.b16 %v1024
  %v2459 = vunpack.c.l.b16 %v1025
  %v2460 = vunpack.c.h.b16 %v1025
  %v2461 = vunpack.c.l.b16 %v1026
  %v2462 = vunpack.c.h.b16 %v1026
  %v2463 = vunpack.c.l.b16 %v1027
  %v2464 = vunpack.c.h.b16 %v1027
  %v2465 = vunpack.c.l.b16 %v1028
  %v2466 = vunpack.c.h.b16 %v1028
  %v2467 = vunpack.c.l.b16 %v1029
  %v2468 = vunpack.c.h.b16 %v1029
  %v2469 = vunpack.c.l.b16 %v1030
  %v2470 = vunpack.c.h.b16 %v1030
  %v2471 = vunpack.c.l.b16 %v1031
  %v2472 = vunpack.c.h.b16 %v1031
  %v2473 = vunpack.c.l.b16 %v1032
  %v2474 = vunpack.c.h.b16 %v1032
  %v2475 = vunpack.c.l.b16 %v1033
  %v2476 = vunpack.c.h.b16 %v1033
  %v2477 = vunpack.c.l.b16 %v1034
  %v2478 = vunpack.c.h.b16 %v1034
  %v2479 = vunpack.c.l.b16 %v1035
  %v2480 = vunpack.c.h.b16 %v1035
  %v2481 = vunpack.c.l.b16 %v1036
  %v2482 = vunpack.c.h.b16 %v1036
  %v2483 = vunpack.c.l.b16 %v1037
  %v2484 = vunpack.c.h.b16 %v1037
  %v2485 = vunpack.c.l.b16 %v1038
  %v2486 = vunpack.c.h.b16 %v1038
  %v2487 = vunpack.c.l.b16 %v1039
  %v2488 = vunpack.c.h.b16 %v1039
  %v2489 = vunpack.c.l.b16 %v1040
  %v2490 = vunpack.c.h.b16 %v1040
  %v2491 = vunpack.c.l.b16 %v1041
  %v2492 = vunpack.c.h.b16 %v1041
  %v2493 = vunpack.c.l.b16 %v1042
  %v2494 = vunpack.c.h.b16 %v1042
  %v2495 = vunpack.c.l.b16 %v1043
  %v2496 = vunpack.c.h.b16 %v1043
  %v2497 = vunpack.c.l.b16 %v1044
  %v2498 = vunpack.c.h.b16 %v1044
  %v2499 = vunpack.c.l.b16 %v1045
  %v2500 = vunpack.c.h.b16 %v1045
  %v2501 = vunpack.c.l.b16 %v1046
  %v2502 = vunpack.c.h.b16 %v1046
  %v2503 = vunpack.c.l.b16 %v1047
  %v2504 = vunpack.c.h.b16 %v1047
  %v2505 = vunpack.c.l.b16 %v1048
  %v2506 = vunpack.c.h.b16 %v1048
  %v2507 = vunpack.c.l.b16 %v1049
  %v2508 = vunpack.c.h.b16 %v1049
  %v2509 = vunpack.c.l.b16 %v1050
  %v2510 = vunpack.c.h.b16 %v1050
  %v2511 = vunpack.c.l.b16 %v1051
  %v2512 = vunpack.c.h.b16 %v1051
  %v2513 = vunpack.c.l.b16 %v1052
  %v2514 = vunpack.c.h.b16 %v1052
  %v2515 = vunpack.c.l.b16 %v1053
  %v2516 = vunpack.c.h.b16 %v1053
  %v2517 = vunpack.c.l.b16 %v1054
  %v2518 = vunpack.c.h.b16 %v1054
  %v2519 = vunpack.c.l.b16 %v1055
  %v2520 = vunpack.c.h.b16 %v1055
  %v2521 = vunpack.c.l.b16 %v1056
  %v2522 = vunpack.c.h.b16 %v1056
  %v2523 = vunpack.c.l.b16 %v1057
  %v2524 = vunpack.c.h.b16 %v1057
  %v2525 = vunpack.c.l.b16 %v1058
  %v2526 = vunpack.c.h.b16 %v1058
  %v2527 = vunpack.c.l.b16 %v1059
  %v2528 = vunpack.c.h.b16 %v1059
  %v2529 = vunpack.c.l.b16 %v1060
  %v2530 = vunpack.c.h.b16 %v1060
  %v2531 = vunpack.c.l.b16 %v1061
  %v2532 = vunpack.c.h.b16 %v1061
  %v2533 = vunpack.c.l.b16 %v1062
  %v2534 = vunpack.c.h.b16 %v1062
  %v2535 = vunpack.c.l.b16 %v1063
  %v2536 = vunpack.c.h.b16 %v1063
  %v2537 = vunpack.c.l.b16 %v1064
  %v2538 = vunpack.c.h.b16 %v1064
  %v2539 = vunpack.c.l.b16 %v1065
  %v2540 = vunpack.c.h.b16 %v1065
  %v2541 = vunpack.c.l.b16 %v1066
  %v2542 = vunpack.c.h.b16 %v1066
  %v2543 = vunpack.c.l.b16 %v1067
  %v2544 = vunpack.c.h.b16 %v1067
  %v2545 = vunpack.c.l.b16 %v1068
  %v2546 = vunpack.c.h.b16 %v1068
  %v2547 = vunpack.c.l.b16 %v1069
  %v2548 = vunpack.c.h.b16 %v1069
  %v2549 = vunpack.c.l.b16 %v1070
  %v2550 = vunpack.c.h.b16 %v1070
  %v2551 = vunpack.c.l.b16 %v1071
  %v2552 = vunpack.c.h.b16 %v1071
  %v2553 = vunpack.c.l.b16 %v1072
  %v2554 = vunpack.c.h.b16 %v1072
  %v2555 = vunpack.c.l.b16 %v1073
  %v2556 = vunpack.c.h.b16 %v1073
  %v2557 = vunpack.c.l.b16 %v1074
  %v2558 = vunpack.c.h.b16 %v1074
  %v2559 = vunpack.c.l.b16 %v1075
  %v2560 = vunpack.c.h.b16 %v1075
  %v2561 = vunpack.c.l.b16 %v1076
  %v2562 = vunpack.c.h.b16 %v1076
  %v2563 = vunpack.c.l.b16 %v1077
  %v2564 = vunpack.c.h.b16 %v1077
  %v2565 = vunpack.c.l.b16 %v1078
  %v2566 = vunpack.c.h.b16 %v1078
  %v2567 = vunpack.c.l.b16 %v1079
  %v2568 = vunpack.c.h.b16 %v1079
  %v2569 = vunpack.c.l.b16 %v1080
  %v2570 = vunpack.c.h.b16 %v1080
  %v2571 = vunpack.c.l.b16 %v1081
  %v2572 = vunpack.c.h.b16 %v1081
  %v2573 = vunpack.c.l.b16 %v1082
  %v2574 = vunpack.c.h.b16 %v1082
  %v2575 = vunpack.c.l.b16 %v1083
  %v2576 = vunpack.c.h.b16 %v1083
  %v2577 = vunpack.c.l.b16 %v1084
  %v2578 = vunpack.c.h.b16 %v1084
  %v2579 = vunpack.c.l.b16 %v1085
  %v2580 = vunpack.c.h.b16 %v1085
  %v2581 = vunpack.c.l.b16 %v1086
  %v2582 = vunpack.c.h.b16 %v1086
  %v2583 = vunpack.c.l.b16 %v1087
  %v2584 = vunpack.c.h.b16 %v1087
  %v2585 = vunpack.c.l.b16 %v1088
  %v2586 = vunpack.c.h.b16 %v1088
  %v2587 = vunpack.c.l.b16 %v1089
  %v2588 = vunpack.c.h.b16 %v1089
  %v2589 = vunpack.c.l.b16 %v1090
  %v2590 = vunpack.c.h.b16 %v1090
  %v2591 = vunpack.c.l.b16 %v1091
  %v2592 = vunpack.c.h.b16 %v1091
  %v2593 = vunpack.c.l.b16 %v1092
  %v2594 = vunpack.c.h.b16 %v1092
  %v2595 = vunpack.c.l.b16 %v1093
  %v2596 = vunpack.c.h.b16 %v1093
  %v2597 = vunpack.c.l.b16 %v1094
  %v2598 = vunpack.c.h.b16 %v1094
  %v2599 = vunpack.c.l.b16 %v1095
  %v2600 = vunpack.c.h.b16 %v1095
  %v2601 = vunpack.c.l.b16 %v1096
  %v2602 = vunpack.c.h.b16 %v1096
  %v2603 = vunpack.c.l.b16 %v1097
  %v2604 = vunpack.c.h.b16 %v1097
  %v2605 = vunpack.c.l.b16 %v1098
  %v2606 = vunpack.c.h.b16 %v1098
  %v2607 = vunpack.c.l.b16 %v1099
  %v2608 = vunpack.c.h.b16 %v1099
  %v2609 = vunpack.c.l.b16 %v1100
  %v2610 = vunpack.c.h.b16 %v1100
  %v2611 = vunpack.c.l.b16 %v1101
  %v2612 = vunpack.c.h.b16 %v1101
  %v2613 = vunpack.c.l.b16 %v1102
  %v2614 = vunpack.c.h.b16 %v1102
  %v2615 = vunpack.c.l.b16 %v1103
  %v2616 = vunpack.c.h.b16 %v1103
  %v2617 = vunpack.c.l.b16 %v1104
  %v2618 = vunpack.c.h.b16 %v1104
  %v2619 = vunpack.c.l.b16 %v1105
  %v2620 = vunpack.c.h.b16 %v1105
  %v2621 = vunpack.c.l.b16 %v1106
  %v2622 = vunpack.c.h.b16 %v1106
  %v2623 = vunpack.c.l.b16 %v1107
  %v2624 = vunpack.c.h.b16 %v1107
  %v2625 = vunpack.c.l.b16 %v1108
  %v2626 = vunpack.c.h.b16 %v1108
  %v2627 = vunpack.c.l.b16 %v1109
  %v2628 = vunpack.c.h.b16 %v1109
  %v2629 = vunpack.c.l.b16 %v1110
  %v2630 = vunpack.c.h.b16 %v1110
  %v2631 = vunpack.c.l.b16 %v1111
  %v2632 = vunpack.c.h.b16 %v1111
  %v2633 = vunpack.c.l.b16 %v1112
  %v2634 = vunpack.c.h.b16 %v1112
  %v2635 = vunpack.c.l.b16 %v1113
  %v2636 = vunpack.c.h.b16 %v1113
  %v2637 = vunpack.c.l.b16 %v1114
  %v2638 = vunpack.c.h.b16 %v1114
  %v2639 = vunpack.c.l.b16 %v1115
  %v2640 = vunpack.c.h.b16 %v1115
  %v2641 = vunpack.c.l.b16 %v1116
  %v2642 = vunpack.c.h.b16 %v1116
  %v2643 = vunpack.c.l.b16 %v1117
  %v2644 = vunpack.c.h.b16 %v1117
  %v2645 = vunpack.c.l.b16 %v1118
  %v2646 = vunpack.c.h.b16 %v1118
  %v2647 = vunpack.c.l.b16 %v1119
  %v2648 = vunpack.c.h.b16 %v1119
  %v2649 = vunpack.c.l.b16 %v1120
  %v2650 = vunpack.c.h.b16 %v1120
  %v2651 = vunpack.c.l.b16 %v1121
  %v2652 = vunpack.c.h.b16 %v1121
  %v2653 = vunpack.c.l.b16 %v1122
  %v2654 = vunpack.c.h.b16 %v1122
  %v2655 = vunpack.c.l.b16 %v1123
  %v2656 = vunpack.c.h.b16 %v1123
  %v2657 = vunpack.c.l.b16 %v1124
  %v2658 = vunpack.c.h.b16 %v1124
  %v2659 = vunpack.c.l.b16 %v1125
  %v2660 = vunpack.c.h.b16 %v1125
  %v2661 = vunpack.c.l.b16 %v1126
  %v2662 = vunpack.c.h.b16 %v1126
  %v2663 = vunpack.c.l.b16 %v1127
  %v2664 = vunpack.c.h.b16 %v1127
  %v2665 = vunpack.c.l.b16 %v1128
  %v2666 = vunpack.c.h.b16 %v1128
  %v2667 = vunpack.c.l.b16 %v1129
  %v2668 = vunpack.c.h.b16 %v1129
  %v2669 = vunpack.c.l.b16 %v1130
  %v2670 = vunpack.c.h.b16 %v1130
  %v2671 = vunpack.c.l.b16 %v1131
  %v2672 = vunpack.c.h.b16 %v1131
  %v2673 = vunpack.c.l.b16 %v1132
  %v2674 = vunpack.c.h.b16 %v1132
  %v2675 = vunpack.c.l.b16 %v1133
  %v2676 = vunpack.c.h.b16 %v1133
  %v2677 = vunpack.c.l.b16 %v1134
  %v2678 = vunpack.c.h.b16 %v1134
  %v2679 = vunpack.c.l.b16 %v1135
  %v2680 = vunpack.c.h.b16 %v1135
  %v2681 = vunpack.c.l.b16 %v1136
  %v2682 = vunpack.c.h.b16 %v1136
  %v2683 = vunpack.c.l.b16 %v1137
  %v2684 = vunpack.c.h.b16 %v1137
  %v2685 = vunpack.c.l.b16 %v1138
  %v2686 = vunpack.c.h.b16 %v1138
  %v2687 = vunpack.c.l.b16 %v1139
  %v2688 = vunpack.c.h.b16 %v1139
  %v2689 = vunpack.c.l.b16 %v1140
  %v2690 = vunpack.c.h.b16 %v1140
  %v2691 = vunpack.c.l.b16 %v1141
  %v2692 = vunpack.c.h.b16 %v1141
  %v2693 = vunpack.c.l.b16 %v1142
  %v2694 = vunpack.c.h.b16 %v1142
  %v2695 = vunpack.c.l.b16 %v1143
  %v2696 = vunpack.c.h.b16 %v1143
  %v2697 = vunpack.c.l.b16 %v1144
  %v2698 = vunpack.c.h.b16 %v1144
  %v2699 = vunpack.c.l.b16 %v1145
  %v2700 = vunpack.c.h.b16 %v1145
  %v2701 = vunpack.c.l.b16 %v1146
  %v2702 = vunpack.c.h.b16 %v1146
  %v2703 = vunpack.c.l.b16 %v1147
  %v2704 = vunpack.c.h.b16 %v1147
  %v2705 = vunpack.c.l.b16 %v1148
  %v2706 = vunpack.c.h.b16 %v1148
  %v2707 = vunpack.c.l.b16 %v1149
  %v2708 = vunpack.c.h.b16 %v1149
  %v2709 = vunpack.c.l.b16 %v1150
  %v2710 = vunpack.c.h.b16 %v1150
  %v2711 = vunpack.c.l.b16 %v1151
  %v2712 = vunpack.c.h.b16 %v1151
  %v2713 = vunpack.c.l.b16 %v1152
  %v2714 = vunpack.c.h.b16 %v1152
  %v2715 = vunpack.c.l.b16 %v1153
  %v2716 = vunpack.c.h.b16 %v1153
  %v2717 = vunpack.c.l.b16 %v1154
  %v2718 = vunpack.c.h.b16 %v1154
  %v2719 = vunpack.c.l.b16 %v1155
  %v2720 = vunpack.c.h.b16 %v1155
  %v2721 = vunpack.c.l.b16 %v1156
  %v2722 = vunpack.c.h.b16 %v1156
  %v2723 = vunpack.c.l.b16 %v1157
  %v2724 = vunpack.c.h.b16 %v1157
  %v2725 = vunpack.c.l.b16 %v1158
  %v2726 = vunpack.c.h.b16 %v1158
  %v2727 = vunpack.c.l.b16 %v1159
  %v2728 = vunpack.c.h.b16 %v1159
  %v2729 = vunpack.c.l.b16 %v1160
  %v2730 = vunpack.c.h.b16 %v1160
  %v2731 = vunpack.c.l.b16 %v1161
  %v2732 = vunpack.c.h.b16 %v1161
  %v2733 = vunpack.c.l.b16 %v1162
  %v2734 = vunpack.c.h.b16 %v1162
  %v2735 = vunpack.c.l.b16 %v1163
  %v2736 = vunpack.c.h.b16 %v1163
  %v2737 = vunpack.c.l.b16 %v1164
  %v2738 = vunpack.c.h.b16 %v1164
  %v2739 = vunpack.c.l.b16 %v1165
  %v2740 = vunpack.c.h.b16 %v1165
  %v2741 = vunpack.c.l.b16 %v1166
  %v2742 = vunpack.c.h.b16 %v1166
  %v2743 = vunpack.c.l.b16 %v1167
  %v2744 = vunpack.c.h.b16 %v1167
  %v2745 = vunpack.c.l.b16 %v1168
  %v2746 = vunpack.c.h.b16 %v1168
  %v2747 = vpack.c.b16 %v1731, %v1723
  %v2748 = vpack.c.b16 %v1732, %v1724
  %v2749 = vpack.c.b16 %v1733, %v1725
  %v2750 = vpack.c.b16 %v1734, %v1726
  %v2751 = vpack.c.b16 %v1735, %v1727
  %v2752 = vpack.c.b16 %v1736, %v1728
  %v2753 = vpack.c.b16 %v1737, %v1729
  %v2754 = vpack.c.b16 %v1738, %v1730
  %v2755 = vpack.c.b16 %v1747, %v1739
  %v2756 = vpack.c.b16 %v1748, %v1740
  %v2757 = vpack.c.b16 %v1749, %v1741
  %v2758 = vpack.c.b16 %v1750, %v1742
  %v2759 = vpack.c.b16 %v1751, %v1743
  %v2760 = vpack.c.b16 %v1752, %v1744
  %v2761 = vpack.c.b16 %v1753, %v1745
  %v2762 = vpack.c.b16 %v1754, %v1746
  %v2763 = vpack.c.b16 %v1763, %v1755
  %v2764 = vpack.c.b16 %v1764, %v1756
  %v2765 = vpack.c.b16 %v1765, %v1757
  %v2766 = vpack.c.b16 %v1766, %v1758
  %v2767 = vpack.c.b16 %v1767, %v1759
  %v2768 = vpack.c.b16 %v1768, %v1760
  %v2769 = vpack.c.b16 %v1769, %v1761
  %v2770 = vpack.c.b16 %v1770, %v1762
  %v2771 = vpack.c.b16 %v1779, %v1771
  %v2772 = vpack.c.b16 %v1780, %v1772
  %v2773 = vpack.c.b16 %v1781, %v1773
  %v2774 = vpack.c.b16 %v1782, %v1774
  %v2775 = vpack.c.b16 %v1783, %v1775
  %v2776 = vpack.c.b16 %v1784, %v1776
  %v2777 = vpack.c.b16 %v1785, %v1777
  %v2778 = vpack.c.b16 %v1786, %v1778
  %v2779 = vpack.c.b16 %v1795, %v1787
  %v2780 = vpack.c.b16 %v1796, %v1788
  %v2781 = vpack.c.b16 %v1797, %v1789
  %v2782 = vpack.c.b16 %v1798, %v1790
  %v2783 = vpack.c.b16 %v1799, %v1791
  %v2784 = vpack.c.b16 %v1800, %v1792
  %v2785 = vpack.c.b16 %v1801, %v1793
  %v2786 = vpack.c.b16 %v1802, %v1794
  %v2787 = vpack.c.b16 %v1811, %v1803
  %v2788 = vpack.c.b16 %v1812, %v1804
  %v2789 = vpack.c.b16 %v1813, %v1805
  %v2790 = vpack.c.b16 %v1814, %v1806
  %v2791 = vpack.c.b16 %v1815, %v1807
  %v2792 = vpack.c.b16 %v1816, %v1808
  %v2793 = vpack.c.b16 %v1817, %v1809
  %v2794 = vpack.c.b16 %v1818, %v1810
  %v2795 = vpack.c.b16 %v1827, %v1819
  %v2796 = vpack.c.b16 %v1828, %v1820
  %v2797 = vpack.c.b16 %v1829, %v1821
  %v2798 = vpack.c.b16 %v1830, %v1822
  %v2799 = vpack.c.b16 %v1831, %v1823
  %v2800 = vpack.c.b16 %v1832, %v1824
  %v2801 = vpack.c.b16 %v1833, %v1825
  %v2802 = vpack.c.b16 %v1834, %v1826
  %v2803 = vpack.c.b16 %v1843, %v1835
  %v2804 = vpack.c.b16 %v1844, %v1836
  %v2805 = vpack.c.b16 %v1845, %v1837
  %v2806 = vpack.c.b16 %v1846, %v1838
  %v2807 = vpack.c.b16 %v1847, %v1839
  %v2808 = vpack.c.b16 %v1848, %v1840
  %v2809 = vpack.c.b16 %v1849, %v1841
  %v2810 = vpack.c.b16 %v1850, %v1842
  %v2811 = vpack.c.b16 %v1859, %v1851
  %v2812 = vpack.c.b16 %v1860, %v1852
  %v2813 = vpack.c.b16 %v1861, %v1853
  %v2814 = vpack.c.b16 %v1862, %v1854
  %v2815 = vpack.c.b16 %v1863, %v1855
  %v2816 = vpack.c.b16 %v1864, %v1856
  %v2817 = vpack.c.b16 %v1865, %v1857
  %v2818 = vpack.c.b16 %v1866, %v1858
  %v2819 = vpack.c.b16 %v1875, %v1867
  %v2820 = vpack.c.b16 %v1876, %v1868
  %v2821 = vpack.c.b16 %v1877, %v1869
  %v2822 = vpack.c.b16 %v1878, %v1870
  %v2823 = vpack.c.b16 %v1879, %v1871
  %v2824 = vpack.c.b16 %v1880, %v1872
  %v2825 = vpack.c.b16 %v1881, %v1873
  %v2826 = vpack.c.b16 %v1882, %v1874
  %v2827 = vpack.c.b16 %v1891, %v1883
  %v2828 = vpack.c.b16 %v1892, %v1884
  %v2829 = vpack.c.b16 %v1893, %v1885
  %v2830 = vpack.c.b16 %v1894, %v1886
  %v2831 = vpack.c.b16 %v1895, %v1887
  %v2832 = vpack.c.b16 %v1896, %v1888
  %v2833 = vpack.c.b16 %v1897, %v1889
  %v2834 = vpack.c.b16 %v1898, %v1890
  %v2835 = vpack.c.b16 %v1907, %v1899
  %v2836 = vpack.c.b16 %v1908, %v1900
  %v2837 = vpack.c.b16 %v1909, %v1901
  %v2838 = vpack.c.b16 %v1910, %v1902
  %v2839 = vpack.c.b16 %v1911, %v1903
  %v2840 = vpack.c.b16 %v1912, %v1904
  %v2841 = vpack.c.b16 %v1913, %v1905
  %v2842 = vpack.c.b16 %v1914, %v1906
  %v2843 = vpack.c.b16 %v1923, %v1915
  %v2844 = vpack.c.b16 %v1924, %v1916
  %v2845 = vpack.c.b16 %v1925, %v1917
  %v2846 = vpack.c.b16 %v1926, %v1918
  %v2847 = vpack.c.b16 %v1927, %v1919
  %v2848 = vpack.c.b16 %v1928, %v1920
  %v2849 = vpack.c.b16 %v1929, %v1921
  %v2850 = vpack.c.b16 %v1930, %v1922
  %v2851 = vpack.c.b16 %v1939, %v1931
  %v2852 = vpack.c.b16 %v1940, %v1932
  %v2853 = vpack.c.b16 %v1941, %v1933
  %v2854 = vpack.c.b16 %v1942, %v1934
  %v2855 = vpack.c.b16 %v1943, %v1935
  %v2856 = vpack.c.b16 %v1944, %v1936
  %v2857 = vpack.c.b16 %v1945, %v1937
  %v2858 = vpack.c.b16 %v1946, %v1938
  %v2859 = vpack.c.b16 %v1955, %v1947
  %v2860 = vpack.c.b16 %v1956, %v1948
  %v2861 = vpack.c.b16 %v1957, %v1949
  %v2862 = vpack.c.b16 %v1958, %v1950
  %v2863 = vpack.c.b16 %v1959, %v1951
  %v2864 = vpack.c.b16 %v1960, %v1952
  %v2865 = vpack.c.b16 %v1961, %v1953
  %v2866 = vpack.c.b16 %v1962, %v1954
  %v2867 = vpack.c.b16 %v1971, %v1963
  %v2868 = vpack.c.b16 %v1972, %v1964
  %v2869 = vpack.c.b16 %v1973, %v1965
  %v2870 = vpack.c.b16 %v1974, %v1966
  %v2871 = vpack.c.b16 %v1975, %v1967
  %v2872 = vpack.c.b16 %v1976, %v1968
  %v2873 = vpack.c.b16 %v1977, %v1969
  %v2874 = vpack.c.b16 %v1978, %v1970
  %v2875 = vpack.c.b16 %v1987, %v1979
  %v2876 = vpack.c.b16 %v1988, %v1980
  %v2877 = vpack.c.b16 %v1989, %v1981
  %v2878 = vpack.c.b16 %v1990, %v1982
  %v2879 = vpack.c.b16 %v1991, %v1983
  %v2880 = vpack.c.b16 %v1992, %v1984
  %v2881 = vpack.c.b16 %v1993, %v1985
  %v2882 = vpack.c.b16 %v1994, %v1986
  %v2883 = vpack.c.b16 %v2003, %v1995
  %v2884 = vpack.c.b16 %v2004, %v1996
  %v2885 = vpack.c.b16 %v2005, %v1997
  %v2886 = vpack.c.b16 %v2006, %v1998
  %v2887 = vpack.c.b16 %v2007, %v1999
  %v2888 = vpack.c.b16 %v2008, %v2000
  %v2889 = vpack.c.b16 %v2009, %v2001
  %v2890 = vpack.c.b16 %v2010, %v2002
  %v2891 = vpack.c.b16 %v2019, %v2011
  %v2892 = vpack.c.b16 %v2020, %v2012
  %v2893 = vpack.c.b16 %v2021, %v2013
  %v2894 = vpack.c.b16 %v2022, %v2014
  %v2895 = vpack.c.b16 %v2023, %v2015
  %v2896 = vpack.c.b16 %v2024, %v2016
  %v2897 = vpack.c.b16 %v2025, %v2017
  %v2898 = vpack.c.b16 %v2026, %v2018
  %v2899 = vpack.c.b16 %v2035, %v2027
  %v2900 = vpack.c.b16 %v2036, %v2028
  %v2901 = vpack.c.b16 %v2037, %v2029
  %v2902 = vpack.c.b16 %v2038, %v2030
  %v2903 = vpack.c.b16 %v2039, %v2031
  %v2904 = vpack.c.b16 %v2040, %v2032
  %v2905 = vpack.c.b16 %v2041, %v2033
  %v2906 = vpack.c.b16 %v2042, %v2034
  %v2907 = vpack.c.b16 %v2051, %v2043
  %v2908 = vpack.c.b16 %v2052, %v2044
  %v2909 = vpack.c.b16 %v2053, %v2045
  %v2910 = vpack.c.b16 %v2054, %v2046
  %v2911 = vpack.c.b16 %v2055, %v2047
  %v2912 = vpack.c.b16 %v2056, %v2048
  %v2913 = vpack.c.b16 %v2057, %v2049
  %v2914 = vpack.c.b16 %v2058, %v2050
  %v2915 = vpack.c.b16 %v2067, %v2059
  %v2916 = vpack.c.b16 %v2068, %v2060
  %v2917 = vpack.c.b16 %v2069, %v2061
  %v2918 = vpack.c.b16 %v2070, %v2062
  %v2919 = vpack.c.b16 %v2071, %v2063
  %v2920 = vpack.c.b16 %v2072, %v2064
  %v2921 = vpack.c.b16 %v2073, %v2065
  %v2922 = vpack.c.b16 %v2074, %v2066
  %v2923 = vpack.c.b16 %v2083, %v2075
  %v2924 = vpack.c.b16 %v2084, %v2076
  %v2925 = vpack.c.b16 %v2085, %v2077
  %v2926 = vpack.c.b16 %v2086, %v2078
  %v2927 = vpack.c.b16 %v2087, %v2079
  %v2928 = vpack.c.b16 %v2088, %v2080
  %v2929 = vpack.c.b16 %v2089, %v2081
  %v2930 = vpack.c.b16 %v2090, %v2082
  %v2931 = vpack.c.b16 %v2099, %v2091
  %v2932 = vpack.c.b16 %v2100, %v2092
  %v2933 = vpack.c.b16 %v2101, %v2093
  %v2934 = vpack.c.b16 %v2102, %v2094
  %v2935 = vpack.c.b16 %v2103, %v2095
  %v2936 = vpack.c.b16 %v2104, %v2096
  %v2937 = vpack.c.b16 %v2105, %v2097
  %v2938 = vpack.c.b16 %v2106, %v2098
  %v2939 = vpack.c.b16 %v2115, %v2107
  %v2940 = vpack.c.b16 %v2116, %v2108
  %v2941 = vpack.c.b16 %v2117, %v2109
  %v2942 = vpack.c.b16 %v2118, %v2110
  %v2943 = vpack.c.b16 %v2119, %v2111
  %v2944 = vpack.c.b16 %v2120, %v2112
  %v2945 = vpack.c.b16 %v2121, %v2113
  %v2946 = vpack.c.b16 %v2122, %v2114
  %v2947 = vpack.c.b16 %v2131, %v2123
  %v2948 = vpack.c.b16 %v2132, %v2124
  %v2949 = vpack.c.b16 %v2133, %v2125
  %v2950 = vpack.c.b16 %v2134, %v2126
  %v2951 = vpack.c.b16 %v2135, %v2127
  %v2952 = vpack.c.b16 %v2136, %v2128
  %v2953 = vpack.c.b16 %v2137, %v2129
  %v2954 = vpack.c.b16 %v2138, %v2130
  %v2955 = vpack.c.b16 %v2147, %v2139
  %v2956 = vpack.c.b16 %v2148, %v2140
  %v2957 = vpack.c.b16 %v2149, %v2141
  %v2958 = vpack.c.b16 %v2150, %v2142
  %v2959 = vpack.c.b16 %v2151, %v2143
  %v2960 = vpack.c.b16 %v2152, %v2144
  %v2961 = vpack.c.b16 %v2153, %v2145
  %v2962 = vpack.c.b16 %v2154, %v2146
  %v2963 = vpack.c.b16 %v2163, %v2155
  %v2964 = vpack.c.b16 %v2164, %v2156
  %v2965 = vpack.c.b16 %v2165, %v2157
  %v2966 = vpack.c.b16 %v2166, %v2158
  %v2967 = vpack.c.b16 %v2167, %v2159
  %v2968 = vpack.c.b16 %v2168, %v2160
  %v2969 = vpack.c.b16 %v2169, %v2161
  %v2970 = vpack.c.b16 %v2170, %v2162
  %v2971 = vpack.c.b16 %v2179, %v2171
  %v2972 = vpack.c.b16 %v2180, %v2172
  %v2973 = vpack.c.b16 %v2181, %v2173
  %v2974 = vpack.c.b16 %v2182, %v2174
  %v2975 = vpack.c.b16 %v2183, %v2175
  %v2976 = vpack.c.b16 %v2184, %v2176
  %v2977 = vpack.c.b16 %v2185, %v2177
  %v2978 = vpack.c.b16 %v2186, %v2178
  %v2979 = vpack.c.b16 %v2195, %v2187
  %v2980 = vpack.c.b16 %v2196, %v2188
  %v2981 = vpack.c.b16 %v2197, %v2189
  %v2982 = vpack.c.b16 %v2198, %v2190
  %v2983 = vpack.c.b16 %v2199, %v2191
  %v2984 = vpack.c.b16 %v2200, %v2192
  %v2985 = vpack.c.b16 %v2201, %v2193
  %v2986 = vpack.c.b16 %v2202, %v2194
  %v2987 = vpack.c.b16 %v2211, %v2203
  %v2988 = vpack.c.b16 %v2212, %v2204
  %v2989 = vpack.c.b16 %v2213, %v2205
  %v2990 = vpack.c.b16 %v2214, %v2206
  %v2991 = vpack.c.b16 %v2215, %v2207
  %v2992 = vpack.c.b16 %v2216, %v2208
  %v2993 = vpack.c.b16 %v2217, %v2209
  %v2994 = vpack.c.b16 %v2218, %v2210
  %v2995 = vpack.c.b16 %v2227, %v2219
  %v2996 = vpack.c.b16 %v2228, %v2220
  %v2997 = vpack.c.b16 %v2229, %v2221
  %v2998 = vpack.c.b16 %v2230, %v2222
  %v2999 = vpack.c.b16 %v2231, %v2223
  %v3000 = vpack.c.b16 %v2232, %v2224
  %v3001 = vpack.c.b16 %v2233, %v2225
  %v3002 = vpack.c.b16 %v2234, %v2226
  %v3003 = vpack.c.b16 %v2243, %v2235
  %v3004 = vpack.c.b16 %v2244, %v2236
  %v3005 = vpack.c.b16 %v2245, %v2237
  %v3006 = vpack.c.b16 %v2246, %v2238
  %v3007 = vpack.c.b16 %v2247, %v2239
  %v3008 = vpack.c.b16 %v2248, %v2240
  %v3009 = vpack.c.b16 %v2249, %v2241
  %v3010 = vpack.c.b16 %v2250, %v2242
  %v3011 = vpack.c.b16 %v2259, %v2251
  %v3012 = vpack.c.b16 %v2260, %v2252
  %v3013 = vpack.c.b16 %v2261, %v2253
  %v3014 = vpack.c.b16 %v2262, %v2254
  %v3015 = vpack.c.b16 %v2263, %v2255
  %v3016 = vpack.c.b16 %v2264, %v2256
  %v3017 = vpack.c.b16 %v2265, %v2257
  %v3018 = vpack.c.b16 %v2266, %v2258
  %v3019 = vpack.c.b16 %v2275, %v2267
  %v3020 = vpack.c.b16 %v2276, %v2268
  %v3021 = vpack.c.b16 %v2277, %v2269
  %v3022 = vpack.c.b16 %v2278, %v2270
  %v3023 = vpack.c.b16 %v2279, %v2271
  %v3024 = vpack.c.b16 %v2280, %v2272
  %v3025 = vpack.c.b16 %v2281, %v2273
  %v3026 = vpack.c.b16 %v2282, %v2274
  %v3027 = vpack.c.b16 %v2291, %v2283
  %v3028 = vpack.c.b16 %v2292, %v2284
  %v3029 = vpack.c.b16 %v2293, %v2285
  %v3030 = vpack.c.b16 %v2294, %v2286
  %v3031 = vpack.c.b16 %v2295, %v2287
  %v3032 = vpack.c.b16 %v2296, %v2288
  %v3033 = vpack.c.b16 %v2297, %v2289
  %v3034 = vpack.c.b16 %v2298, %v2290
  %v3035 = vpack.c.b16 %v2307, %v2299
  %v3036 = vpack.c.b16 %v2308, %v2300
  %v3037 = vpack.c.b16 %v2309, %v2301
  %v3038 = vpack.c.b16 %v2310, %v2302
  %v3039 = vpack.c.b16 %v2311, %v2303
  %v3040 = vpack.c.b16 %v2312, %v2304
  %v3041 = vpack.c.b16 %v2313, %v2305
  %v3042 = vpack.c.b16 %v2314, %v2306
  %v3043 = vpack.c.b16 %v2323, %v2315
  %v3044 = vpack.c.b16 %v2324, %v2316
  %v3045 = vpack.c.b16 %v2325, %v2317
  %v3046 = vpack.c.b16 %v2326, %v2318
  %v3047 = vpack.c.b16 %v2327, %v2319
  %v3048 = vpack.c.b16 %v2328, %v2320
  %v3049 = vpack.c.b16 %v2329, %v2321
  %v3050 = vpack.c.b16 %v2330, %v2322
  %v3051 = vpack.c.b16 %v2339, %v2331
  %v3052 = vpack.c.b16 %v2340, %v2332
  %v3053 = vpack.c.b16 %v2341, %v2333
  %v3054 = vpack.c.b16 %v2342, %v2334
  %v3055 = vpack.c.b16 %v2343, %v2335
  %v3056 = vpack.c.b16 %v2344, %v2336
  %v3057 = vpack.c.b16 %v2345, %v2337
  %v3058 = vpack.c.b16 %v2346, %v2338
  %v3059 = vpack.c.b16 %v2355, %v2347
  %v3060 = vpack.c.b16 %v2356, %v2348
  %v3061 = vpack.c.b16 %v2357, %v2349
  %v3062 = vpack.c.b16 %v2358, %v2350
  %v3063 = vpack.c.b16 %v2359, %v2351
  %v3064 = vpack.c.b16 %v2360, %v2352
  %v3065 = vpack.c.b16 %v2361, %v2353
  %v3066 = vpack.c.b16 %v2362, %v2354
  %v3067 = vpack.c.b16 %v2371, %v2363
  %v3068 = vpack.c.b16 %v2372, %v2364
  %v3069 = vpack.c.b16 %v2373, %v2365
  %v3070 = vpack.c.b16 %v2374, %v2366
  %v3071 = vpack.c.b16 %v2375, %v2367
  %v3072 = vpack.c.b16 %v2376, %v2368
  %v3073 = vpack.c.b16 %v2377, %v2369
  %v3074 = vpack.c.b16 %v2378, %v2370
  %v3075 = vpack.c.b16 %v2387, %v2379
  %v3076 = vpack.c.b16 %v2388, %v2380
  %v3077 = vpack.c.b16 %v2389, %v2381
  %v3078 = vpack.c.b16 %v2390, %v2382
  %v3079 = vpack.c.b16 %v2391, %v2383
  %v3080 = vpack.c.b16 %v2392, %v2384
  %v3081 = vpack.c.b16 %v2393, %v2385
  %v3082 = vpack.c.b16 %v2394, %v2386
  %v3083 = vpack.c.b16 %v2403, %v2395
  %v3084 = vpack.c.b16 %v2404, %v2396
  %v3085 = vpack.c.b16 %v2405, %v2397
  %v3086 = vpack.c.b16 %v2406, %v2398
  %v3087 = vpack.c.b16 %v2407, %v2399
  %v3088 = vpack.c.b16 %v2408, %v2400
  %v3089 = vpack.c.b16 %v2409, %v2401
  %v3090 = vpack.c.b16 %v2410, %v2402
  %v3091 = vpack.c.b16 %v2419, %v2411
  %v3092 = vpack.c.b16 %v2420, %v2412
  %v3093 = vpack.c.b16 %v2421, %v2413
  %v3094 = vpack.c.b16 %v2422, %v2414
  %v3095 = vpack.c.b16 %v2423, %v2415
  %v3096 = vpack.c.b16 %v2424, %v2416
  %v3097 = vpack.c.b16 %v2425, %v2417
  %v3098 = vpack.c.b16 %v2426, %v2418
  %v3099 = vpack.c.b16 %v2435, %v2427
  %v3100 = vpack.c.b16 %v2436, %v2428
  %v3101 = vpack.c.b16 %v2437, %v2429
  %v3102 = vpack.c.b16 %v2438, %v2430
  %v3103 = vpack.c.b16 %v2439, %v2431
  %v3104 = vpack.c.b16 %v2440, %v2432
  %v3105 = vpack.c.b16 %v2441, %v2433
  %v3106 = vpack.c.b16 %v2442, %v2434
  %v3107 = vpack.c.b16 %v2451, %v2443
  %v3108 = vpack.c.b16 %v2452, %v2444
  %v3109 = vpack.c.b16 %v2453, %v2445
  %v3110 = vpack.c.b16 %v2454, %v2446
  %v3111 = vpack.c.b16 %v2455, %v2447
  %v3112 = vpack.c.b16 %v2456, %v2448
  %v3113 = vpack.c.b16 %v2457, %v2449
  %v3114 = vpack.c.b16 %v2458, %v2450
  %v3115 = vpack.c.b16 %v2467, %v2459
  %v3116 = vpack.c.b16 %v2468, %v2460
  %v3117 = vpack.c.b16 %v2469, %v2461
  %v3118 = vpack.c.b16 %v2470, %v2462
  %v3119 = vpack.c.b16 %v2471, %v2463
  %v3120 = vpack.c.b16 %v2472, %v2464
  %v3121 = vpack.c.b16 %v2473, %v2465
  %v3122 = vpack.c.b16 %v2474, %v2466
  %v3123 = vpack.c.b16 %v2483, %v2475
  %v3124 = vpack.c.b16 %v2484, %v2476
  %v3125 = vpack.c.b16 %v2485, %v2477
  %v3126 = vpack.c.b16 %v2486, %v2478
  %v3127 = vpack.c.b16 %v2487, %v2479
  %v3128 = vpack.c.b16 %v2488, %v2480
  %v3129 = vpack.c.b16 %v2489, %v2481
  %v3130 = vpack.c.b16 %v2490, %v2482
  %v3131 = vpack.c.b16 %v2499, %v2491
  %v3132 = vpack.c.b16 %v2500, %v2492
  %v3133 = vpack.c.b16 %v2501, %v2493
  %v3134 = vpack.c.b16 %v2502, %v2494
  %v3135 = vpack.c.b16 %v2503, %v2495
  %v3136 = vpack.c.b16 %v2504, %v2496
  %v3137 = vpack.c.b16 %v2505, %v2497
  %v3138 = vpack.c.b16 %v2506, %v2498
  %v3139 = vpack.c.b16 %v2515, %v2507
  %v3140 = vpack.c.b16 %v2516, %v2508
  %v3141 = vpack.c.b16 %v2517, %v2509
  %v3142 = vpack.c.b16 %v2518, %v2510
  %v3143 = vpack.c.b16 %v2519, %v2511
  %v3144 = vpack.c.b16 %v2520, %v2512
  %v3145 = vpack.c.b16 %v2521, %v2513
  %v3146 = vpack.c.b16 %v2522, %v2514
  %v3147 = vpack.c.b16 %v2531, %v2523
  %v3148 = vpack.c.b16 %v2532, %v2524
  %v3149 = vpack.c.b16 %v2533, %v2525
  %v3150 = vpack.c.b16 %v2534, %v2526
  %v3151 = vpack.c.b16 %v2535, %v2527
  %v3152 = vpack.c.b16 %v2536, %v2528
  %v3153 = vpack.c.b16 %v2537, %v2529
  %v3154 = vpack.c.b16 %v2538, %v2530
  %v3155 = vpack.c.b16 %v2547, %v2539
  %v3156 = vpack.c.b16 %v2548, %v2540
  %v3157 = vpack.c.b16 %v2549, %v2541
  %v3158 = vpack.c.b16 %v2550, %v2542
  %v3159 = vpack.c.b16 %v2551, %v2543
  %v3160 = vpack.c.b16 %v2552, %v2544
  %v3161 = vpack.c.b16 %v2553, %v2545
  %v3162 = vpack.c.b16 %v2554, %v2546
  %v3163 = vpack.c.b16 %v2563, %v2555
  %v3164 = vpack.c.b16 %v2564, %v2556
  %v3165 = vpack.c.b16 %v2565, %v2557
  %v3166 = vpack.c.b16 %v2566, %v2558
  %v3167 = vpack.c.b16 %v2567, %v2559
  %v3168 = vpack.c.b16 %v2568, %v2560
  %v3169 = vpack.c.b16 %v2569, %v2561
  %v3170 = vpack.c.b16 %v2570, %v2562
  %v3171 = vpack.c.b16 %v2579, %v2571
  %v3172 = vpack.c.b16 %v2580, %v2572
  %v3173 = vpack.c.b16 %v2581, %v2573
  %v3174 = vpack.c.b16 %v2582, %v2574
  %v3175 = vpack.c.b16 %v2583, %v2575
  %v3176 = vpack.c.b16 %v2584, %v2576
  %v3177 = vpack.c.b16 %v2585, %v2577
  %v3178 = vpack.c.b16 %v2586, %v2578
  %v3179 = vpack.c.b16 %v2595, %v2587
  %v3180 = vpack.c.b16 %v2596, %v2588
  %v3181 = vpack.c.b16 %v2597, %v2589
  %v3182 = vpack.c.b16 %v2598, %v2590
  %v3183 = vpack.c.b16 %v2599, %v2591
  %v3184 = vpack.c.b16 %v2600, %v2592
  %v3185 = vpack.c.b16 %v2601, %v2593
  %v3186 = vpack.c.b16 %v2602, %v2594
  %v3187 = vpack.c.b16 %v2611, %v2603
  %v3188 = vpack.c.b16 %v2612, %v2604
  %v3189 = vpack.c.b16 %v2613, %v2605
  %v3190 = vpack.c.b16 %v2614, %v2606
  %v3191 = vpack.c.b16 %v2615, %v2607
  %v3192 = vpack.c.b16 %v2616, %v2608
  %v3193 = vpack.c.b16 %v2617, %v2609
  %v3194 = vpack.c.b16 %v2618, %v2610
  %v3195 = vpack.c.b16 %v2627, %v2619
  %v3196 = vpack.c.b16 %v2628, %v2620
  %v3197 = vpack.c.b16 %v2629, %v2621
  %v3198 = vpack.c.b16 %v2630, %v2622
  %v3199 = vpack.c.b16 %v2631, %v2623
  %v3200 = vpack.c.b16 %v2632, %v2624
  %v3201 = vpack.c.b16 %v2633, %v2625
  %v3202 = vpack.c.b16 %v2634, %v2626
  %v3203 = vpack.c.b16 %v2643, %v2635
  %v3204 = vpack.c.b16 %v2644, %v2636
  %v3205 = vpack.c.b16 %v2645, %v2637
  %v3206 = vpack.c.b16 %v2646, %v2638
  %v3207 = vpack.c.b16 %v2647, %v2639
  %v3208 = vpack.c.b16 %v2648, %v2640
  %v3209 = vpack.c.b16 %v2649, %v2641
  %v3210 = vpack.c.b16 %v2650, %v2642
  %v3211 = vpack.c.b16 %v2659, %v2651
  %v3212 = vpack.c.b16 %v2660, %v2652
  %v3213 = vpack.c.b16 %v2661, %v2653
  %v3214 = vpack.c.b16 %v2662, %v2654
  %v3215 = vpack.c.b16 %v2663, %v2655
  %v3216 = vpack.c.b16 %v2664, %v2656
  %v3217 = vpack.c.b16 %v2665, %v2657
  %v3218 = vpack.c.b16 %v2666, %v2658
  %v3219 = vpack.c.b16 %v2675, %v2667
  %v3220 = vpack.c.b16 %v2676, %v2668
  %v3221 = vpack.c.b16 %v2677, %v2669
  %v3222 = vpack.c.b16 %v2678, %v2670
  %v3223 = vpack.c.b16 %v2679, %v2671
  %v3224 = vpack.c.b16 %v2680, %v2672
  %v3225 = vpack.c.b16 %v2681, %v2673
  %v3226 = vpack.c.b16 %v2682, %v2674
  %v3227 = vpack.c.b16 %v2691, %v2683
  %v3228 = vpack.c.b16 %v2692, %v2684
  %v3229 = vpack.c.b16 %v2693, %v2685
  %v3230 = vpack.c.b16 %v2694, %v2686
  %v3231 = vpack.c.b16 %v2695, %v2687
  %v3232 = vpack.c.b16 %v2696, %v2688
  %v3233 = vpack.c.b16 %v2697, %v2689
  %v3234 = vpack.c.b16 %v2698, %v2690
  %v3235 = vpack.c.b16 %v2707, %v2699
  %v3236 = vpack.c.b16 %v2708, %v2700
  %v3237 = vpack.c.b16 %v2709, %v2701
  %v3238 = vpack.c.b16 %v2710, %v2702
  %v3239 = vpack.c.b16 %v2711, %v2703
  %v3240 = vpack.c.b16 %v2712, %v2704
  %v3241 = vpack.c.b16 %v2713, %v2705
  %v3242 = vpack.c.b16 %v2714, %v2706
  %v3243 = vpack.c.b16 %v2723, %v2715
  %v3244 = vpack.c.b16 %v2724, %v2716
  %v3245 = vpack.c.b16 %v2725, %v2717
  %v3246 = vpack.c.b16 %v2726, %v2718
  %v3247 = vpack.c.b16 %v2727, %v2719
  %v3248 = vpack.c.b16 %v2728, %v2720
  %v3249 = vpack.c.b16 %v2729, %v2721
  %v3250 = vpack.c.b16 %v2730, %v2722
  %v3251 = vpack.c.b16 %v2739, %v2731
  %v3252 = vpack.c.b16 %v2740, %v2732
  %v3253 = vpack.c.b16 %v2741, %v2733
  %v3254 = vpack.c.b16 %v2742, %v2734
  %v3255 = vpack.c.b16 %v2743, %v2735
  %v3256 = vpack.c.b16 %v2744, %v2736
  %v3257 = vpack.c.b16 %v2745, %v2737
  %v3258 = vpack.c.b16 %v2746, %v2738
  %3771 = vmatprep.subr.bf16.mxu0 %v2748
  %3772 = vmatpush1.bf16.msra.mxu0 %v2747
  %3773 = vmatprep.subr.bf16.mxu0 %v2756
  %3774 = vmatpush1.bf16.msra.mxu0 %v2755
  %3775 = vmatprep.subr.bf16.mxu0 %v2764
  %3776 = vmatpush1.bf16.msra.mxu0 %v2763
  %3777 = vmatprep.subr.bf16.mxu0 %v2772
  %3778 = vmatpush1.bf16.msra.mxu0 %v2771
  %3779 = vmatprep.subr.bf16.mxu0 %v2780
  %3780 = vmatpush1.bf16.msra.mxu0 %v2779
  %3781 = vmatprep.subr.bf16.mxu0 %v2788
  %3782 = vmatpush1.bf16.msra.mxu0 %v2787
  %3783 = vmatprep.subr.bf16.mxu0 %v2796
  %3784 = vmatpush1.bf16.msra.mxu0 %v2795
  %3785 = vmatprep.subr.bf16.mxu0 %v2804
  %3786 = vmatpush1.bf16.msra.mxu0 %v2803
  %3787 = vmatprep.subr.bf16.mxu0 %v2812
  %3788 = vmatpush1.bf16.msra.mxu0 %v2811
  %3789 = vmatprep.subr.bf16.mxu0 %v2820
  %3790 = vmatpush1.bf16.msra.mxu0 %v2819
  %3791 = vmatprep.subr.bf16.mxu0 %v2828
  %3792 = vmatpush1.bf16.msra.mxu0 %v2827
  %3793 = vmatprep.subr.bf16.mxu0 %v2836
  %3794 = vmatpush1.bf16.msra.mxu0 %v2835
  %3795 = vmatprep.subr.bf16.mxu0 %v2844
  %3796 = vmatpush1.bf16.msra.mxu0 %v2843
  %3797 = vmatprep.subr.bf16.mxu0 %v2852
  %3798 = vmatpush1.bf16.msra.mxu0 %v2851
  %3799 = vmatprep.subr.bf16.mxu0 %v2860
  %3800 = vmatpush1.bf16.msra.mxu0 %v2859
  %3801 = vmatprep.subr.bf16.mxu0 %v2868
  %3802 = vmatpush1.bf16.msra.mxu0 %v2867
  %3803 = vmatprep.mubr.bf16.mxu0 %v650
  %3804 = vmatmul.mubr.bf16.gmra.mrb[0].mxu0 %v649
  %v3805 = vpop.f32.mrb[0].mxu0
  %v3806 = vadd.f32 %v1174, %v3805
  %v3807 = vpop.f32.mrb[0].mxu0
  %v3808 = vadd.f32 %v1178, %v3807
  %v3809 = vpop.f32.mrb[0].mxu0
  %v3810 = vadd.f32 %v1174, %v3809
  %v3811 = vpop.f32.mrb[0].mxu0
  %v3812 = vadd.f32 %v1178, %v3811
  %3813 = vdwg.mxu0
  %3814 = vmatprep.subr.bf16.mxu0 %v2876
  %3815 = vmatpush1.bf16.msra.mxu0 %v2875
  %3816 = vmatprep.subr.bf16.mxu0 %v2884
  %3817 = vmatpush1.bf16.msra.mxu0 %v2883
  %3818 = vmatprep.subr.bf16.mxu0 %v2892
  %3819 = vmatpush1.bf16.msra.mxu0 %v2891
  %3820 = vmatprep.subr.bf16.mxu0 %v2900
  %3821 = vmatpush1.bf16.msra.mxu0 %v2899
  %3822 = vmatprep.subr.bf16.mxu0 %v2908
  %3823 = vmatpush1.bf16.msra.mxu0 %v2907
  %3824 = vmatprep.subr.bf16.mxu0 %v2916
  %3825 = vmatpush1.bf16.msra.mxu0 %v2915
  %3826 = vmatprep.subr.bf16.mxu0 %v2924
  %3827 = vmatpush1.bf16.msra.mxu0 %v2923
  %3828 = vmatprep.subr.bf16.mxu0 %v2932
  %3829 = vmatpush1.bf16.msra.mxu0 %v2931
  %3830 = vmatprep.subr.bf16.mxu0 %v2940
  %3831 = vmatpush1.bf16.msra.mxu0 %v2939
  %3832 = vmatprep.subr.bf16.mxu0 %v2948
  %3833 = vmatpush1.bf16.msra.mxu0 %v2947
  %3834 = vmatprep.subr.bf16.mxu0 %v2956
  %3835 = vmatpush1.bf16.msra.mxu0 %v2955
  %3836 = vmatprep.subr.bf16.mxu0 %v2964
  %3837 = vmatpush1.bf16.msra.mxu0 %v2963
  %3838 = vmatprep.subr.bf16.mxu0 %v2972
  %3839 = vmatpush1.bf16.msra.mxu0 %v2971
  %3840 = vmatprep.subr.bf16.mxu0 %v2980
  %3841 = vmatpush1.bf16.msra.mxu0 %v2979
  %3842 = vmatprep.subr.bf16.mxu0 %v2988
  %3843 = vmatpush1.bf16.msra.mxu0 %v2987
  %3844 = vmatprep.subr.bf16.mxu0 %v2996
  %3845 = vmatpush1.bf16.msra.mxu0 %v2995
  %3846 = vmatprep.mubr.bf16.mxu0 %v652
  %3847 = vmatmul.mubr.bf16.gmra.mrb[0].mxu0 %v651
  %v3848 = vpop.f32.mrb[0].mxu0
  %v3849 = vadd.f32 %v3806, %v3848
  %v3850 = vpop.f32.mrb[0].mxu0
  %v3851 = vadd.f32 %v3808, %v3850
  %v3852 = vpop.f32.mrb[0].mxu0
  %v3853 = vadd.f32 %v3810, %v3852
  %v3854 = vpop.f32.mrb[0].mxu0
  %v3855 = vadd.f32 %v3812, %v3854
  %3856 = vdwg.mxu0
  %3857 = vmatprep.subr.bf16.mxu0 %v3004
  %3858 = vmatpush1.bf16.msra.mxu0 %v3003
  %3859 = vmatprep.subr.bf16.mxu0 %v3012
  %3860 = vmatpush1.bf16.msra.mxu0 %v3011
  %3861 = vmatprep.subr.bf16.mxu0 %v3020
  %3862 = vmatpush1.bf16.msra.mxu0 %v3019
  %3863 = vmatprep.subr.bf16.mxu0 %v3028
  %3864 = vmatpush1.bf16.msra.mxu0 %v3027
  %3865 = vmatprep.subr.bf16.mxu0 %v3036
  %3866 = vmatpush1.bf16.msra.mxu0 %v3035
  %3867 = vmatprep.subr.bf16.mxu0 %v3044
  %3868 = vmatpush1.bf16.msra.mxu0 %v3043
  %3869 = vmatprep.subr.bf16.mxu0 %v3052
  %3870 = vmatpush1.bf16.msra.mxu0 %v3051
  %3871 = vmatprep.subr.bf16.mxu0 %v3060
  %3872 = vmatpush1.bf16.msra.mxu0 %v3059
  %3873 = vmatprep.subr.bf16.mxu0 %v3068
  %3874 = vmatpush1.bf16.msra.mxu0 %v3067
  %3875 = vmatprep.subr.bf16.mxu0 %v3076
  %3876 = vmatpush1.bf16.msra.mxu0 %v3075
  %3877 = vmatprep.subr.bf16.mxu0 %v3084
  %3878 = vmatpush1.bf16.msra.mxu0 %v3083
  %3879 = vmatprep.subr.bf16.mxu0 %v3092
  %3880 = vmatpush1.bf16.msra.mxu0 %v3091
  %3881 = vmatprep.subr.bf16.mxu0 %v3100
  %3882 = vmatpush1.bf16.msra.mxu0 %v3099
  %3883 = vmatprep.subr.bf16.mxu0 %v3108
  %3884 = vmatpush1.bf16.msra.mxu0 %v3107
  %3885 = vmatprep.subr.bf16.mxu0 %v3116
  %3886 = vmatpush1.bf16.msra.mxu0 %v3115
  %3887 = vmatprep.subr.bf16.mxu0 %v3124
  %3888 = vmatpush1.bf16.msra.mxu0 %v3123
  %3889 = vmatprep.mubr.bf16.mxu0 %v654
  %3890 = vmatmul.mubr.bf16.gmra.mrb[0].mxu0 %v653
  %v3891 = vpop.f32.mrb[0].mxu0
  %v3892 = vadd.f32 %v3849, %v3891
  %v3893 = vpop.f32.mrb[0].mxu0
  %v3894 = vadd.f32 %v3851, %v3893
  %v3895 = vpop.f32.mrb[0].mxu0
  %v3896 = vadd.f32 %v3853, %v3895
  %v3897 = vpop.f32.mrb[0].mxu0
  %v3898 = vadd.f32 %v3855, %v3897
  %3899 = vdwg.mxu0
  %3900 = vmatprep.subr.bf16.mxu0 %v3132
  %3901 = vmatpush1.bf16.msra.mxu0 %v3131
  %3902 = vmatprep.subr.bf16.mxu0 %v3140
  %3903 = vmatpush1.bf16.msra.mxu0 %v3139
  %3904 = vmatprep.subr.bf16.mxu0 %v3148
  %3905 = vmatpush1.bf16.msra.mxu0 %v3147
  %3906 = vmatprep.subr.bf16.mxu0 %v3156
  %3907 = vmatpush1.bf16.msra.mxu0 %v3155
  %3908 = vmatprep.subr.bf16.mxu0 %v3164
  %3909 = vmatpush1.bf16.msra.mxu0 %v3163
  %3910 = vmatprep.subr.bf16.mxu0 %v3172
  %3911 = vmatpush1.bf16.msra.mxu0 %v3171
  %3912 = vmatprep.subr.bf16.mxu0 %v3180
  %3913 = vmatpush1.bf16.msra.mxu0 %v3179
  %3914 = vmatprep.subr.bf16.mxu0 %v3188
  %3915 = vmatpush1.bf16.msra.mxu0 %v3187
  %3916 = vmatprep.subr.bf16.mxu0 %v3196
  %3917 = vmatpush1.bf16.msra.mxu0 %v3195
  %3918 = vmatprep.subr.bf16.mxu0 %v3204
  %3919 = vmatpush1.bf16.msra.mxu0 %v3203
  %3920 = vmatprep.subr.bf16.mxu0 %v3212
  %3921 = vmatpush1.bf16.msra.mxu0 %v3211
  %3922 = vmatprep.subr.bf16.mxu0 %v3220
  %3923 = vmatpush1.bf16.msra.mxu0 %v3219
  %3924 = vmatprep.subr.bf16.mxu0 %v3228
  %3925 = vmatpush1.bf16.msra.mxu0 %v3227
  %3926 = vmatprep.subr.bf16.mxu0 %v3236
  %3927 = vmatpush1.bf16.msra.mxu0 %v3235
  %3928 = vmatprep.subr.bf16.mxu0 %v3244
  %3929 = vmatpush1.bf16.msra.mxu0 %v3243
  %3930 = vmatprep.subr.bf16.mxu0 %v3252
  %3931 = vmatpush1.bf16.msra.mxu0 %v3251
  %3932 = vmatprep.mubr.bf16.mxu0 %v656
  %3933 = vmatmul.mubr.bf16.gmra.mrb[0].mxu0 %v655
  %v3934 = vpop.f32.mrb[0].mxu0
  %v3935 = vadd.f32 %v3892, %v3934
  %v3936 = vpop.f32.mrb[0].mxu0
  %v3937 = vadd.f32 %v3894, %v3936
  %v3938 = vpop.f32.mrb[0].mxu0
  %v3939 = vadd.f32 %v3896, %v3938
  %v3940 = vpop.f32.mrb[0].mxu0
  %v3941 = vadd.f32 %v3898, %v3940
  %3942 = vdwg.mxu0
  %3943 = vmatprep.subr.bf16.mxu0 %v2750
  %3944 = vmatpush1.bf16.msra.mxu0 %v2749
  %3945 = vmatprep.subr.bf16.mxu0 %v2758
  %3946 = vmatpush1.bf16.msra.mxu0 %v2757
  %3947 = vmatprep.subr.bf16.mxu0 %v2766
  %3948 = vmatpush1.bf16.msra.mxu0 %v2765
  %3949 = vmatprep.subr.bf16.mxu0 %v2774
  %3950 = vmatpush1.bf16.msra.mxu0 %v2773
  %3951 = vmatprep.subr.bf16.mxu0 %v2782
  %3952 = vmatpush1.bf16.msra.mxu0 %v2781
  %3953 = vmatprep.subr.bf16.mxu0 %v2790
  %3954 = vmatpush1.bf16.msra.mxu0 %v2789
  %3955 = vmatprep.subr.bf16.mxu0 %v2798
  %3956 = vmatpush1.bf16.msra.mxu0 %v2797
  %3957 = vmatprep.subr.bf16.mxu0 %v2806
  %3958 = vmatpush1.bf16.msra.mxu0 %v2805
  %3959 = vmatprep.subr.bf16.mxu0 %v2814
  %3960 = vmatpush1.bf16.msra.mxu0 %v2813
  %3961 = vmatprep.subr.bf16.mxu0 %v2822
  %3962 = vmatpush1.bf16.msra.mxu0 %v2821
  %3963 = vmatprep.subr.bf16.mxu0 %v2830
  %3964 = vmatpush1.bf16.msra.mxu0 %v2829
  %3965 = vmatprep.subr.bf16.mxu0 %v2838
  %3966 = vmatpush1.bf16.msra.mxu0 %v2837
  %3967 = vmatprep.subr.bf16.mxu0 %v2846
  %3968 = vmatpush1.bf16.msra.mxu0 %v2845
  %3969 = vmatprep.subr.bf16.mxu0 %v2854
  %3970 = vmatpush1.bf16.msra.mxu0 %v2853
  %3971 = vmatprep.subr.bf16.mxu0 %v2862
  %3972 = vmatpush1.bf16.msra.mxu0 %v2861
  %3973 = vmatprep.subr.bf16.mxu0 %v2870
  %3974 = vmatpush1.bf16.msra.mxu0 %v2869
  %3975 = vmatprep.mubr.bf16.mxu0 %v650
  %3976 = vmatmul.mubr.bf16.gmra.mrb[0].mxu0 %v649
  %v3977 = vpop.f32.mrb[0].mxu0
  %v3978 = vadd.f32 %v1182, %v3977
  %v3979 = vpop.f32.mrb[0].mxu0
  %v3980 = vadd.f32 %v1186, %v3979
  %v3981 = vpop.f32.mrb[0].mxu0
  %v3982 = vadd.f32 %v1182, %v3981
  %v3983 = vpop.f32.mrb[0].mxu0
  %v3984 = vadd.f32 %v1186, %v3983
  %3985 = vdwg.mxu0
  %3986 = vmatprep.subr.bf16.mxu0 %v2878
  %3987 = vmatpush1.bf16.msra.mxu0 %v2877
  %3988 = vmatprep.subr.bf16.mxu0 %v2886
  %3989 = vmatpush1.bf16.msra.mxu0 %v2885
  %3990 = vmatprep.subr.bf16.mxu0 %v2894
  %3991 = vmatpush1.bf16.msra.mxu0 %v2893
  %3992 = vmatprep.subr.bf16.mxu0 %v2902
  %3993 = vmatpush1.bf16.msra.mxu0 %v2901
  %3994 = vmatprep.subr.bf16.mxu0 %v2910
  %3995 = vmatpush1.bf16.msra.mxu0 %v2909
  %3996 = vmatprep.subr.bf16.mxu0 %v2918
  %3997 = vmatpush1.bf16.msra.mxu0 %v2917
  %3998 = vmatprep.subr.bf16.mxu0 %v2926
  %3999 = vmatpush1.bf16.msra.mxu0 %v2925
  %4000 = vmatprep.subr.bf16.mxu0 %v2934
  %4001 = vmatpush1.bf16.msra.mxu0 %v2933
  %4002 = vmatprep.subr.bf16.mxu0 %v2942
  %4003 = vmatpush1.bf16.msra.mxu0 %v2941
  %4004 = vmatprep.subr.bf16.mxu0 %v2950
  %4005 = vmatpush1.bf16.msra.mxu0 %v2949
  %4006 = vmatprep.subr.bf16.mxu0 %v2958
  %4007 = vmatpush1.bf16.msra.mxu0 %v2957
  %4008 = vmatprep.subr.bf16.mxu0 %v2966
  %4009 = vmatpush1.bf16.msra.mxu0 %v2965
  %4010 = vmatprep.subr.bf16.mxu0 %v2974
  %4011 = vmatpush1.bf16.msra.mxu0 %v2973
  %4012 = vmatprep.subr.bf16.mxu0 %v2982
  %4013 = vmatpush1.bf16.msra.mxu0 %v2981
  %4014 = vmatprep.subr.bf16.mxu0 %v2990
  %4015 = vmatpush1.bf16.msra.mxu0 %v2989
  %4016 = vmatprep.subr.bf16.mxu0 %v2998
  %4017 = vmatpush1.bf16.msra.mxu0 %v2997
  %4018 = vmatprep.mubr.bf16.mxu0 %v652
  %4019 = vmatmul.mubr.bf16.gmra.mrb[0].mxu0 %v651
  %v4020 = vpop.f32.mrb[0].mxu0
  %v4021 = vadd.f32 %v3978, %v4020
  %v4022 = vpop.f32.mrb[0].mxu0
  %v4023 = vadd.f32 %v3980, %v4022
  %v4024 = vpop.f32.mrb[0].mxu0
  %v4025 = vadd.f32 %v3982, %v4024
  %v4026 = vpop.f32.mrb[0].mxu0
  %v4027 = vadd.f32 %v3984, %v4026
  %4028 = vdwg.mxu0
  %4029 = vmatprep.subr.bf16.mxu0 %v3006
  %4030 = vmatpush1.bf16.msra.mxu0 %v3005
  %4031 = vmatprep.subr.bf16.mxu0 %v3014
  %4032 = vmatpush1.bf16.msra.mxu0 %v3013
  %4033 = vmatprep.subr.bf16.mxu0 %v3022
  %4034 = vmatpush1.bf16.msra.mxu0 %v3021
  %4035 = vmatprep.subr.bf16.mxu0 %v3030
  %4036 = vmatpush1.bf16.msra.mxu0 %v3029
  %4037 = vmatprep.subr.bf16.mxu0 %v3038
  %4038 = vmatpush1.bf16.msra.mxu0 %v3037
  %4039 = vmatprep.subr.bf16.mxu0 %v3046
  %4040 = vmatpush1.bf16.msra.mxu0 %v3045
  %4041 = vmatprep.subr.bf16.mxu0 %v3054
  %4042 = vmatpush1.bf16.msra.mxu0 %v3053
  %4043 = vmatprep.subr.bf16.mxu0 %v3062
  %4044 = vmatpush1.bf16.msra.mxu0 %v3061
  %4045 = vmatprep.subr.bf16.mxu0 %v3070
  %4046 = vmatpush1.bf16.msra.mxu0 %v3069
  %4047 = vmatprep.subr.bf16.mxu0 %v3078
  %4048 = vmatpush1.bf16.msra.mxu0 %v3077
  %4049 = vmatprep.subr.bf16.mxu0 %v3086
  %4050 = vmatpush1.bf16.msra.mxu0 %v3085
  %4051 = vmatprep.subr.bf16.mxu0 %v3094
  %4052 = vmatpush1.bf16.msra.mxu0 %v3093
  %4053 = vmatprep.subr.bf16.mxu0 %v3102
  %4054 = vmatpush1.bf16.msra.mxu0 %v3101
  %4055 = vmatprep.subr.bf16.mxu0 %v3110
  %4056 = vmatpush1.bf16.msra.mxu0 %v3109
  %4057 = vmatprep.subr.bf16.mxu0 %v3118
  %4058 = vmatpush1.bf16.msra.mxu0 %v3117
  %4059 = vmatprep.subr.bf16.mxu0 %v3126
  %4060 = vmatpush1.bf16.msra.mxu0 %v3125
  %4061 = vmatprep.mubr.bf16.mxu0 %v654
  %4062 = vmatmul.mubr.bf16.gmra.mrb[0].mxu0 %v653
  %v4063 = vpop.f32.mrb[0].mxu0
  %v4064 = vadd.f32 %v4021, %v4063
  %v4065 = vpop.f32.mrb[0].mxu0
  %v4066 = vadd.f32 %v4023, %v4065
  %v4067 = vpop.f32.mrb[0].mxu0
  %v4068 = vadd.f32 %v4025, %v4067
  %v4069 = vpop.f32.mrb[0].mxu0
  %v4070 = vadd.f32 %v4027, %v4069
  %4071 = vdwg.mxu0
  %4072 = vmatprep.subr.bf16.mxu0 %v3134
  %4073 = vmatpush1.bf16.msra.mxu0 %v3133
  %4074 = vmatprep.subr.bf16.mxu0 %v3142
  %4075 = vmatpush1.bf16.msra.mxu0 %v3141
  %4076 = vmatprep.subr.bf16.mxu0 %v3150
  %4077 = vmatpush1.bf16.msra.mxu0 %v3149
  %4078 = vmatprep.subr.bf16.mxu0 %v3158
  %4079 = vmatpush1.bf16.msra.mxu0 %v3157
  %4080 = vmatprep.subr.bf16.mxu0 %v3166
  %4081 = vmatpush1.bf16.msra.mxu0 %v3165
  %4082 = vmatprep.subr.bf16.mxu0 %v3174
  %4083 = vmatpush1.bf16.msra.mxu0 %v3173
  %4084 = vmatprep.subr.bf16.mxu0 %v3182
  %4085 = vmatpush1.bf16.msra.mxu0 %v3181
  %4086 = vmatprep.subr.bf16.mxu0 %v3190
  %4087 = vmatpush1.bf16.msra.mxu0 %v3189
  %4088 = vmatprep.subr.bf16.mxu0 %v3198
  %4089 = vmatpush1.bf16.msra.mxu0 %v3197
  %4090 = vmatprep.subr.bf16.mxu0 %v3206
  %4091 = vmatpush1.bf16.msra.mxu0 %v3205
  %4092 = vmatprep.subr.bf16.mxu0 %v3214
  %4093 = vmatpush1.bf16.msra.mxu0 %v3213
  %4094 = vmatprep.subr.bf16.mxu0 %v3222
  %4095 = vmatpush1.bf16.msra.mxu0 %v3221
  %4096 = vmatprep.subr.bf16.mxu0 %v3230
  %4097 = vmatpush1.bf16.msra.mxu0 %v3229
  %4098 = vmatprep.subr.bf16.mxu0 %v3238
  %4099 = vmatpush1.bf16.msra.mxu0 %v3237
  %4100 = vmatprep.subr.bf16.mxu0 %v3246
  %4101 = vmatpush1.bf16.msra.mxu0 %v3245
  %4102 = vmatprep.subr.bf16.mxu0 %v3254
  %4103 = vmatpush1.bf16.msra.mxu0 %v3253
  %4104 = vmatprep.mubr.bf16.mxu0 %v656
  %4105 = vmatmul.mubr.bf16.gmra.mrb[0].mxu0 %v655
  %v4106 = vpop.f32.mrb[0].mxu0
  %v4107 = vadd.f32 %v4064, %v4106
  %v4108 = vpop.f32.mrb[0].mxu0
  %v4109 = vadd.f32 %v4066, %v4108
  %v4110 = vpop.f32.mrb[0].mxu0
  %v4111 = vadd.f32 %v4068, %v4110
  %v4112 = vpop.f32.mrb[0].mxu0
  %v4113 = vadd.f32 %v4070, %v4112
  %4114 = vdwg.mxu0
  %4115 = vmatprep.subr.bf16.mxu0 %v2752
  %4116 = vmatpush1.bf16.msra.mxu0 %v2751
  %4117 = vmatprep.subr.bf16.mxu0 %v2760
  %4118 = vmatpush1.bf16.msra.mxu0 %v2759
  %4119 = vmatprep.subr.bf16.mxu0 %v2768
  %4120 = vmatpush1.bf16.msra.mxu0 %v2767
  %4121 = vmatprep.subr.bf16.mxu0 %v2776
  %4122 = vmatpush1.bf16.msra.mxu0 %v2775
  %4123 = vmatprep.subr.bf16.mxu0 %v2784
  %4124 = vmatpush1.bf16.msra.mxu0 %v2783
  %4125 = vmatprep.subr.bf16.mxu0 %v2792
  %4126 = vmatpush1.bf16.msra.mxu0 %v2791
  %4127 = vmatprep.subr.bf16.mxu0 %v2800
  %4128 = vmatpush1.bf16.msra.mxu0 %v2799
  %4129 = vmatprep.subr.bf16.mxu0 %v2808
  %4130 = vmatpush1.bf16.msra.mxu0 %v2807
  %4131 = vmatprep.subr.bf16.mxu0 %v2816
  %4132 = vmatpush1.bf16.msra.mxu0 %v2815
  %4133 = vmatprep.subr.bf16.mxu0 %v2824
  %4134 = vmatpush1.bf16.msra.mxu0 %v2823
  %4135 = vmatprep.subr.bf16.mxu0 %v2832
  %4136 = vmatpush1.bf16.msra.mxu0 %v2831
  %4137 = vmatprep.subr.bf16.mxu0 %v2840
  %4138 = vmatpush1.bf16.msra.mxu0 %v2839
  %4139 = vmatprep.subr.bf16.mxu0 %v2848
  %4140 = vmatpush1.bf16.msra.mxu0 %v2847
  %4141 = vmatprep.subr.bf16.mxu0 %v2856
  %4142 = vmatpush1.bf16.msra.mxu0 %v2855
  %4143 = vmatprep.subr.bf16.mxu0 %v2864
  %4144 = vmatpush1.bf16.msra.mxu0 %v2863
  %4145 = vmatprep.subr.bf16.mxu0 %v2872
  %4146 = vmatpush1.bf16.msra.mxu0 %v2871
  %4147 = vmatprep.mubr.bf16.mxu0 %v650
  %4148 = vmatmul.mubr.bf16.gmra.mrb[0].mxu0 %v649
  %v4149 = vpop.f32.mrb[0].mxu0
  %v4150 = vadd.f32 %v1190, %v4149
  %v4151 = vpop.f32.mrb[0].mxu0
  %v4152 = vadd.f32 %v1194, %v4151
  %v4153 = vpop.f32.mrb[0].mxu0
  %v4154 = vadd.f32 %v1190, %v4153
  %v4155 = vpop.f32.mrb[0].mxu0
  %v4156 = vadd.f32 %v1194, %v4155
  %4157 = vdwg.mxu0
  %4158 = vmatprep.subr.bf16.mxu0 %v2880
  %4159 = vmatpush1.bf16.msra.mxu0 %v2879
  %4160 = vmatprep.subr.bf16.mxu0 %v2888
  %4161 = vmatpush1.bf16.msra.mxu0 %v2887
  %4162 = vmatprep.subr.bf16.mxu0 %v2896
  %4163 = vmatpush1.bf16.msra.mxu0 %v2895
  %4164 = vmatprep.subr.bf16.mxu0 %v2904
  %4165 = vmatpush1.bf16.msra.mxu0 %v2903
  %4166 = vmatprep.subr.bf16.mxu0 %v2912
  %4167 = vmatpush1.bf16.msra.mxu0 %v2911
  %4168 = vmatprep.subr.bf16.mxu0 %v2920
  %4169 = vmatpush1.bf16.msra.mxu0 %v2919
  %4170 = vmatprep.subr.bf16.mxu0 %v2928
  %4171 = vmatpush1.bf16.msra.mxu0 %v2927
  %4172 = vmatprep.subr.bf16.mxu0 %v2936
  %4173 = vmatpush1.bf16.msra.mxu0 %v2935
  %4174 = vmatprep.subr.bf16.mxu0 %v2944
  %4175 = vmatpush1.bf16.msra.mxu0 %v2943
  %4176 = vmatprep.subr.bf16.mxu0 %v2952
  %4177 = vmatpush1.bf16.msra.mxu0 %v2951
  %4178 = vmatprep.subr.bf16.mxu0 %v2960
  %4179 = vmatpush1.bf16.msra.mxu0 %v2959
  %4180 = vmatprep.subr.bf16.mxu0 %v2968
  %4181 = vmatpush1.bf16.msra.mxu0 %v2967
  %4182 = vmatprep.subr.bf16.mxu0 %v2976
  %4183 = vmatpush1.bf16.msra.mxu0 %v2975
  %4184 = vmatprep.subr.bf16.mxu0 %v2984
  %4185 = vmatpush1.bf16.msra.mxu0 %v2983
  %4186 = vmatprep.subr.bf16.mxu0 %v2992
  %4187 = vmatpush1.bf16.msra.mxu0 %v2991
  %4188 = vmatprep.subr.bf16.mxu0 %v3000
  %4189 = vmatpush1.bf16.msra.mxu0 %v2999
  %4190 = vmatprep.mubr.bf16.mxu0 %v652
  %4191 = vmatmul.mubr.bf16.gmra.mrb[0].mxu0 %v651
  %v4192 = vpop.f32.mrb[0].mxu0
  %v4193 = vadd.f32 %v4150, %v4192
  %v4194 = vpop.f32.mrb[0].mxu0
  %v4195 = vadd.f32 %v4152, %v4194
  %v4196 = vpop.f32.mrb[0].mxu0
  %v4197 = vadd.f32 %v4154, %v4196
  %v4198 = vpop.f32.mrb[0].mxu0
  %v4199 = vadd.f32 %v4156, %v4198
  %4200 = vdwg.mxu0
  %4201 = vmatprep.subr.bf16.mxu0 %v3008
  %4202 = vmatpush1.bf16.msra.mxu0 %v3007
  %4203 = vmatprep.subr.bf16.mxu0 %v3016
  %4204 = vmatpush1.bf16.msra.mxu0 %v3015
  %4205 = vmatprep.subr.bf16.mxu0 %v3024
  %4206 = vmatpush1.bf16.msra.mxu0 %v3023
  %4207 = vmatprep.subr.bf16.mxu0 %v3032
  %4208 = vmatpush1.bf16.msra.mxu0 %v3031
  %4209 = vmatprep.subr.bf16.mxu0 %v3040
  %4210 = vmatpush1.bf16.msra.mxu0 %v3039
  %4211 = vmatprep.subr.bf16.mxu0 %v3048
  %4212 = vmatpush1.bf16.msra.mxu0 %v3047
  %4213 = vmatprep.subr.bf16.mxu0 %v3056
  %4214 = vmatpush1.bf16.msra.mxu0 %v3055
  %4215 = vmatprep.subr.bf16.mxu0 %v3064
  %4216 = vmatpush1.bf16.msra.mxu0 %v3063
  %4217 = vmatprep.subr.bf16.mxu0 %v3072
  %4218 = vmatpush1.bf16.msra.mxu0 %v3071
  %4219 = vmatprep.subr.bf16.mxu0 %v3080
  %4220 = vmatpush1.bf16.msra.mxu0 %v3079
  %4221 = vmatprep.subr.bf16.mxu0 %v3088
  %4222 = vmatpush1.bf16.msra.mxu0 %v3087
  %4223 = vmatprep.subr.bf16.mxu0 %v3096
  %4224 = vmatpush1.bf16.msra.mxu0 %v3095
  %4225 = vmatprep.subr.bf16.mxu0 %v3104
  %4226 = vmatpush1.bf16.msra.mxu0 %v3103
  %4227 = vmatprep.subr.bf16.mxu0 %v3112
  %4228 = vmatpush1.bf16.msra.mxu0 %v3111
  %4229 = vmatprep.subr.bf16.mxu0 %v3120
  %4230 = vmatpush1.bf16.msra.mxu0 %v3119
  %4231 = vmatprep.subr.bf16.mxu0 %v3128
  %4232 = vmatpush1.bf16.msra.mxu0 %v3127
  %4233 = vmatprep.mubr.bf16.mxu0 %v654
  %4234 = vmatmul.mubr.bf16.gmra.mrb[0].mxu0 %v653
  %v4235 = vpop.f32.mrb[0].mxu0
  %v4236 = vadd.f32 %v4193, %v4235
  %v4237 = vpop.f32.mrb[0].mxu0
  %v4238 = vadd.f32 %v4195, %v4237
  %v4239 = vpop.f32.mrb[0].mxu0
  %v4240 = vadd.f32 %v4197, %v4239
  %v4241 = vpop.f32.mrb[0].mxu0
  %v4242 = vadd.f32 %v4199, %v4241
  %4243 = vdwg.mxu0
  %4244 = vmatprep.subr.bf16.mxu0 %v3136
  %4245 = vmatpush1.bf16.msra.mxu0 %v3135
  %4246 = vmatprep.subr.bf16.mxu0 %v3144
  %4247 = vmatpush1.bf16.msra.mxu0 %v3143
  %4248 = vmatprep.subr.bf16.mxu0 %v3152
  %4249 = vmatpush1.bf16.msra.mxu0 %v3151
  %4250 = vmatprep.subr.bf16.mxu0 %v3160
  %4251 = vmatpush1.bf16.msra.mxu0 %v3159
  %4252 = vmatprep.subr.bf16.mxu0 %v3168
  %4253 = vmatpush1.bf16.msra.mxu0 %v3167
  %4254 = vmatprep.subr.bf16.mxu0 %v3176
  %4255 = vmatpush1.bf16.msra.mxu0 %v3175
  %4256 = vmatprep.subr.bf16.mxu0 %v3184
  %4257 = vmatpush1.bf16.msra.mxu0 %v3183
  %4258 = vmatprep.subr.bf16.mxu0 %v3192
  %4259 = vmatpush1.bf16.msra.mxu0 %v3191
  %4260 = vmatprep.subr.bf16.mxu0 %v3200
  %4261 = vmatpush1.bf16.msra.mxu0 %v3199
  %4262 = vmatprep.subr.bf16.mxu0 %v3208
  %4263 = vmatpush1.bf16.msra.mxu0 %v3207
  %4264 = vmatprep.subr.bf16.mxu0 %v3216
  %4265 = vmatpush1.bf16.msra.mxu0 %v3215
  %4266 = vmatprep.subr.bf16.mxu0 %v3224
  %4267 = vmatpush1.bf16.msra.mxu0 %v3223
  %4268 = vmatprep.subr.bf16.mxu0 %v3232
  %4269 = vmatpush1.bf16.msra.mxu0 %v3231
  %4270 = vmatprep.subr.bf16.mxu0 %v3240
  %4271 = vmatpush1.bf16.msra.mxu0 %v3239
  %4272 = vmatprep.subr.bf16.mxu0 %v3248
  %4273 = vmatpush1.bf16.msra.mxu0 %v3247
  %4274 = vmatprep.subr.bf16.mxu0 %v3256
  %4275 = vmatpush1.bf16.msra.mxu0 %v3255
  %4276 = vmatprep.mubr.bf16.mxu0 %v656
  %4277 = vmatmul.mubr.bf16.gmra.mrb[0].mxu0 %v655
  %v4278 = vpop.f32.mrb[0].mxu0
  %v4279 = vadd.f32 %v4236, %v4278
  %v4280 = vpop.f32.mrb[0].mxu0
  %v4281 = vadd.f32 %v4238, %v4280
  %v4282 = vpop.f32.mrb[0].mxu0
  %v4283 = vadd.f32 %v4240, %v4282
  %v4284 = vpop.f32.mrb[0].mxu0
  %v4285 = vadd.f32 %v4242, %v4284
  %4286 = vdwg.mxu0
  %4287 = vmatprep.subr.bf16.mxu0 %v2754
  %4288 = vmatpush1.bf16.msra.mxu0 %v2753
  %4289 = vmatprep.subr.bf16.mxu0 %v2762
  %4290 = vmatpush1.bf16.msra.mxu0 %v2761
  %4291 = vmatprep.subr.bf16.mxu0 %v2770
  %4292 = vmatpush1.bf16.msra.mxu0 %v2769
  %4293 = vmatprep.subr.bf16.mxu0 %v2778
  %4294 = vmatpush1.bf16.msra.mxu0 %v2777
  %4295 = vmatprep.subr.bf16.mxu0 %v2786
  %4296 = vmatpush1.bf16.msra.mxu0 %v2785
  %4297 = vmatprep.subr.bf16.mxu0 %v2794
  %4298 = vmatpush1.bf16.msra.mxu0 %v2793
  %4299 = vmatprep.subr.bf16.mxu0 %v2802
  %4300 = vmatpush1.bf16.msra.mxu0 %v2801
  %4301 = vmatprep.subr.bf16.mxu0 %v2810
  %4302 = vmatpush1.bf16.msra.mxu0 %v2809
  %4303 = vmatprep.subr.bf16.mxu0 %v2818
  %4304 = vmatpush1.bf16.msra.mxu0 %v2817
  %4305 = vmatprep.subr.bf16.mxu0 %v2826
  %4306 = vmatpush1.bf16.msra.mxu0 %v2825
  %4307 = vmatprep.subr.bf16.mxu0 %v2834
  %4308 = vmatpush1.bf16.msra.mxu0 %v2833
  %4309 = vmatprep.subr.bf16.mxu0 %v2842
  %4310 = vmatpush1.bf16.msra.mxu0 %v2841
  %4311 = vmatprep.subr.bf16.mxu0 %v2850
  %4312 = vmatpush1.bf16.msra.mxu0 %v2849
  %4313 = vmatprep.subr.bf16.mxu0 %v2858
  %4314 = vmatpush1.bf16.msra.mxu0 %v2857
  %4315 = vmatprep.subr.bf16.mxu0 %v2866
  %4316 = vmatpush1.bf16.msra.mxu0 %v2865
  %4317 = vmatprep.subr.bf16.mxu0 %v2874
  %4318 = vmatpush1.bf16.msra.mxu0 %v2873
  %4319 = vmatprep.mubr.bf16.mxu0 %v650
  %4320 = vmatmul.mubr.bf16.gmra.mrb[0].mxu0 %v649
  %v4321 = vpop.f32.mrb[0].mxu0
  %v4322 = vadd.f32 %v1198, %v4321
  %v4323 = vpop.f32.mrb[0].mxu0
  %v4324 = vadd.f32 %v1202, %v4323
  %v4325 = vpop.f32.mrb[0].mxu0
  %v4326 = vadd.f32 %v1198, %v4325
  %v4327 = vpop.f32.mrb[0].mxu0
  %v4328 = vadd.f32 %v1202, %v4327
  %4329 = vdwg.mxu0
  %4330 = vmatprep.subr.bf16.mxu0 %v2882
  %4331 = vmatpush1.bf16.msra.mxu0 %v2881
  %4332 = vmatprep.subr.bf16.mxu0 %v2890
  %4333 = vmatpush1.bf16.msra.mxu0 %v2889
  %4334 = vmatprep.subr.bf16.mxu0 %v2898
  %4335 = vmatpush1.bf16.msra.mxu0 %v2897
  %4336 = vmatprep.subr.bf16.mxu0 %v2906
  %4337 = vmatpush1.bf16.msra.mxu0 %v2905
  %4338 = vmatprep.subr.bf16.mxu0 %v2914
  %4339 = vmatpush1.bf16.msra.mxu0 %v2913
  %4340 = vmatprep.subr.bf16.mxu0 %v2922
  %4341 = vmatpush1.bf16.msra.mxu0 %v2921
  %4342 = vmatprep.subr.bf16.mxu0 %v2930
  %4343 = vmatpush1.bf16.msra.mxu0 %v2929
  %4344 = vmatprep.subr.bf16.mxu0 %v2938
  %4345 = vmatpush1.bf16.msra.mxu0 %v2937
  %4346 = vmatprep.subr.bf16.mxu0 %v2946
  %4347 = vmatpush1.bf16.msra.mxu0 %v2945
  %4348 = vmatprep.subr.bf16.mxu0 %v2954
  %4349 = vmatpush1.bf16.msra.mxu0 %v2953
  %4350 = vmatprep.subr.bf16.mxu0 %v2962
  %4351 = vmatpush1.bf16.msra.mxu0 %v2961
  %4352 = vmatprep.subr.bf16.mxu0 %v2970
  %4353 = vmatpush1.bf16.msra.mxu0 %v2969
  %4354 = vmatprep.subr.bf16.mxu0 %v2978
  %4355 = vmatpush1.bf16.msra.mxu0 %v2977
  %4356 = vmatprep.subr.bf16.mxu0 %v2986
  %4357 = vmatpush1.bf16.msra.mxu0 %v2985
  %4358 = vmatprep.subr.bf16.mxu0 %v2994
  %4359 = vmatpush1.bf16.msra.mxu0 %v2993
  %4360 = vmatprep.subr.bf16.mxu0 %v3002
  %4361 = vmatpush1.bf16.msra.mxu0 %v3001
  %4362 = vmatprep.mubr.bf16.mxu0 %v652
  %4363 = vmatmul.mubr.bf16.gmra.mrb[0].mxu0 %v651
  %v4364 = vpop.f32.mrb[0].mxu0
  %v4365 = vadd.f32 %v4322, %v4364
  %v4366 = vpop.f32.mrb[0].mxu0
  %v4367 = vadd.f32 %v4324, %v4366
  %v4368 = vpop.f32.mrb[0].mxu0
  %v4369 = vadd.f32 %v4326, %v4368
  %v4370 = vpop.f32.mrb[0].mxu0
  %v4371 = vadd.f32 %v4328, %v4370
  %4372 = vdwg.mxu0
  %4373 = vmatprep.subr.bf16.mxu0 %v3010
  %4374 = vmatpush1.bf16.msra.mxu0 %v3009
  %4375 = vmatprep.subr.bf16.mxu0 %v3018
  %4376 = vmatpush1.bf16.msra.mxu0 %v3017
  %4377 = vmatprep.subr.bf16.mxu0 %v3026
  %4378 = vmatpush1.bf16.msra.mxu0 %v3025
  %4379 = vmatprep.subr.bf16.mxu0 %v3034
  %4380 = vmatpush1.bf16.msra.mxu0 %v3033
  %4381 = vmatprep.subr.bf16.mxu0 %v3042
  %4382 = vmatpush1.bf16.msra.mxu0 %v3041
  %4383 = vmatprep.subr.bf16.mxu0 %v3050
  %4384 = vmatpush1.bf16.msra.mxu0 %v3049
  %4385 = vmatprep.subr.bf16.mxu0 %v3058
  %4386 = vmatpush1.bf16.msra.mxu0 %v3057
  %4387 = vmatprep.subr.bf16.mxu0 %v3066
  %4388 = vmatpush1.bf16.msra.mxu0 %v3065
  %4389 = vmatprep.subr.bf16.mxu0 %v3074
  %4390 = vmatpush1.bf16.msra.mxu0 %v3073
  %4391 = vmatprep.subr.bf16.mxu0 %v3082
  %4392 = vmatpush1.bf16.msra.mxu0 %v3081
  %4393 = vmatprep.subr.bf16.mxu0 %v3090
  %4394 = vmatpush1.bf16.msra.mxu0 %v3089
  %4395 = vmatprep.subr.bf16.mxu0 %v3098
  %4396 = vmatpush1.bf16.msra.mxu0 %v3097
  %4397 = vmatprep.subr.bf16.mxu0 %v3106
  %4398 = vmatpush1.bf16.msra.mxu0 %v3105
  %4399 = vmatprep.subr.bf16.mxu0 %v3114
  %4400 = vmatpush1.bf16.msra.mxu0 %v3113
  %4401 = vmatprep.subr.bf16.mxu0 %v3122
  %4402 = vmatpush1.bf16.msra.mxu0 %v3121
  %4403 = vmatprep.subr.bf16.mxu0 %v3130
  %4404 = vmatpush1.bf16.msra.mxu0 %v3129
  %4405 = vmatprep.mubr.bf16.mxu0 %v654
  %4406 = vmatmul.mubr.bf16.gmra.mrb[0].mxu0 %v653
  %v4407 = vpop.f32.mrb[0].mxu0
  %v4408 = vadd.f32 %v4365, %v4407
  %v4409 = vpop.f32.mrb[0].mxu0
  %v4410 = vadd.f32 %v4367, %v4409
  %v4411 = vpop.f32.mrb[0].mxu0
  %v4412 = vadd.f32 %v4369, %v4411
  %v4413 = vpop.f32.mrb[0].mxu0
  %v4414 = vadd.f32 %v4371, %v4413
  %4415 = vdwg.mxu0
  %4416 = vmatprep.subr.bf16.mxu0 %v3138
  %4417 = vmatpush1.bf16.msra.mxu0 %v3137
  %4418 = vmatprep.subr.bf16.mxu0 %v3146
  %4419 = vmatpush1.bf16.msra.mxu0 %v3145
  %4420 = vmatprep.subr.bf16.mxu0 %v3154
  %4421 = vmatpush1.bf16.msra.mxu0 %v3153
  %4422 = vmatprep.subr.bf16.mxu0 %v3162
  %4423 = vmatpush1.bf16.msra.mxu0 %v3161
  %4424 = vmatprep.subr.bf16.mxu0 %v3170
  %4425 = vmatpush1.bf16.msra.mxu0 %v3169
  %4426 = vmatprep.subr.bf16.mxu0 %v3178
  %4427 = vmatpush1.bf16.msra.mxu0 %v3177
  %4428 = vmatprep.subr.bf16.mxu0 %v3186
  %4429 = vmatpush1.bf16.msra.mxu0 %v3185
  %4430 = vmatprep.subr.bf16.mxu0 %v3194
  %4431 = vmatpush1.bf16.msra.mxu0 %v3193
  %4432 = vmatprep.subr.bf16.mxu0 %v3202
  %4433 = vmatpush1.bf16.msra.mxu0 %v3201
  %4434 = vmatprep.subr.bf16.mxu0 %v3210
  %4435 = vmatpush1.bf16.msra.mxu0 %v3209
  %4436 = vmatprep.subr.bf16.mxu0 %v3218
  %4437 = vmatpush1.bf16.msra.mxu0 %v3217
  %4438 = vmatprep.subr.bf16.mxu0 %v3226
  %4439 = vmatpush1.bf16.msra.mxu0 %v3225
  %4440 = vmatprep.subr.bf16.mxu0 %v3234
  %4441 = vmatpush1.bf16.msra.mxu0 %v3233
  %4442 = vmatprep.subr.bf16.mxu0 %v3242
  %4443 = vmatpush1.bf16.msra.mxu0 %v3241
  %4444 = vmatprep.subr.bf16.mxu0 %v3250
  %4445 = vmatpush1.bf16.msra.mxu0 %v3249
  %4446 = vmatprep.subr.bf16.mxu0 %v3258
  %4447 = vmatpush1.bf16.msra.mxu0 %v3257
  %4448 = vmatprep.mubr.bf16.mxu0 %v656
  %4449 = vmatmul.mubr.bf16.gmra.mrb[0].mxu0 %v655
  %v4450 = vpop.f32.mrb[0].mxu0
  %v4451 = vadd.f32 %v4408, %v4450
  %v4452 = vpop.f32.mrb[0].mxu0
  %v4453 = vadd.f32 %v4410, %v4452
  %v4454 = vpop.f32.mrb[0].mxu0
  %v4455 = vadd.f32 %v4412, %v4454
  %v4456 = vpop.f32.mrb[0].mxu0
  %v4457 = vadd.f32 %v4414, %v4456
  %4458 = vdwg.mxu0
  %v4459 = vmax.f32 %v3935, 0.0
  %v4460 = vmax.f32 %v3937, 0.0
  %v4461 = vmax.f32 %v4107, 0.0
  %v4462 = vmax.f32 %v4109, 0.0
  %v4463 = vmax.f32 %v4279, 0.0
  %v4464 = vmax.f32 %v4281, 0.0
  %v4465 = vmax.f32 %v4451, 0.0
  %v4466 = vmax.f32 %v4453, 0.0
  %v4467 = vmax.f32 %v3939, 0.0
  %v4468 = vmax.f32 %v3941, 0.0
  %v4469 = vmax.f32 %v4111, 0.0
  %v4470 = vmax.f32 %v4113, 0.0
  %v4471 = vmax.f32 %v4283, 0.0
  %v4472 = vmax.f32 %v4285, 0.0
  %v4473 = vmax.f32 %v4455, 0.0
  %v4474 = vmax.f32 %v4457, 0.0
  %v4475 = vpack.c.bf16 %v4467, %v4459
  %v4476 = vpack.c.bf16 %v4468, %v4460
  %v4477 = vpack.c.bf16 %v4469, %v4461
  %v4478 = vpack.c.bf16 %v4470, %v4462
  %v4479 = vpack.c.bf16 %v4471, %v4463
  %v4480 = vpack.c.bf16 %v4472, %v4464
  %v4481 = vpack.c.bf16 %v4473, %v4465
  %v4482 = vpack.c.bf16 %v4474, %v4466
  %v4483 = vld [vmem:[%s5] sm:$0xf]
  %v4484 = vld [vmem:[%s5 + $0x4] sm:$0xf]
  %v4485 = vld [vmem:[%s5 + $0x8] sm:$0xf]
  %v4486 = vld [vmem:[%s5 + $0xc] sm:$0xf]
  %v4487 = vld [vmem:[%s5 + $0x10] sm:$0xf]
  %v4488 = vld [vmem:[%s5 + $0x14] sm:$0xf]
  %v4489 = vld [vmem:[%s5 + $0x18] sm:$0xf]
  %v4490 = vld [vmem:[%s5 + $0x1c] sm:$0xf]
  %v4491 = vld [vmem:[%s5 + $0x20] sm:$0xf]
  %v4492 = vld [vmem:[%s5 + $0x24] sm:$0xf]
  %v4493 = vld [vmem:[%s5 + $0x28] sm:$0xf]
  %v4494 = vld [vmem:[%s5 + $0x2c] sm:$0xf]
  %v4495 = vld [vmem:[%s5 + $0x30] sm:$0xf]
  %v4496 = vld [vmem:[%s5 + $0x34] sm:$0xf]
  %v4497 = vld [vmem:[%s5 + $0x38] sm:$0xf]
  %v4498 = vld [vmem:[%s5 + $0x3c] sm:$0xf]
  %v4499 = vld [vmem:[%s5 + $0x40] sm:$0xf]
  %v4500 = vld [vmem:[%s5 + $0x44] sm:$0xf]
  %v4501 = vld [vmem:[%s5 + $0x48] sm:$0xf]
  %v4502 = vld [vmem:[%s5 + $0x4c] sm:$0xf]
  %v4503 = vld [vmem:[%s5 + $0x50] sm:$0xf]
  %v4504 = vld [vmem:[%s5 + $0x54] sm:$0xf]
  %v4505 = vld [vmem:[%s5 + $0x58] sm:$0xf]
  %v4506 = vld [vmem:[%s5 + $0x5c] sm:$0xf]
  %v4507 = vld [vmem:[%s5 + $0x60] sm:$0xf]
  %v4508 = vld [vmem:[%s5 + $0x64] sm:$0xf]
  %v4509 = vld [vmem:[%s5 + $0x68] sm:$0xf]
  %v4510 = vld [vmem:[%s5 + $0x6c] sm:$0xf]
  %v4511 = vld [vmem:[%s5 + $0x70] sm:$0xf]
  %v4512 = vld [vmem:[%s5 + $0x74] sm:$0xf]
  %v4513 = vld [vmem:[%s5 + $0x78] sm:$0xf]
  %v4514 = vld [vmem:[%s5 + $0x7c] sm:$0xf]
  %v4515 = vld [vmem:[%s5 + $0x80] sm:$0xf]
  %v4516 = vld [vmem:[%s5 + $0x84] sm:$0xf]
  %v4517 = vld [vmem:[%s5 + $0x88] sm:$0xf]
  %v4518 = vld [vmem:[%s5 + $0x8c] sm:$0xf]
  %v4519 = vld [vmem:[%s5 + $0x90] sm:$0xf]
  %v4520 = vld [vmem:[%s5 + $0x94] sm:$0xf]
  %v4521 = vld [vmem:[%s5 + $0x98] sm:$0xf]
  %v4522 = vld [vmem:[%s5 + $0x9c] sm:$0xf]
  %v4523 = vld [vmem:[%s5 + $0xa0] sm:$0xf]
  %v4524 = vld [vmem:[%s5 + $0xa4] sm:$0xf]
  %v4525 = vld [vmem:[%s5 + $0xa8] sm:$0xf]
  %v4526 = vld [vmem:[%s5 + $0xac] sm:$0xf]
  %v4527 = vld [vmem:[%s5 + $0xb0] sm:$0xf]
  %v4528 = vld [vmem:[%s5 + $0xb4] sm:$0xf]
  %v4529 = vld [vmem:[%s5 + $0xb8] sm:$0xf]
  %v4530 = vld [vmem:[%s5 + $0xbc] sm:$0xf]
  %v4531 = vld [vmem:[%s5 + $0xc0] sm:$0xf]
  %v4532 = vld [vmem:[%s5 + $0xc4] sm:$0xf]
  %v4533 = vld [vmem:[%s5 + $0xc8] sm:$0xf]
  %v4534 = vld [vmem:[%s5 + $0xcc] sm:$0xf]
  %v4535 = vld [vmem:[%s5 + $0xd0] sm:$0xf]
  %v4536 = vld [vmem:[%s5 + $0xd4] sm:$0xf]
  %v4537 = vld [vmem:[%s5 + $0xd8] sm:$0xf]
  %v4538 = vld [vmem:[%s5 + $0xdc] sm:$0xf]
  %v4539 = vld [vmem:[%s5 + $0xe0] sm:$0xf]
  %v4540 = vld [vmem:[%s5 + $0xe4] sm:$0xf]
  %v4541 = vld [vmem:[%s5 + $0xe8] sm:$0xf]
  %v4542 = vld [vmem:[%s5 + $0xec] sm:$0xf]
  %v4543 = vld [vmem:[%s5 + $0xf0] sm:$0xf]
  %v4544 = vld [vmem:[%s5 + $0xf4] sm:$0xf]
  %v4545 = vld [vmem:[%s5 + $0xf8] sm:$0xf]
  %v4546 = vld [vmem:[%s5 + $0xfc] sm:$0xf]
  %v4547 = vld [vmem:[%s5 + $0x100] sm:$0xf]
  %v4548 = vld [vmem:[%s5 + $0x104] sm:$0xf]
  %v4549 = vld [vmem:[%s5 + $0x108] sm:$0xf]
  %v4550 = vld [vmem:[%s5 + $0x10c] sm:$0xf]
  %v4551 = vld [vmem:[%s5 + $0x110] sm:$0xf]
  %v4552 = vld [vmem:[%s5 + $0x114] sm:$0xf]
  %v4553 = vld [vmem:[%s5 + $0x118] sm:$0xf]
  %v4554 = vld [vmem:[%s5 + $0x11c] sm:$0xf]
  %v4555 = vld [vmem:[%s5 + $0x120] sm:$0xf]
  %v4556 = vld [vmem:[%s5 + $0x124] sm:$0xf]
  %v4557 = vld [vmem:[%s5 + $0x128] sm:$0xf]
  %v4558 = vld [vmem:[%s5 + $0x12c] sm:$0xf]
  %v4559 = vld [vmem:[%s5 + $0x130] sm:$0xf]
  %v4560 = vld [vmem:[%s5 + $0x134] sm:$0xf]
  %v4561 = vld [vmem:[%s5 + $0x138] sm:$0xf]
  %v4562 = vld [vmem:[%s5 + $0x13c] sm:$0xf]
  %v4563 = vld [vmem:[%s5 + $0x140] sm:$0xf]
  %v4564 = vld [vmem:[%s5 + $0x144] sm:$0xf]
  %v4565 = vld [vmem:[%s5 + $0x148] sm:$0xf]
  %v4566 = vld [vmem:[%s5 + $0x14c] sm:$0xf]
  %v4567 = vld [vmem:[%s5 + $0x150] sm:$0xf]
  %v4568 = vld [vmem:[%s5 + $0x154] sm:$0xf]
  %v4569 = vld [vmem:[%s5 + $0x158] sm:$0xf]
  %v4570 = vld [vmem:[%s5 + $0x15c] sm:$0xf]
  %v4571 = vld [vmem:[%s5 + $0x160] sm:$0xf]
  %v4572 = vld [vmem:[%s5 + $0x164] sm:$0xf]
  %v4573 = vld [vmem:[%s5 + $0x168] sm:$0xf]
  %v4574 = vld [vmem:[%s5 + $0x16c] sm:$0xf]
  %v4575 = vld [vmem:[%s5 + $0x170] sm:$0xf]
  %v4576 = vld [vmem:[%s5 + $0x174] sm:$0xf]
  %v4577 = vld [vmem:[%s5 + $0x178] sm:$0xf]
  %v4578 = vld [vmem:[%s5 + $0x17c] sm:$0xf]
  %v4579 = vld [vmem:[%s5 + $0x180] sm:$0xf]
  %v4580 = vld [vmem:[%s5 + $0x184] sm:$0xf]
  %v4581 = vld [vmem:[%s5 + $0x188] sm:$0xf]
  %v4582 = vld [vmem:[%s5 + $0x18c] sm:$0xf]
  %v4583 = vld [vmem:[%s5 + $0x190] sm:$0xf]
  %v4584 = vld [vmem:[%s5 + $0x194] sm:$0xf]
  %v4585 = vld [vmem:[%s5 + $0x198] sm:$0xf]
  %v4586 = vld [vmem:[%s5 + $0x19c] sm:$0xf]
  %v4587 = vld [vmem:[%s5 + $0x1a0] sm:$0xf]
  %v4588 = vld [vmem:[%s5 + $0x1a4] sm:$0xf]
  %v4589 = vld [vmem:[%s5 + $0x1a8] sm:$0xf]
  %v4590 = vld [vmem:[%s5 + $0x1ac] sm:$0xf]
  %v4591 = vld [vmem:[%s5 + $0x1b0] sm:$0xf]
  %v4592 = vld [vmem:[%s5 + $0x1b4] sm:$0xf]
  %v4593 = vld [vmem:[%s5 + $0x1b8] sm:$0xf]
  %v4594 = vld [vmem:[%s5 + $0x1bc] sm:$0xf]
  %v4595 = vld [vmem:[%s5 + $0x1c0] sm:$0xf]
  %v4596 = vld [vmem:[%s5 + $0x1c4] sm:$0xf]
  %v4597 = vld [vmem:[%s5 + $0x1c8] sm:$0xf]
  %v4598 = vld [vmem:[%s5 + $0x1cc] sm:$0xf]
  %v4599 = vld [vmem:[%s5 + $0x1d0] sm:$0xf]
  %v4600 = vld [vmem:[%s5 + $0x1d4] sm:$0xf]
  %v4601 = vld [vmem:[%s5 + $0x1d8] sm:$0xf]
  %v4602 = vld [vmem:[%s5 + $0x1dc] sm:$0xf]
  %v4603 = vld [vmem:[%s5 + $0x1e0] sm:$0xf]
  %v4604 = vld [vmem:[%s5 + $0x1e4] sm:$0xf]
  %v4605 = vld [vmem:[%s5 + $0x1e8] sm:$0xf]
  %v4606 = vld [vmem:[%s5 + $0x1ec] sm:$0xf]
  %v4607 = vld [vmem:[%s5 + $0x1f0] sm:$0xf]
  %v4608 = vld [vmem:[%s5 + $0x1f4] sm:$0xf]
  %v4609 = vld [vmem:[%s5 + $0x1f8] sm:$0xf]
  %v4610 = vld [vmem:[%s5 + $0x1fc] sm:$0xf]
  %v4611 = vld [vmem:[%s6] sm:$0x1]
  %v4613 = vlaneseq
  %v4614 = vshrl.u32 %v4613, 7
  %v4615 = vsub.s32 0, %v4614
  %v4616 = vrot.slane %v4611, %v4615
  %v4746 = vunpack.c.l.b16 %v4483
  %v4747 = vunpack.c.l.b16 %v4484
  %v4748 = vunpack.c.l.b16 %v4485
  %v4749 = vunpack.c.l.b16 %v4486
  %v4750 = vunpack.c.l.b16 %v4487
  %v4751 = vunpack.c.l.b16 %v4488
  %v4752 = vunpack.c.l.b16 %v4489
  %v4753 = vunpack.c.l.b16 %v4490
  %v4754 = vunpack.c.l.b16 %v4491
  %v4755 = vunpack.c.l.b16 %v4492
  %v4756 = vunpack.c.l.b16 %v4493
  %v4757 = vunpack.c.l.b16 %v4494
  %v4758 = vunpack.c.l.b16 %v4495
  %v4759 = vunpack.c.l.b16 %v4496
  %v4760 = vunpack.c.l.b16 %v4497
  %v4761 = vunpack.c.l.b16 %v4498
  %v4762 = vunpack.c.l.b16 %v4499
  %v4763 = vunpack.c.l.b16 %v4500
  %v4764 = vunpack.c.l.b16 %v4501
  %v4765 = vunpack.c.l.b16 %v4502
  %v4766 = vunpack.c.l.b16 %v4503
  %v4767 = vunpack.c.l.b16 %v4504
  %v4768 = vunpack.c.l.b16 %v4505
  %v4769 = vunpack.c.l.b16 %v4506
  %v4770 = vunpack.c.l.b16 %v4507
  %v4771 = vunpack.c.l.b16 %v4508
  %v4772 = vunpack.c.l.b16 %v4509
  %v4773 = vunpack.c.l.b16 %v4510
  %v4774 = vunpack.c.l.b16 %v4511
  %v4775 = vunpack.c.l.b16 %v4512
  %v4776 = vunpack.c.l.b16 %v4513
  %v4777 = vunpack.c.l.b16 %v4514
  %v4778 = vunpack.c.l.b16 %v4515
  %v4779 = vunpack.c.l.b16 %v4516
  %v4780 = vunpack.c.l.b16 %v4517
  %v4781 = vunpack.c.l.b16 %v4518
  %v4782 = vunpack.c.l.b16 %v4519
  %v4783 = vunpack.c.l.b16 %v4520
  %v4784 = vunpack.c.l.b16 %v4521
  %v4785 = vunpack.c.l.b16 %v4522
  %v4786 = vunpack.c.l.b16 %v4523
  %v4787 = vunpack.c.l.b16 %v4524
  %v4788 = vunpack.c.l.b16 %v4525
  %v4789 = vunpack.c.l.b16 %v4526
  %v4790 = vunpack.c.l.b16 %v4527
  %v4791 = vunpack.c.l.b16 %v4528
  %v4792 = vunpack.c.l.b16 %v4529
  %v4793 = vunpack.c.l.b16 %v4530
  %v4794 = vunpack.c.l.b16 %v4531
  %v4795 = vunpack.c.l.b16 %v4532
  %v4796 = vunpack.c.l.b16 %v4533
  %v4797 = vunpack.c.l.b16 %v4534
  %v4798 = vunpack.c.l.b16 %v4535
  %v4799 = vunpack.c.l.b16 %v4536
  %v4800 = vunpack.c.l.b16 %v4537
  %v4801 = vunpack.c.l.b16 %v4538
  %v4802 = vunpack.c.l.b16 %v4539
  %v4803 = vunpack.c.l.b16 %v4540
  %v4804 = vunpack.c.l.b16 %v4541
  %v4805 = vunpack.c.l.b16 %v4542
  %v4806 = vunpack.c.l.b16 %v4543
  %v4807 = vunpack.c.l.b16 %v4544
  %v4808 = vunpack.c.l.b16 %v4545
  %v4809 = vunpack.c.l.b16 %v4546
  %v4810 = vunpack.c.l.b16 %v4547
  %v4811 = vunpack.c.l.b16 %v4548
  %v4812 = vunpack.c.l.b16 %v4549
  %v4813 = vunpack.c.l.b16 %v4550
  %v4814 = vunpack.c.l.b16 %v4551
  %v4815 = vunpack.c.l.b16 %v4552
  %v4816 = vunpack.c.l.b16 %v4553
  %v4817 = vunpack.c.l.b16 %v4554
  %v4818 = vunpack.c.l.b16 %v4555
  %v4819 = vunpack.c.l.b16 %v4556
  %v4820 = vunpack.c.l.b16 %v4557
  %v4821 = vunpack.c.l.b16 %v4558
  %v4822 = vunpack.c.l.b16 %v4559
  %v4823 = vunpack.c.l.b16 %v4560
  %v4824 = vunpack.c.l.b16 %v4561
  %v4825 = vunpack.c.l.b16 %v4562
  %v4826 = vunpack.c.l.b16 %v4563
  %v4827 = vunpack.c.l.b16 %v4564
  %v4828 = vunpack.c.l.b16 %v4565
  %v4829 = vunpack.c.l.b16 %v4566
  %v4830 = vunpack.c.l.b16 %v4567
  %v4831 = vunpack.c.l.b16 %v4568
  %v4832 = vunpack.c.l.b16 %v4569
  %v4833 = vunpack.c.l.b16 %v4570
  %v4834 = vunpack.c.l.b16 %v4571
  %v4835 = vunpack.c.l.b16 %v4572
  %v4836 = vunpack.c.l.b16 %v4573
  %v4837 = vunpack.c.l.b16 %v4574
  %v4838 = vunpack.c.l.b16 %v4575
  %v4839 = vunpack.c.l.b16 %v4576
  %v4840 = vunpack.c.l.b16 %v4577
  %v4841 = vunpack.c.l.b16 %v4578
  %v4842 = vunpack.c.l.b16 %v4579
  %v4843 = vunpack.c.l.b16 %v4580
  %v4844 = vunpack.c.l.b16 %v4581
  %v4845 = vunpack.c.l.b16 %v4582
  %v4846 = vunpack.c.l.b16 %v4583
  %v4847 = vunpack.c.l.b16 %v4584
  %v4848 = vunpack.c.l.b16 %v4585
  %v4849 = vunpack.c.l.b16 %v4586
  %v4850 = vunpack.c.l.b16 %v4587
  %v4851 = vunpack.c.l.b16 %v4588
  %v4852 = vunpack.c.l.b16 %v4589
  %v4853 = vunpack.c.l.b16 %v4590
  %v4854 = vunpack.c.l.b16 %v4591
  %v4855 = vunpack.c.l.b16 %v4592
  %v4856 = vunpack.c.l.b16 %v4593
  %v4857 = vunpack.c.l.b16 %v4594
  %v4858 = vunpack.c.l.b16 %v4595
  %v4859 = vunpack.c.l.b16 %v4596
  %v4860 = vunpack.c.l.b16 %v4597
  %v4861 = vunpack.c.l.b16 %v4598
  %v4862 = vunpack.c.l.b16 %v4599
  %v4863 = vunpack.c.l.b16 %v4600
  %v4864 = vunpack.c.l.b16 %v4601
  %v4865 = vunpack.c.l.b16 %v4602
  %v4866 = vunpack.c.l.b16 %v4603
  %v4867 = vunpack.c.l.b16 %v4604
  %v4868 = vunpack.c.l.b16 %v4605
  %v4869 = vunpack.c.l.b16 %v4606
  %v4870 = vunpack.c.l.b16 %v4607
  %v4871 = vunpack.c.l.b16 %v4608
  %v4872 = vunpack.c.l.b16 %v4609
  %v4873 = vunpack.c.l.b16 %v4610
  %v4874 = vpack.c.b16 %v4747, %v4746
  %v4875 = vpack.c.b16 %v4749, %v4748
  %v4876 = vpack.c.b16 %v4751, %v4750
  %v4877 = vpack.c.b16 %v4753, %v4752
  %v4878 = vpack.c.b16 %v4755, %v4754
  %v4879 = vpack.c.b16 %v4757, %v4756
  %v4880 = vpack.c.b16 %v4759, %v4758
  %v4881 = vpack.c.b16 %v4761, %v4760
  %v4882 = vpack.c.b16 %v4763, %v4762
  %v4883 = vpack.c.b16 %v4765, %v4764
  %v4884 = vpack.c.b16 %v4767, %v4766
  %v4885 = vpack.c.b16 %v4769, %v4768
  %v4886 = vpack.c.b16 %v4771, %v4770
  %v4887 = vpack.c.b16 %v4773, %v4772
  %v4888 = vpack.c.b16 %v4775, %v4774
  %v4889 = vpack.c.b16 %v4777, %v4776
  %v4890 = vpack.c.b16 %v4779, %v4778
  %v4891 = vpack.c.b16 %v4781, %v4780
  %v4892 = vpack.c.b16 %v4783, %v4782
  %v4893 = vpack.c.b16 %v4785, %v4784
  %v4894 = vpack.c.b16 %v4787, %v4786
  %v4895 = vpack.c.b16 %v4789, %v4788
  %v4896 = vpack.c.b16 %v4791, %v4790
  %v4897 = vpack.c.b16 %v4793, %v4792
  %v4898 = vpack.c.b16 %v4795, %v4794
  %v4899 = vpack.c.b16 %v4797, %v4796
  %v4900 = vpack.c.b16 %v4799, %v4798
  %v4901 = vpack.c.b16 %v4801, %v4800
  %v4902 = vpack.c.b16 %v4803, %v4802
  %v4903 = vpack.c.b16 %v4805, %v4804
  %v4904 = vpack.c.b16 %v4807, %v4806
  %v4905 = vpack.c.b16 %v4809, %v4808
  %v4906 = vpack.c.b16 %v4811, %v4810
  %v4907 = vpack.c.b16 %v4813, %v4812
  %v4908 = vpack.c.b16 %v4815, %v4814
  %v4909 = vpack.c.b16 %v4817, %v4816
  %v4910 = vpack.c.b16 %v4819, %v4818
  %v4911 = vpack.c.b16 %v4821, %v4820
  %v4912 = vpack.c.b16 %v4823, %v4822
  %v4913 = vpack.c.b16 %v4825, %v4824
  %v4914 = vpack.c.b16 %v4827, %v4826
  %v4915 = vpack.c.b16 %v4829, %v4828
  %v4916 = vpack.c.b16 %v4831, %v4830
  %v4917 = vpack.c.b16 %v4833, %v4832
  %v4918 = vpack.c.b16 %v4835, %v4834
  %v4919 = vpack.c.b16 %v4837, %v4836
  %v4920 = vpack.c.b16 %v4839, %v4838
  %v4921 = vpack.c.b16 %v4841, %v4840
  %v4922 = vpack.c.b16 %v4843, %v4842
  %v4923 = vpack.c.b16 %v4845, %v4844
  %v4924 = vpack.c.b16 %v4847, %v4846
  %v4925 = vpack.c.b16 %v4849, %v4848
  %v4926 = vpack.c.b16 %v4851, %v4850
  %v4927 = vpack.c.b16 %v4853, %v4852
  %v4928 = vpack.c.b16 %v4855, %v4854
  %v4929 = vpack.c.b16 %v4857, %v4856
  %v4930 = vpack.c.b16 %v4859, %v4858
  %v4931 = vpack.c.b16 %v4861, %v4860
  %v4932 = vpack.c.b16 %v4863, %v4862
  %v4933 = vpack.c.b16 %v4865, %v4864
  %v4934 = vpack.c.b16 %v4867, %v4866
  %v4935 = vpack.c.b16 %v4869, %v4868
  %v4936 = vpack.c.b16 %v4871, %v4870
  %v4937 = vpack.c.b16 %v4873, %v4872
  %5002 = vmatprep.subr.bf16.mxu0 0
  %5003 = vmatpush1.bf16.msra.mxu0 %v4874
  %5004 = vmatprep.subr.bf16.mxu0 0
  %5005 = vmatpush1.bf16.msra.mxu0 %v4875
  %5006 = vmatprep.subr.bf16.mxu0 0
  %5007 = vmatpush1.bf16.msra.mxu0 %v4876
  %5008 = vmatprep.subr.bf16.mxu0 0
  %5009 = vmatpush1.bf16.msra.mxu0 %v4877
  %5010 = vmatprep.subr.bf16.mxu0 0
  %5011 = vmatpush1.bf16.msra.mxu0 %v4878
  %5012 = vmatprep.subr.bf16.mxu0 0
  %5013 = vmatpush1.bf16.msra.mxu0 %v4879
  %5014 = vmatprep.subr.bf16.mxu0 0
  %5015 = vmatpush1.bf16.msra.mxu0 %v4880
  %5016 = vmatprep.subr.bf16.mxu0 0
  %5017 = vmatpush1.bf16.msra.mxu0 %v4881
  %5018 = vmatprep.subr.bf16.mxu0 0
  %5019 = vmatpush1.bf16.msra.mxu0 %v4882
  %5020 = vmatprep.subr.bf16.mxu0 0
  %5021 = vmatpush1.bf16.msra.mxu0 %v4883
  %5022 = vmatprep.subr.bf16.mxu0 0
  %5023 = vmatpush1.bf16.msra.mxu0 %v4884
  %5024 = vmatprep.subr.bf16.mxu0 0
  %5025 = vmatpush1.bf16.msra.mxu0 %v4885
  %5026 = vmatprep.subr.bf16.mxu0 0
  %5027 = vmatpush1.bf16.msra.mxu0 %v4886
  %5028 = vmatprep.subr.bf16.mxu0 0
  %5029 = vmatpush1.bf16.msra.mxu0 %v4887
  %5030 = vmatprep.subr.bf16.mxu0 0
  %5031 = vmatpush1.bf16.msra.mxu0 %v4888
  %5032 = vmatprep.subr.bf16.mxu0 0
  %5033 = vmatpush1.bf16.msra.mxu0 %v4889
  %5034 = vmatprep.mubr.bf16.mxu0 %v4476
  %5035 = vmatmul.mubr.bf16.gmra.mrb[0].mxu0 %v4475
  %v5036 = vpop.f32.mrb[0].mxu0
  %v5037 = vadd.f32 %v4616, %v5036
  %v5038 = vpop.f32.mrb[0].mxu0
  %v5039 = vpop.f32.mrb[0].mxu0
  %v5040 = vadd.f32 %v4616, %v5039
  %v5041 = vpop.f32.mrb[0].mxu0
  %5042 = vdwg.mxu0
  %5043 = vmatprep.subr.bf16.mxu0 0
  %5044 = vmatpush1.bf16.msra.mxu0 %v4890
  %5045 = vmatprep.subr.bf16.mxu0 0
  %5046 = vmatpush1.bf16.msra.mxu0 %v4891
  %5047 = vmatprep.subr.bf16.mxu0 0
  %5048 = vmatpush1.bf16.msra.mxu0 %v4892
  %5049 = vmatprep.subr.bf16.mxu0 0
  %5050 = vmatpush1.bf16.msra.mxu0 %v4893
  %5051 = vmatprep.subr.bf16.mxu0 0
  %5052 = vmatpush1.bf16.msra.mxu0 %v4894
  %5053 = vmatprep.subr.bf16.mxu0 0
  %5054 = vmatpush1.bf16.msra.mxu0 %v4895
  %5055 = vmatprep.subr.bf16.mxu0 0
  %5056 = vmatpush1.bf16.msra.mxu0 %v4896
  %5057 = vmatprep.subr.bf16.mxu0 0
  %5058 = vmatpush1.bf16.msra.mxu0 %v4897
  %5059 = vmatprep.subr.bf16.mxu0 0
  %5060 = vmatpush1.bf16.msra.mxu0 %v4898
  %5061 = vmatprep.subr.bf16.mxu0 0
  %5062 = vmatpush1.bf16.msra.mxu0 %v4899
  %5063 = vmatprep.subr.bf16.mxu0 0
  %5064 = vmatpush1.bf16.msra.mxu0 %v4900
  %5065 = vmatprep.subr.bf16.mxu0 0
  %5066 = vmatpush1.bf16.msra.mxu0 %v4901
  %5067 = vmatprep.subr.bf16.mxu0 0
  %5068 = vmatpush1.bf16.msra.mxu0 %v4902
  %5069 = vmatprep.subr.bf16.mxu0 0
  %5070 = vmatpush1.bf16.msra.mxu0 %v4903
  %5071 = vmatprep.subr.bf16.mxu0 0
  %5072 = vmatpush1.bf16.msra.mxu0 %v4904
  %5073 = vmatprep.subr.bf16.mxu0 0
  %5074 = vmatpush1.bf16.msra.mxu0 %v4905
  %5075 = vmatprep.mubr.bf16.mxu0 %v4478
  %5076 = vmatmul.mubr.bf16.gmra.mrb[0].mxu0 %v4477
  %v5077 = vpop.f32.mrb[0].mxu0
  %v5078 = vadd.f32 %v5037, %v5077
  %v5079 = vpop.f32.mrb[0].mxu0
  %v5080 = vpop.f32.mrb[0].mxu0
  %v5081 = vadd.f32 %v5040, %v5080
  %v5082 = vpop.f32.mrb[0].mxu0
  %5083 = vdwg.mxu0
  %5084 = vmatprep.subr.bf16.mxu0 0
  %5085 = vmatpush1.bf16.msra.mxu0 %v4906
  %5086 = vmatprep.subr.bf16.mxu0 0
  %5087 = vmatpush1.bf16.msra.mxu0 %v4907
  %5088 = vmatprep.subr.bf16.mxu0 0
  %5089 = vmatpush1.bf16.msra.mxu0 %v4908
  %5090 = vmatprep.subr.bf16.mxu0 0
  %5091 = vmatpush1.bf16.msra.mxu0 %v4909
  %5092 = vmatprep.subr.bf16.mxu0 0
  %5093 = vmatpush1.bf16.msra.mxu0 %v4910
  %5094 = vmatprep.subr.bf16.mxu0 0
  %5095 = vmatpush1.bf16.msra.mxu0 %v4911
  %5096 = vmatprep.subr.bf16.mxu0 0
  %5097 = vmatpush1.bf16.msra.mxu0 %v4912
  %5098 = vmatprep.subr.bf16.mxu0 0
  %5099 = vmatpush1.bf16.msra.mxu0 %v4913
  %5100 = vmatprep.subr.bf16.mxu0 0
  %5101 = vmatpush1.bf16.msra.mxu0 %v4914
  %5102 = vmatprep.subr.bf16.mxu0 0
  %5103 = vmatpush1.bf16.msra.mxu0 %v4915
  %5104 = vmatprep.subr.bf16.mxu0 0
  %5105 = vmatpush1.bf16.msra.mxu0 %v4916
  %5106 = vmatprep.subr.bf16.mxu0 0
  %5107 = vmatpush1.bf16.msra.mxu0 %v4917
  %5108 = vmatprep.subr.bf16.mxu0 0
  %5109 = vmatpush1.bf16.msra.mxu0 %v4918
  %5110 = vmatprep.subr.bf16.mxu0 0
  %5111 = vmatpush1.bf16.msra.mxu0 %v4919
  %5112 = vmatprep.subr.bf16.mxu0 0
  %5113 = vmatpush1.bf16.msra.mxu0 %v4920
  %5114 = vmatprep.subr.bf16.mxu0 0
  %5115 = vmatpush1.bf16.msra.mxu0 %v4921
  %5116 = vmatprep.mubr.bf16.mxu0 %v4480
  %5117 = vmatmul.mubr.bf16.gmra.mrb[0].mxu0 %v4479
  %v5118 = vpop.f32.mrb[0].mxu0
  %v5119 = vadd.f32 %v5078, %v5118
  %v5120 = vpop.f32.mrb[0].mxu0
  %v5121 = vpop.f32.mrb[0].mxu0
  %v5122 = vadd.f32 %v5081, %v5121
  %v5123 = vpop.f32.mrb[0].mxu0
  %5124 = vdwg.mxu0
  %5125 = vmatprep.subr.bf16.mxu0 0
  %5126 = vmatpush1.bf16.msra.mxu0 %v4922
  %5127 = vmatprep.subr.bf16.mxu0 0
  %5128 = vmatpush1.bf16.msra.mxu0 %v4923
  %5129 = vmatprep.subr.bf16.mxu0 0
  %5130 = vmatpush1.bf16.msra.mxu0 %v4924
  %5131 = vmatprep.subr.bf16.mxu0 0
  %5132 = vmatpush1.bf16.msra.mxu0 %v4925
  %5133 = vmatprep.subr.bf16.mxu0 0
  %5134 = vmatpush1.bf16.msra.mxu0 %v4926
  %5135 = vmatprep.subr.bf16.mxu0 0
  %5136 = vmatpush1.bf16.msra.mxu0 %v4927
  %5137 = vmatprep.subr.bf16.mxu0 0
  %5138 = vmatpush1.bf16.msra.mxu0 %v4928
  %5139 = vmatprep.subr.bf16.mxu0 0
  %5140 = vmatpush1.bf16.msra.mxu0 %v4929
  %5141 = vmatprep.subr.bf16.mxu0 0
  %5142 = vmatpush1.bf16.msra.mxu0 %v4930
  %5143 = vmatprep.subr.bf16.mxu0 0
  %5144 = vmatpush1.bf16.msra.mxu0 %v4931
  %5145 = vmatprep.subr.bf16.mxu0 0
  %5146 = vmatpush1.bf16.msra.mxu0 %v4932
  %5147 = vmatprep.subr.bf16.mxu0 0
  %5148 = vmatpush1.bf16.msra.mxu0 %v4933
  %5149 = vmatprep.subr.bf16.mxu0 0
  %5150 = vmatpush1.bf16.msra.mxu0 %v4934
  %5151 = vmatprep.subr.bf16.mxu0 0
  %5152 = vmatpush1.bf16.msra.mxu0 %v4935
  %5153 = vmatprep.subr.bf16.mxu0 0
  %5154 = vmatpush1.bf16.msra.mxu0 %v4936
  %5155 = vmatprep.subr.bf16.mxu0 0
  %5156 = vmatpush1.bf16.msra.mxu0 %v4937
  %5157 = vmatprep.mubr.bf16.mxu0 %v4482
  %5158 = vmatmul.mubr.bf16.gmra.mrb[0].mxu0 %v4481
  %v5159 = vpop.f32.mrb[0].mxu0
  %v5160 = vadd.f32 %v5119, %v5159
  %v5161 = vpop.f32.mrb[0].mxu0
  %v5162 = vpop.f32.mrb[0].mxu0
  %v5163 = vadd.f32 %v5122, %v5162
  %v5164 = vpop.f32.mrb[0].mxu0
  %5165 = vdwg.mxu0
  %5166 = vst [vmem:[%s7] sm:$0xff] %v5160
  %5167 = vst [vmem:[%s7 + $0x8] sm:$0xff] %v5163
  // Predicated region
  $region30: #{_esm_mlp_head_impl.1} parent=0 // pred_check
    _
  $region31: #{_esm_mlp_head_impl.1} parent=0 // pred_check_branch
    %5169 = sbr.rel (0) target = $region33
  $region32: #{_esm_mlp_head_impl.1} parent=0 // pred_region
    _
  $region33: #{_esm_mlp_head_impl.1} parent=0 // pred_fallthru
    _
  // Predicated region
  $region34: #{_esm_mlp_head_impl.1} parent=0 // pred_check
    _
  $region35: #{_esm_mlp_head_impl.1} parent=0 // pred_check_branch
    %5171 = sbr.rel (0) target = $region37
  $region36: #{_esm_mlp_head_impl.1} parent=0 // pred_region
    _
  $region37: #{_esm_mlp_head_impl.1} parent=0 // pred_fallthru
    _

</llo_original>
